<compile_context>
chip_gen: v7x
topology: tpu7x:2x2x1
jax: 0.10.0
libtpu: 0.0.40
codegen_flags: <defaults>
</compile_context>

<pallas_src>
import jax
import jax.numpy as jnp
from jax.experimental import pallas as pl
from jax.experimental.pallas import tpu as pltpu


# ----------------------------------------------------------------------------
# Pallas kernel: fused gumbel-softmax grammar chain + LSTM recurrence
# ----------------------------------------------------------------------------
def _hard_onehot(z, n):
    """Forward value of gumbel_softmax(..., hard=True): one-hot of argmax(z)."""
    col = jax.lax.broadcasted_iota(jnp.int32, z.shape, 1)
    m = jnp.max(z, axis=-1, keepdims=True)
    cand = jnp.where(z == m, col, n)                   # sentinel n for non-max lanes
    idx = jnp.min(cand, axis=-1, keepdims=True)        # first max (ties: prob. 0)
    return idx, (col == idx).astype(jnp.float32)


def _grammar_lstm_kernel(x_ref, g_ref, gm_ref, wih_ref, whh_ref, bias_ref, out_ref):
    b_sz, n = x_ref.shape
    t_len = g_ref.shape[0]
    hp = whh_ref.shape[0]                              # padded hidden size (128)

    gm = gm_ref[...]                                   # [N, N] f32, loaded once

    # ---- grammar chain: resample non-terminal rows with hard gumbel-softmax
    idx, one_hot = _hard_onehot(x_ref[...] + g_ref[0], n)
    for t in range(1, t_len):                          # T-1 = 11 static steps
        # one_hot is hard one-hot => one_hot @ gm == gm[idx]; do the row select
        # on the VPU (N static where-selects) instead of a dependent MXU matmul.
        logits = jnp.zeros((b_sz, n), jnp.float32)
        for r in range(n):
            logits = jnp.where(idx == r, gm[r:r + 1, :], logits)
        new_idx, new_oh = _hard_onehot(logits + g_ref[t], n)
        nonterm = idx != (n - 1)                       # [B, 1] bool (terminal freeze)
        one_hot = jnp.where(nonterm, new_oh, one_hot)
        idx = jnp.where(nonterm, new_idx, idx)

    # ---- LSTM over the final grammar state (time axis = B, zero initial state)
    wih = wih_ref[...]                                 # [N, 4*Hp]  bf16
    whh = whh_ref[...]                                 # [Hp, 4*Hp] bf16
    # x-projection for all time steps in one MXU pass; one_hot is exact in bf16.
    xproj = jnp.dot(one_hot.astype(jnp.bfloat16), wih,
                    preferred_element_type=jnp.float32) + bias_ref[...]   # [B, 4*Hp] f32
    h = jnp.zeros((1, hp), jnp.float32)
    c = jnp.zeros((1, hp), jnp.float32)
    for b in range(b_sz):                              # B = 8 static recurrence steps
        gates = xproj[b:b + 1, :] + jnp.dot(h.astype(jnp.bfloat16), whh,
                                            preferred_element_type=jnp.float32)
        i_g = jax.nn.sigmoid(gates[:, 0 * hp:1 * hp])  # gate order: i, f, g, o
        f_g = jax.nn.sigmoid(gates[:, 1 * hp:2 * hp])
        g_g = jnp.tanh(gates[:, 2 * hp:3 * hp])
        o_g = jax.nn.sigmoid(gates[:, 3 * hp:4 * hp])
        c = f_g * c + i_g * g_g
        h = o_g * jnp.tanh(c)
        out_ref[b:b + 1, :] = h                        # lane-dense per-row store


# ----------------------------------------------------------------------------
# Host-side parameter prep (run ONCE, outside the jitted per-call forward)
# ----------------------------------------------------------------------------
def prepare_lstm_params(w_ih, w_hh, b_ih, b_hh, hp):
    """PyTorch layout w_ih [4H, N], w_hh [4H, H], biases [4H]
    -> lane-dense padded wih_p [N, 4Hp] (bf16), whh_p [Hp, 4Hp] (bf16),
       bias_p [1, 4Hp] (f32, = b_ih + b_hh per gate)."""
    four_h, n = w_ih.shape
    h = four_h // 4
    wih_p = jnp.zeros((n, 4 * hp), jnp.float32)
    whh_p = jnp.zeros((hp, 4 * hp), jnp.float32)
    bias_p = jnp.zeros((1, 4 * hp), jnp.float32)
    b_sum = b_ih + b_hh
    for g in range(4):
        wih_p = wih_p.at[:, g * hp:g * hp + h].set(w_ih[g * h:(g + 1) * h, :].T)
        whh_p = whh_p.at[:h, g * hp:g * hp + h].set(w_hh[g * h:(g + 1) * h, :].T)
        bias_p = bias_p.at[:, g * hp:g * hp + h].set(b_sum[g * h:(g + 1) * h][None, :])
    return wih_p.astype(jnp.bfloat16), whh_p.astype(jnp.bfloat16), bias_p


# ----------------------------------------------------------------------------
# Jitted forward: a single fused pallas_call (everything lives in VMEM)
# ----------------------------------------------------------------------------
@jax.jit
def differentiable_grammar_forward(x, gumbel, grammar_mat, wih_p, whh_p, bias_p):
    """x: [B, N] logits (f32); gumbel: [T, B, N] pre-sampled Gumbel(0,1) noise (f32)."""
    b, n = x.shape
    t = gumbel.shape[0]
    hp = whh_p.shape[0]

    out_p = pl.pallas_call(
        _grammar_lstm_kernel,
        grid=(1,),
        in_specs=[
            pl.BlockSpec((b, n), lambda i: (0, 0)),
            pl.BlockSpec((t, b, n), lambda i: (0, 0, 0)),
            pl.BlockSpec((n, n), lambda i: (0, 0)),
            pl.BlockSpec((n, 4 * hp), lambda i: (0, 0)),
            pl.BlockSpec((hp, 4 * hp), lambda i: (0, 0)),
            pl.BlockSpec((1, 4 * hp), lambda i: (0, 0)),
        ],
        out_specs=pl.BlockSpec((b, hp), lambda i: (0, 0)),
        out_shape=jax.ShapeDtypeStruct((b, hp), jnp.float32),
        compiler_params=pltpu.CompilerParams(dimension_semantics=("arbitrary",)),
    )(x, gumbel, grammar_mat, wih_p, whh_p, bias_p)
    return out_p                                       # [B, Hp]; caller strips padding


# ----------------------------------------------------------------------------
# Pure-JAX f32 reference (same math, same noise) for a correctness check
# ----------------------------------------------------------------------------
def _reference_forward(x, gumbel, grammar_mat, w_ih, w_hh, b_ih, b_hh):
    b, n = x.shape
    t = gumbel.shape[0]
    h = w_hh.shape[1]

    def hard(z):
        col = jnp.arange(n)[None, :]
        m = jnp.max(z, axis=-1, keepdims=True)
        idx = jnp.min(jnp.where(z == m, col, n), axis=-1, keepdims=True)
        return idx, (col == idx).astype(jnp.float32)

    idx, oh = hard(x + gumbel[0])
    for step in range(1, t):
        new_idx, new_oh = hard(oh @ grammar_mat + gumbel[step])
        nonterm = idx != (n - 1)
        oh = jnp.where(nonterm, new_oh, oh)
        idx = jnp.where(nonterm, new_idx, idx)

    xproj = oh @ w_ih.T                                # [B, 4H]
    bias = b_ih + b_hh
    hst = jnp.zeros((h,), jnp.float32)
    cst = jnp.zeros((h,), jnp.float32)
    outs = []
    for bb in range(b):
        gates = xproj[bb] + bias + w_hh @ hst
        i_g = jax.nn.sigmoid(gates[0 * h:1 * h])
        f_g = jax.nn.sigmoid(gates[1 * h:2 * h])
        g_g = jnp.tanh(gates[2 * h:3 * h])
        o_g = jax.nn.sigmoid(gates[3 * h:4 * h])
        cst = f_g * cst + i_g * g_g
        hst = o_g * jnp.tanh(cst)
        outs.append(hst)
    return jnp.stack(outs, axis=0)


if __name__ == "__main__":
    # Module defaults: N=12, max_seq_length=12, lstm_output_size=100; small batch.
    N = 12
    T = 12
    H = 100
    B = 8
    HP = ((H + 127) // 128) * 128                      # pad hidden to 128 lanes

    key = jax.random.PRNGKey(0)
    k_x, k_g, k_ih, k_hh = jax.random.split(key, 4)

    x = jax.random.normal(k_x, (B, N), dtype=jnp.float32)
    gumbel = jax.random.gumbel(k_g, (T, B, N), dtype=jnp.float32)
    grammar_mat = jnp.ones((N, N), dtype=jnp.float32) / float(N)

    # xavier_uniform_ init as in the module __init__; biases are zeroed there but
    # remain trainable Parameters, so the kernel path keeps them (folded into bias_p).
    bih = (6.0 / (N + 4 * H)) ** 0.5
    bhh = (6.0 / (H + 4 * H)) ** 0.5
    w_ih = jax.random.uniform(k_ih, (4 * H, N), jnp.float32, -bih, bih)
    w_hh = jax.random.uniform(k_hh, (4 * H, H), jnp.float32, -bhh, bhh)
    b_ih = jnp.zeros((4 * H,), jnp.float32)
    b_hh = jnp.zeros((4 * H,), jnp.float32)

    # One-time (hoisted) weight padding + bf16 cast — NOT part of the per-call path.
    wih_p, whh_p, bias_p = prepare_lstm_params(w_ih, w_hh, b_ih, b_hh, HP)

    out_p = differentiable_grammar_forward(x, gumbel, grammar_mat, wih_p, whh_p, bias_p)
    out_p = jax.block_until_ready(out_p)
    out = out_p[:, :H]                                 # strip lane padding

    assert out.shape == (B, H), out.shape
    assert bool(jnp.all(jnp.isfinite(out)))

    ref = _reference_forward(x, gumbel, grammar_mat, w_ih, w_hh, b_ih, b_hh)
    # bf16 MXU operands in the LSTM (per perf review) vs. a pure-f32 reference:
    # expected error is a few 1e-3 on outputs bounded in (-1, 1), so 1e-2 is safe.
    assert bool(jnp.allclose(out, ref, atol=1e-2, rtol=1e-2)), \
        float(jnp.max(jnp.abs(out - ref)))

    print("KERNEL_OK")
</pallas_src>

<mosaic_0001>
module attributes {stable_mosaic.version = 11 : i64} {
  func.func @_grammar_lstm_kernel(%arg0: i32, %arg1: memref<8x12xf32, #tpu.memory_space<vmem>>, %arg2: memref<12x8x12xf32, #tpu.memory_space<vmem>>, %arg3: memref<12x12xf32, #tpu.memory_space<vmem>>, %arg4: memref<12x512xbf16, #tpu.memory_space<vmem>>, %arg5: memref<128x512xbf16, #tpu.memory_space<vmem>>, %arg6: memref<1x512xf32, #tpu.memory_space<vmem>>, %arg7: memref<8x128xf32, #tpu.memory_space<vmem>>) attributes {dimension_semantics = [#tpu.dimension_semantics<arbitrary>], iteration_bounds = array<i64: 1>, scalar_prefetch = 0 : i64, scratch_operands = 0 : i64, tpu.core_type = #tpu.core_type<tc>, window_params = [{pipeline_mode = #tpu.pipeline_mode<synchronous>, transform_indices = @transform_0, window_bounds = array<i64: 8, 12>}, {pipeline_mode = #tpu.pipeline_mode<synchronous>, transform_indices = @transform_1, window_bounds = array<i64: 12, 8, 12>}, {pipeline_mode = #tpu.pipeline_mode<synchronous>, transform_indices = @transform_2, window_bounds = array<i64: 12, 12>}, {pipeline_mode = #tpu.pipeline_mode<synchronous>, transform_indices = @transform_3, window_bounds = array<i64: 12, 512>}, {pipeline_mode = #tpu.pipeline_mode<synchronous>, transform_indices = @transform_4, window_bounds = array<i64: 128, 512>}, {pipeline_mode = #tpu.pipeline_mode<synchronous>, transform_indices = @transform_5, window_bounds = array<i64: 1, 512>}, {pipeline_mode = #tpu.pipeline_mode<synchronous>, transform_indices = @transform_6, window_bounds = array<i64: 8, 128>}]} {
    %c0 = arith.constant 0 : index
    %c0_0 = arith.constant 0 : index
    %0 = vector.load %arg3[%c0, %c0_0] : memref<12x12xf32, #tpu.memory_space<vmem>>, vector<12x12xf32>
    %c0_1 = arith.constant 0 : index
    %c0_2 = arith.constant 0 : index
    %1 = vector.load %arg1[%c0_1, %c0_2] : memref<8x12xf32, #tpu.memory_space<vmem>>, vector<8x12xf32>
    %c0_3 = arith.constant 0 : index
    %c0_4 = arith.constant 0 : index
    %c0_5 = arith.constant 0 : index
    %2 = vector.load %arg2[%c0_3, %c0_4, %c0_5] : memref<12x8x12xf32, #tpu.memory_space<vmem>>, vector<1x8x12xf32>
    %3 = vector.shape_cast %2 : vector<1x8x12xf32> to vector<8x12xf32>
    %4 = arith.addf %1, %3 : vector<8x12xf32>
    %5 = tpu.iota {dimensions = array<i32: 1>} : vector<8x12xi32>
    %cst = arith.constant dense<0xFF800000> : vector<8xf32>
    %6 = vector.multi_reduction <maximumf>, %4, %cst [1] : vector<8x12xf32> to vector<8xf32>
    %7 = vector.shape_cast %6 : vector<8xf32> to vector<8x1xf32>
    %8 = vector.broadcast %7 : vector<8x1xf32> to vector<8x12xf32>
    %9 = arith.cmpf oeq, %4, %8 : vector<8x12xf32>
    %c12_i32 = arith.constant 12 : i32
    %10 = vector.broadcast %c12_i32 : i32 to vector<8x12xi32>
    %11 = arith.select %9, %5, %10 : vector<8x12xi1>, vector<8x12xi32>
    %cst_6 = arith.constant dense<2147483647> : vector<8xi32>
    %12 = vector.multi_reduction <minsi>, %11, %cst_6 [1] : vector<8x12xi32> to vector<8xi32>
    %13 = vector.shape_cast %12 : vector<8xi32> to vector<8x1xi32>
    %14 = vector.broadcast %13 : vector<8x1xi32> to vector<8x12xi32>
    %15 = arith.cmpi eq, %5, %14 : vector<8x12xi32>
    %16 = arith.extui %15 : vector<8x12xi1> to vector<8x12xi32>
    %17 = arith.sitofp %16 : vector<8x12xi32> to vector<8x12xf32>
    %cst_7 = arith.constant 0.000000e+00 : f32
    %18 = vector.broadcast %cst_7 : f32 to vector<8x12xf32>
    %c0_i32 = arith.constant 0 : i32
    %19 = vector.broadcast %c0_i32 : i32 to vector<8x1xi32>
    %20 = arith.cmpi eq, %13, %19 : vector<8x1xi32>
    %21 = vector.extract_strided_slice %0 {offsets = [0, 0], sizes = [1, 12], strides = [1, 1]} : vector<12x12xf32> to vector<1x12xf32>
    %22 = vector.shape_cast %20 : vector<8x1xi1> to vector<8x1xi1>
    %23 = vector.broadcast %22 : vector<8x1xi1> to vector<8x12xi1>
    %24 = vector.shape_cast %21 : vector<1x12xf32> to vector<1x12xf32>
    %25 = vector.broadcast %24 : vector<1x12xf32> to vector<8x12xf32>
    %26 = arith.select %23, %25, %18 : vector<8x12xi1>, vector<8x12xf32>
    %c1_i32 = arith.constant 1 : i32
    %27 = vector.broadcast %c1_i32 : i32 to vector<8x1xi32>
    %28 = arith.cmpi eq, %13, %27 : vector<8x1xi32>
    %29 = vector.extract_strided_slice %0 {offsets = [1, 0], sizes = [1, 12], strides = [1, 1]} : vector<12x12xf32> to vector<1x12xf32>
    %30 = vector.shape_cast %28 : vector<8x1xi1> to vector<8x1xi1>
    %31 = vector.broadcast %30 : vector<8x1xi1> to vector<8x12xi1>
    %32 = vector.shape_cast %29 : vector<1x12xf32> to vector<1x12xf32>
    %33 = vector.broadcast %32 : vector<1x12xf32> to vector<8x12xf32>
    %34 = arith.select %31, %33, %26 : vector<8x12xi1>, vector<8x12xf32>
    %c2_i32 = arith.constant 2 : i32
    %35 = vector.broadcast %c2_i32 : i32 to vector<8x1xi32>
    %36 = arith.cmpi eq, %13, %35 : vector<8x1xi32>
    %37 = vector.extract_strided_slice %0 {offsets = [2, 0], sizes = [1, 12], strides = [1, 1]} : vector<12x12xf32> to vector<1x12xf32>
    %38 = vector.shape_cast %36 : vector<8x1xi1> to vector<8x1xi1>
    %39 = vector.broadcast %38 : vector<8x1xi1> to vector<8x12xi1>
    %40 = vector.shape_cast %37 : vector<1x12xf32> to vector<1x12xf32>
    %41 = vector.broadcast %40 : vector<1x12xf32> to vector<8x12xf32>
    %42 = arith.select %39, %41, %34 : vector<8x12xi1>, vector<8x12xf32>
    %c3_i32 = arith.constant 3 : i32
    %43 = vector.broadcast %c3_i32 : i32 to vector<8x1xi32>
    %44 = arith.cmpi eq, %13, %43 : vector<8x1xi32>
    %45 = vector.extract_strided_slice %0 {offsets = [3, 0], sizes = [1, 12], strides = [1, 1]} : vector<12x12xf32> to vector<1x12xf32>
    %46 = vector.shape_cast %44 : vector<8x1xi1> to vector<8x1xi1>
    %47 = vector.broadcast %46 : vector<8x1xi1> to vector<8x12xi1>
    %48 = vector.shape_cast %45 : vector<1x12xf32> to vector<1x12xf32>
    %49 = vector.broadcast %48 : vector<1x12xf32> to vector<8x12xf32>
    %50 = arith.select %47, %49, %42 : vector<8x12xi1>, vector<8x12xf32>
    %c4_i32 = arith.constant 4 : i32
    %51 = vector.broadcast %c4_i32 : i32 to vector<8x1xi32>
    %52 = arith.cmpi eq, %13, %51 : vector<8x1xi32>
    %53 = vector.extract_strided_slice %0 {offsets = [4, 0], sizes = [1, 12], strides = [1, 1]} : vector<12x12xf32> to vector<1x12xf32>
    %54 = vector.shape_cast %52 : vector<8x1xi1> to vector<8x1xi1>
    %55 = vector.broadcast %54 : vector<8x1xi1> to vector<8x12xi1>
    %56 = vector.shape_cast %53 : vector<1x12xf32> to vector<1x12xf32>
    %57 = vector.broadcast %56 : vector<1x12xf32> to vector<8x12xf32>
    %58 = arith.select %55, %57, %50 : vector<8x12xi1>, vector<8x12xf32>
    %c5_i32 = arith.constant 5 : i32
    %59 = vector.broadcast %c5_i32 : i32 to vector<8x1xi32>
    %60 = arith.cmpi eq, %13, %59 : vector<8x1xi32>
    %61 = vector.extract_strided_slice %0 {offsets = [5, 0], sizes = [1, 12], strides = [1, 1]} : vector<12x12xf32> to vector<1x12xf32>
    %62 = vector.shape_cast %60 : vector<8x1xi1> to vector<8x1xi1>
    %63 = vector.broadcast %62 : vector<8x1xi1> to vector<8x12xi1>
    %64 = vector.shape_cast %61 : vector<1x12xf32> to vector<1x12xf32>
    %65 = vector.broadcast %64 : vector<1x12xf32> to vector<8x12xf32>
    %66 = arith.select %63, %65, %58 : vector<8x12xi1>, vector<8x12xf32>
    %c6_i32 = arith.constant 6 : i32
    %67 = vector.broadcast %c6_i32 : i32 to vector<8x1xi32>
    %68 = arith.cmpi eq, %13, %67 : vector<8x1xi32>
    %69 = vector.extract_strided_slice %0 {offsets = [6, 0], sizes = [1, 12], strides = [1, 1]} : vector<12x12xf32> to vector<1x12xf32>
    %70 = vector.shape_cast %68 : vector<8x1xi1> to vector<8x1xi1>
    %71 = vector.broadcast %70 : vector<8x1xi1> to vector<8x12xi1>
    %72 = vector.shape_cast %69 : vector<1x12xf32> to vector<1x12xf32>
    %73 = vector.broadcast %72 : vector<1x12xf32> to vector<8x12xf32>
    %74 = arith.select %71, %73, %66 : vector<8x12xi1>, vector<8x12xf32>
    %c7_i32 = arith.constant 7 : i32
    %75 = vector.broadcast %c7_i32 : i32 to vector<8x1xi32>
    %76 = arith.cmpi eq, %13, %75 : vector<8x1xi32>
    %77 = vector.extract_strided_slice %0 {offsets = [7, 0], sizes = [1, 12], strides = [1, 1]} : vector<12x12xf32> to vector<1x12xf32>
    %78 = vector.shape_cast %76 : vector<8x1xi1> to vector<8x1xi1>
    %79 = vector.broadcast %78 : vector<8x1xi1> to vector<8x12xi1>
    %80 = vector.shape_cast %77 : vector<1x12xf32> to vector<1x12xf32>
    %81 = vector.broadcast %80 : vector<1x12xf32> to vector<8x12xf32>
    %82 = arith.select %79, %81, %74 : vector<8x12xi1>, vector<8x12xf32>
    %c8_i32 = arith.constant 8 : i32
    %83 = vector.broadcast %c8_i32 : i32 to vector<8x1xi32>
    %84 = arith.cmpi eq, %13, %83 : vector<8x1xi32>
    %85 = vector.extract_strided_slice %0 {offsets = [8, 0], sizes = [1, 12], strides = [1, 1]} : vector<12x12xf32> to vector<1x12xf32>
    %86 = vector.shape_cast %84 : vector<8x1xi1> to vector<8x1xi1>
    %87 = vector.broadcast %86 : vector<8x1xi1> to vector<8x12xi1>
    %88 = vector.shape_cast %85 : vector<1x12xf32> to vector<1x12xf32>
    %89 = vector.broadcast %88 : vector<1x12xf32> to vector<8x12xf32>
    %90 = arith.select %87, %89, %82 : vector<8x12xi1>, vector<8x12xf32>
    %c9_i32 = arith.constant 9 : i32
    %91 = vector.broadcast %c9_i32 : i32 to vector<8x1xi32>
    %92 = arith.cmpi eq, %13, %91 : vector<8x1xi32>
    %93 = vector.extract_strided_slice %0 {offsets = [9, 0], sizes = [1, 12], strides = [1, 1]} : vector<12x12xf32> to vector<1x12xf32>
    %94 = vector.shape_cast %92 : vector<8x1xi1> to vector<8x1xi1>
    %95 = vector.broadcast %94 : vector<8x1xi1> to vector<8x12xi1>
    %96 = vector.shape_cast %93 : vector<1x12xf32> to vector<1x12xf32>
    %97 = vector.broadcast %96 : vector<1x12xf32> to vector<8x12xf32>
    %98 = arith.select %95, %97, %90 : vector<8x12xi1>, vector<8x12xf32>
    %c10_i32 = arith.constant 10 : i32
    %99 = vector.broadcast %c10_i32 : i32 to vector<8x1xi32>
    %100 = arith.cmpi eq, %13, %99 : vector<8x1xi32>
    %101 = vector.extract_strided_slice %0 {offsets = [10, 0], sizes = [1, 12], strides = [1, 1]} : vector<12x12xf32> to vector<1x12xf32>
    %102 = vector.shape_cast %100 : vector<8x1xi1> to vector<8x1xi1>
    %103 = vector.broadcast %102 : vector<8x1xi1> to vector<8x12xi1>
    %104 = vector.shape_cast %101 : vector<1x12xf32> to vector<1x12xf32>
    %105 = vector.broadcast %104 : vector<1x12xf32> to vector<8x12xf32>
    %106 = arith.select %103, %105, %98 : vector<8x12xi1>, vector<8x12xf32>
    %c11_i32 = arith.constant 11 : i32
    %107 = vector.broadcast %c11_i32 : i32 to vector<8x1xi32>
    %108 = arith.cmpi eq, %13, %107 : vector<8x1xi32>
    %109 = vector.extract_strided_slice %0 {offsets = [11, 0], sizes = [1, 12], strides = [1, 1]} : vector<12x12xf32> to vector<1x12xf32>
    %110 = vector.shape_cast %108 : vector<8x1xi1> to vector<8x1xi1>
    %111 = vector.broadcast %110 : vector<8x1xi1> to vector<8x12xi1>
    %112 = vector.shape_cast %109 : vector<1x12xf32> to vector<1x12xf32>
    %113 = vector.broadcast %112 : vector<1x12xf32> to vector<8x12xf32>
    %114 = arith.select %111, %113, %106 : vector<8x12xi1>, vector<8x12xf32>
    %c1 = arith.constant 1 : index
    %c0_8 = arith.constant 0 : index
    %c0_9 = arith.constant 0 : index
    %115 = vector.load %arg2[%c1, %c0_8, %c0_9] : memref<12x8x12xf32, #tpu.memory_space<vmem>>, vector<1x8x12xf32>
    %116 = vector.shape_cast %115 : vector<1x8x12xf32> to vector<8x12xf32>
    %117 = arith.addf %114, %116 : vector<8x12xf32>
    %118 = tpu.iota {dimensions = array<i32: 1>} : vector<8x12xi32>
    %cst_10 = arith.constant dense<0xFF800000> : vector<8xf32>
    %119 = vector.multi_reduction <maximumf>, %117, %cst_10 [1] : vector<8x12xf32> to vector<8xf32>
    %120 = vector.shape_cast %119 : vector<8xf32> to vector<8x1xf32>
    %121 = vector.broadcast %120 : vector<8x1xf32> to vector<8x12xf32>
    %122 = arith.cmpf oeq, %117, %121 : vector<8x12xf32>
    %c12_i32_11 = arith.constant 12 : i32
    %123 = vector.broadcast %c12_i32_11 : i32 to vector<8x12xi32>
    %124 = arith.select %122, %118, %123 : vector<8x12xi1>, vector<8x12xi32>
    %cst_12 = arith.constant dense<2147483647> : vector<8xi32>
    %125 = vector.multi_reduction <minsi>, %124, %cst_12 [1] : vector<8x12xi32> to vector<8xi32>
    %126 = vector.shape_cast %125 : vector<8xi32> to vector<8x1xi32>
    %127 = vector.broadcast %126 : vector<8x1xi32> to vector<8x12xi32>
    %128 = arith.cmpi eq, %118, %127 : vector<8x12xi32>
    %129 = arith.extui %128 : vector<8x12xi1> to vector<8x12xi32>
    %130 = arith.sitofp %129 : vector<8x12xi32> to vector<8x12xf32>
    %c11_i32_13 = arith.constant 11 : i32
    %131 = vector.broadcast %c11_i32_13 : i32 to vector<8x1xi32>
    %132 = arith.cmpi ne, %13, %131 : vector<8x1xi32>
    %133 = vector.shape_cast %132 : vector<8x1xi1> to vector<8x1xi1>
    %134 = vector.broadcast %133 : vector<8x1xi1> to vector<8x12xi1>
    %135 = arith.select %134, %130, %17 : vector<8x12xi1>, vector<8x12xf32>
    %136 = arith.select %132, %126, %13 : vector<8x1xi1>, vector<8x1xi32>
    %cst_14 = arith.constant 0.000000e+00 : f32
    %137 = vector.broadcast %cst_14 : f32 to vector<8x12xf32>
    %c0_i32_15 = arith.constant 0 : i32
    %138 = vector.broadcast %c0_i32_15 : i32 to vector<8x1xi32>
    %139 = arith.cmpi eq, %136, %138 : vector<8x1xi32>
    %140 = vector.extract_strided_slice %0 {offsets = [0, 0], sizes = [1, 12], strides = [1, 1]} : vector<12x12xf32> to vector<1x12xf32>
    %141 = vector.shape_cast %139 : vector<8x1xi1> to vector<8x1xi1>
    %142 = vector.broadcast %141 : vector<8x1xi1> to vector<8x12xi1>
    %143 = vector.shape_cast %140 : vector<1x12xf32> to vector<1x12xf32>
    %144 = vector.broadcast %143 : vector<1x12xf32> to vector<8x12xf32>
    %145 = arith.select %142, %144, %137 : vector<8x12xi1>, vector<8x12xf32>
    %c1_i32_16 = arith.constant 1 : i32
    %146 = vector.broadcast %c1_i32_16 : i32 to vector<8x1xi32>
    %147 = arith.cmpi eq, %136, %146 : vector<8x1xi32>
    %148 = vector.extract_strided_slice %0 {offsets = [1, 0], sizes = [1, 12], strides = [1, 1]} : vector<12x12xf32> to vector<1x12xf32>
    %149 = vector.shape_cast %147 : vector<8x1xi1> to vector<8x1xi1>
    %150 = vector.broadcast %149 : vector<8x1xi1> to vector<8x12xi1>
    %151 = vector.shape_cast %148 : vector<1x12xf32> to vector<1x12xf32>
    %152 = vector.broadcast %151 : vector<1x12xf32> to vector<8x12xf32>
    %153 = arith.select %150, %152, %145 : vector<8x12xi1>, vector<8x12xf32>
    %c2_i32_17 = arith.constant 2 : i32
    %154 = vector.broadcast %c2_i32_17 : i32 to vector<8x1xi32>
    %155 = arith.cmpi eq, %136, %154 : vector<8x1xi32>
    %156 = vector.extract_strided_slice %0 {offsets = [2, 0], sizes = [1, 12], strides = [1, 1]} : vector<12x12xf32> to vector<1x12xf32>
    %157 = vector.shape_cast %155 : vector<8x1xi1> to vector<8x1xi1>
    %158 = vector.broadcast %157 : vector<8x1xi1> to vector<8x12xi1>
    %159 = vector.shape_cast %156 : vector<1x12xf32> to vector<1x12xf32>
    %160 = vector.broadcast %159 : vector<1x12xf32> to vector<8x12xf32>
    %161 = arith.select %158, %160, %153 : vector<8x12xi1>, vector<8x12xf32>
    %c3_i32_18 = arith.constant 3 : i32
    %162 = vector.broadcast %c3_i32_18 : i32 to vector<8x1xi32>
    %163 = arith.cmpi eq, %136, %162 : vector<8x1xi32>
    %164 = vector.extract_strided_slice %0 {offsets = [3, 0], sizes = [1, 12], strides = [1, 1]} : vector<12x12xf32> to vector<1x12xf32>
    %165 = vector.shape_cast %163 : vector<8x1xi1> to vector<8x1xi1>
    %166 = vector.broadcast %165 : vector<8x1xi1> to vector<8x12xi1>
    %167 = vector.shape_cast %164 : vector<1x12xf32> to vector<1x12xf32>
    %168 = vector.broadcast %167 : vector<1x12xf32> to vector<8x12xf32>
    %169 = arith.select %166, %168, %161 : vector<8x12xi1>, vector<8x12xf32>
    %c4_i32_19 = arith.constant 4 : i32
    %170 = vector.broadcast %c4_i32_19 : i32 to vector<8x1xi32>
    %171 = arith.cmpi eq, %136, %170 : vector<8x1xi32>
    %172 = vector.extract_strided_slice %0 {offsets = [4, 0], sizes = [1, 12], strides = [1, 1]} : vector<12x12xf32> to vector<1x12xf32>
    %173 = vector.shape_cast %171 : vector<8x1xi1> to vector<8x1xi1>
    %174 = vector.broadcast %173 : vector<8x1xi1> to vector<8x12xi1>
    %175 = vector.shape_cast %172 : vector<1x12xf32> to vector<1x12xf32>
    %176 = vector.broadcast %175 : vector<1x12xf32> to vector<8x12xf32>
    %177 = arith.select %174, %176, %169 : vector<8x12xi1>, vector<8x12xf32>
    %c5_i32_20 = arith.constant 5 : i32
    %178 = vector.broadcast %c5_i32_20 : i32 to vector<8x1xi32>
    %179 = arith.cmpi eq, %136, %178 : vector<8x1xi32>
    %180 = vector.extract_strided_slice %0 {offsets = [5, 0], sizes = [1, 12], strides = [1, 1]} : vector<12x12xf32> to vector<1x12xf32>
    %181 = vector.shape_cast %179 : vector<8x1xi1> to vector<8x1xi1>
    %182 = vector.broadcast %181 : vector<8x1xi1> to vector<8x12xi1>
    %183 = vector.shape_cast %180 : vector<1x12xf32> to vector<1x12xf32>
    %184 = vector.broadcast %183 : vector<1x12xf32> to vector<8x12xf32>
    %185 = arith.select %182, %184, %177 : vector<8x12xi1>, vector<8x12xf32>
    %c6_i32_21 = arith.constant 6 : i32
    %186 = vector.broadcast %c6_i32_21 : i32 to vector<8x1xi32>
    %187 = arith.cmpi eq, %136, %186 : vector<8x1xi32>
    %188 = vector.extract_strided_slice %0 {offsets = [6, 0], sizes = [1, 12], strides = [1, 1]} : vector<12x12xf32> to vector<1x12xf32>
    %189 = vector.shape_cast %187 : vector<8x1xi1> to vector<8x1xi1>
    %190 = vector.broadcast %189 : vector<8x1xi1> to vector<8x12xi1>
    %191 = vector.shape_cast %188 : vector<1x12xf32> to vector<1x12xf32>
    %192 = vector.broadcast %191 : vector<1x12xf32> to vector<8x12xf32>
    %193 = arith.select %190, %192, %185 : vector<8x12xi1>, vector<8x12xf32>
    %c7_i32_22 = arith.constant 7 : i32
    %194 = vector.broadcast %c7_i32_22 : i32 to vector<8x1xi32>
    %195 = arith.cmpi eq, %136, %194 : vector<8x1xi32>
    %196 = vector.extract_strided_slice %0 {offsets = [7, 0], sizes = [1, 12], strides = [1, 1]} : vector<12x12xf32> to vector<1x12xf32>
    %197 = vector.shape_cast %195 : vector<8x1xi1> to vector<8x1xi1>
    %198 = vector.broadcast %197 : vector<8x1xi1> to vector<8x12xi1>
    %199 = vector.shape_cast %196 : vector<1x12xf32> to vector<1x12xf32>
    %200 = vector.broadcast %199 : vector<1x12xf32> to vector<8x12xf32>
    %201 = arith.select %198, %200, %193 : vector<8x12xi1>, vector<8x12xf32>
    %c8_i32_23 = arith.constant 8 : i32
    %202 = vector.broadcast %c8_i32_23 : i32 to vector<8x1xi32>
    %203 = arith.cmpi eq, %136, %202 : vector<8x1xi32>
    %204 = vector.extract_strided_slice %0 {offsets = [8, 0], sizes = [1, 12], strides = [1, 1]} : vector<12x12xf32> to vector<1x12xf32>
    %205 = vector.shape_cast %203 : vector<8x1xi1> to vector<8x1xi1>
    %206 = vector.broadcast %205 : vector<8x1xi1> to vector<8x12xi1>
    %207 = vector.shape_cast %204 : vector<1x12xf32> to vector<1x12xf32>
    %208 = vector.broadcast %207 : vector<1x12xf32> to vector<8x12xf32>
    %209 = arith.select %206, %208, %201 : vector<8x12xi1>, vector<8x12xf32>
    %c9_i32_24 = arith.constant 9 : i32
    %210 = vector.broadcast %c9_i32_24 : i32 to vector<8x1xi32>
    %211 = arith.cmpi eq, %136, %210 : vector<8x1xi32>
    %212 = vector.extract_strided_slice %0 {offsets = [9, 0], sizes = [1, 12], strides = [1, 1]} : vector<12x12xf32> to vector<1x12xf32>
    %213 = vector.shape_cast %211 : vector<8x1xi1> to vector<8x1xi1>
    %214 = vector.broadcast %213 : vector<8x1xi1> to vector<8x12xi1>
    %215 = vector.shape_cast %212 : vector<1x12xf32> to vector<1x12xf32>
    %216 = vector.broadcast %215 : vector<1x12xf32> to vector<8x12xf32>
    %217 = arith.select %214, %216, %209 : vector<8x12xi1>, vector<8x12xf32>
    %c10_i32_25 = arith.constant 10 : i32
    %218 = vector.broadcast %c10_i32_25 : i32 to vector<8x1xi32>
    %219 = arith.cmpi eq, %136, %218 : vector<8x1xi32>
    %220 = vector.extract_strided_slice %0 {offsets = [10, 0], sizes = [1, 12], strides = [1, 1]} : vector<12x12xf32> to vector<1x12xf32>
    %221 = vector.shape_cast %219 : vector<8x1xi1> to vector<8x1xi1>
    %222 = vector.broadcast %221 : vector<8x1xi1> to vector<8x12xi1>
    %223 = vector.shape_cast %220 : vector<1x12xf32> to vector<1x12xf32>
    %224 = vector.broadcast %223 : vector<1x12xf32> to vector<8x12xf32>
    %225 = arith.select %222, %224, %217 : vector<8x12xi1>, vector<8x12xf32>
    %c11_i32_26 = arith.constant 11 : i32
    %226 = vector.broadcast %c11_i32_26 : i32 to vector<8x1xi32>
    %227 = arith.cmpi eq, %136, %226 : vector<8x1xi32>
    %228 = vector.extract_strided_slice %0 {offsets = [11, 0], sizes = [1, 12], strides = [1, 1]} : vector<12x12xf32> to vector<1x12xf32>
    %229 = vector.shape_cast %227 : vector<8x1xi1> to vector<8x1xi1>
    %230 = vector.broadcast %229 : vector<8x1xi1> to vector<8x12xi1>
    %231 = vector.shape_cast %228 : vector<1x12xf32> to vector<1x12xf32>
    %232 = vector.broadcast %231 : vector<1x12xf32> to vector<8x12xf32>
    %233 = arith.select %230, %232, %225 : vector<8x12xi1>, vector<8x12xf32>
    %c2 = arith.constant 2 : index
    %c0_27 = arith.constant 0 : index
    %c0_28 = arith.constant 0 : index
    %234 = vector.load %arg2[%c2, %c0_27, %c0_28] : memref<12x8x12xf32, #tpu.memory_space<vmem>>, vector<1x8x12xf32>
    %235 = vector.shape_cast %234 : vector<1x8x12xf32> to vector<8x12xf32>
    %236 = arith.addf %233, %235 : vector<8x12xf32>
    %237 = tpu.iota {dimensions = array<i32: 1>} : vector<8x12xi32>
    %cst_29 = arith.constant dense<0xFF800000> : vector<8xf32>
    %238 = vector.multi_reduction <maximumf>, %236, %cst_29 [1] : vector<8x12xf32> to vector<8xf32>
    %239 = vector.shape_cast %238 : vector<8xf32> to vector<8x1xf32>
    %240 = vector.broadcast %239 : vector<8x1xf32> to vector<8x12xf32>
    %241 = arith.cmpf oeq, %236, %240 : vector<8x12xf32>
    %c12_i32_30 = arith.constant 12 : i32
    %242 = vector.broadcast %c12_i32_30 : i32 to vector<8x12xi32>
    %243 = arith.select %241, %237, %242 : vector<8x12xi1>, vector<8x12xi32>
    %cst_31 = arith.constant dense<2147483647> : vector<8xi32>
    %244 = vector.multi_reduction <minsi>, %243, %cst_31 [1] : vector<8x12xi32> to vector<8xi32>
    %245 = vector.shape_cast %244 : vector<8xi32> to vector<8x1xi32>
    %246 = vector.broadcast %245 : vector<8x1xi32> to vector<8x12xi32>
    %247 = arith.cmpi eq, %237, %246 : vector<8x12xi32>
    %248 = arith.extui %247 : vector<8x12xi1> to vector<8x12xi32>
    %249 = arith.sitofp %248 : vector<8x12xi32> to vector<8x12xf32>
    %c11_i32_32 = arith.constant 11 : i32
    %250 = vector.broadcast %c11_i32_32 : i32 to vector<8x1xi32>
    %251 = arith.cmpi ne, %136, %250 : vector<8x1xi32>
    %252 = vector.shape_cast %251 : vector<8x1xi1> to vector<8x1xi1>
    %253 = vector.broadcast %252 : vector<8x1xi1> to vector<8x12xi1>
    %254 = arith.select %253, %249, %135 : vector<8x12xi1>, vector<8x12xf32>
    %255 = arith.select %251, %245, %136 : vector<8x1xi1>, vector<8x1xi32>
    %cst_33 = arith.constant 0.000000e+00 : f32
    %256 = vector.broadcast %cst_33 : f32 to vector<8x12xf32>
    %c0_i32_34 = arith.constant 0 : i32
    %257 = vector.broadcast %c0_i32_34 : i32 to vector<8x1xi32>
    %258 = arith.cmpi eq, %255, %257 : vector<8x1xi32>
    %259 = vector.extract_strided_slice %0 {offsets = [0, 0], sizes = [1, 12], strides = [1, 1]} : vector<12x12xf32> to vector<1x12xf32>
    %260 = vector.shape_cast %258 : vector<8x1xi1> to vector<8x1xi1>
    %261 = vector.broadcast %260 : vector<8x1xi1> to vector<8x12xi1>
    %262 = vector.shape_cast %259 : vector<1x12xf32> to vector<1x12xf32>
    %263 = vector.broadcast %262 : vector<1x12xf32> to vector<8x12xf32>
    %264 = arith.select %261, %263, %256 : vector<8x12xi1>, vector<8x12xf32>
    %c1_i32_35 = arith.constant 1 : i32
    %265 = vector.broadcast %c1_i32_35 : i32 to vector<8x1xi32>
    %266 = arith.cmpi eq, %255, %265 : vector<8x1xi32>
    %267 = vector.extract_strided_slice %0 {offsets = [1, 0], sizes = [1, 12], strides = [1, 1]} : vector<12x12xf32> to vector<1x12xf32>
    %268 = vector.shape_cast %266 : vector<8x1xi1> to vector<8x1xi1>
    %269 = vector.broadcast %268 : vector<8x1xi1> to vector<8x12xi1>
    %270 = vector.shape_cast %267 : vector<1x12xf32> to vector<1x12xf32>
    %271 = vector.broadcast %270 : vector<1x12xf32> to vector<8x12xf32>
    %272 = arith.select %269, %271, %264 : vector<8x12xi1>, vector<8x12xf32>
    %c2_i32_36 = arith.constant 2 : i32
    %273 = vector.broadcast %c2_i32_36 : i32 to vector<8x1xi32>
    %274 = arith.cmpi eq, %255, %273 : vector<8x1xi32>
    %275 = vector.extract_strided_slice %0 {offsets = [2, 0], sizes = [1, 12], strides = [1, 1]} : vector<12x12xf32> to vector<1x12xf32>
    %276 = vector.shape_cast %274 : vector<8x1xi1> to vector<8x1xi1>
    %277 = vector.broadcast %276 : vector<8x1xi1> to vector<8x12xi1>
    %278 = vector.shape_cast %275 : vector<1x12xf32> to vector<1x12xf32>
    %279 = vector.broadcast %278 : vector<1x12xf32> to vector<8x12xf32>
    %280 = arith.select %277, %279, %272 : vector<8x12xi1>, vector<8x12xf32>
    %c3_i32_37 = arith.constant 3 : i32
    %281 = vector.broadcast %c3_i32_37 : i32 to vector<8x1xi32>
    %282 = arith.cmpi eq, %255, %281 : vector<8x1xi32>
    %283 = vector.extract_strided_slice %0 {offsets = [3, 0], sizes = [1, 12], strides = [1, 1]} : vector<12x12xf32> to vector<1x12xf32>
    %284 = vector.shape_cast %282 : vector<8x1xi1> to vector<8x1xi1>
    %285 = vector.broadcast %284 : vector<8x1xi1> to vector<8x12xi1>
    %286 = vector.shape_cast %283 : vector<1x12xf32> to vector<1x12xf32>
    %287 = vector.broadcast %286 : vector<1x12xf32> to vector<8x12xf32>
    %288 = arith.select %285, %287, %280 : vector<8x12xi1>, vector<8x12xf32>
    %c4_i32_38 = arith.constant 4 : i32
    %289 = vector.broadcast %c4_i32_38 : i32 to vector<8x1xi32>
    %290 = arith.cmpi eq, %255, %289 : vector<8x1xi32>
    %291 = vector.extract_strided_slice %0 {offsets = [4, 0], sizes = [1, 12], strides = [1, 1]} : vector<12x12xf32> to vector<1x12xf32>
    %292 = vector.shape_cast %290 : vector<8x1xi1> to vector<8x1xi1>
    %293 = vector.broadcast %292 : vector<8x1xi1> to vector<8x12xi1>
    %294 = vector.shape_cast %291 : vector<1x12xf32> to vector<1x12xf32>
    %295 = vector.broadcast %294 : vector<1x12xf32> to vector<8x12xf32>
    %296 = arith.select %293, %295, %288 : vector<8x12xi1>, vector<8x12xf32>
    %c5_i32_39 = arith.constant 5 : i32
    %297 = vector.broadcast %c5_i32_39 : i32 to vector<8x1xi32>
    %298 = arith.cmpi eq, %255, %297 : vector<8x1xi32>
    %299 = vector.extract_strided_slice %0 {offsets = [5, 0], sizes = [1, 12], strides = [1, 1]} : vector<12x12xf32> to vector<1x12xf32>
    %300 = vector.shape_cast %298 : vector<8x1xi1> to vector<8x1xi1>
    %301 = vector.broadcast %300 : vector<8x1xi1> to vector<8x12xi1>
    %302 = vector.shape_cast %299 : vector<1x12xf32> to vector<1x12xf32>
    %303 = vector.broadcast %302 : vector<1x12xf32> to vector<8x12xf32>
    %304 = arith.select %301, %303, %296 : vector<8x12xi1>, vector<8x12xf32>
    %c6_i32_40 = arith.constant 6 : i32
    %305 = vector.broadcast %c6_i32_40 : i32 to vector<8x1xi32>
    %306 = arith.cmpi eq, %255, %305 : vector<8x1xi32>
    %307 = vector.extract_strided_slice %0 {offsets = [6, 0], sizes = [1, 12], strides = [1, 1]} : vector<12x12xf32> to vector<1x12xf32>
    %308 = vector.shape_cast %306 : vector<8x1xi1> to vector<8x1xi1>
    %309 = vector.broadcast %308 : vector<8x1xi1> to vector<8x12xi1>
    %310 = vector.shape_cast %307 : vector<1x12xf32> to vector<1x12xf32>
    %311 = vector.broadcast %310 : vector<1x12xf32> to vector<8x12xf32>
    %312 = arith.select %309, %311, %304 : vector<8x12xi1>, vector<8x12xf32>
    %c7_i32_41 = arith.constant 7 : i32
    %313 = vector.broadcast %c7_i32_41 : i32 to vector<8x1xi32>
    %314 = arith.cmpi eq, %255, %313 : vector<8x1xi32>
    %315 = vector.extract_strided_slice %0 {offsets = [7, 0], sizes = [1, 12], strides = [1, 1]} : vector<12x12xf32> to vector<1x12xf32>
    %316 = vector.shape_cast %314 : vector<8x1xi1> to vector<8x1xi1>
    %317 = vector.broadcast %316 : vector<8x1xi1> to vector<8x12xi1>
    %318 = vector.shape_cast %315 : vector<1x12xf32> to vector<1x12xf32>
    %319 = vector.broadcast %318 : vector<1x12xf32> to vector<8x12xf32>
    %320 = arith.select %317, %319, %312 : vector<8x12xi1>, vector<8x12xf32>
    %c8_i32_42 = arith.constant 8 : i32
    %321 = vector.broadcast %c8_i32_42 : i32 to vector<8x1xi32>
    %322 = arith.cmpi eq, %255, %321 : vector<8x1xi32>
    %323 = vector.extract_strided_slice %0 {offsets = [8, 0], sizes = [1, 12], strides = [1, 1]} : vector<12x12xf32> to vector<1x12xf32>
    %324 = vector.shape_cast %322 : vector<8x1xi1> to vector<8x1xi1>
    %325 = vector.broadcast %324 : vector<8x1xi1> to vector<8x12xi1>
    %326 = vector.shape_cast %323 : vector<1x12xf32> to vector<1x12xf32>
    %327 = vector.broadcast %326 : vector<1x12xf32> to vector<8x12xf32>
    %328 = arith.select %325, %327, %320 : vector<8x12xi1>, vector<8x12xf32>
    %c9_i32_43 = arith.constant 9 : i32
    %329 = vector.broadcast %c9_i32_43 : i32 to vector<8x1xi32>
    %330 = arith.cmpi eq, %255, %329 : vector<8x1xi32>
    %331 = vector.extract_strided_slice %0 {offsets = [9, 0], sizes = [1, 12], strides = [1, 1]} : vector<12x12xf32> to vector<1x12xf32>
    %332 = vector.shape_cast %330 : vector<8x1xi1> to vector<8x1xi1>
    %333 = vector.broadcast %332 : vector<8x1xi1> to vector<8x12xi1>
    %334 = vector.shape_cast %331 : vector<1x12xf32> to vector<1x12xf32>
    %335 = vector.broadcast %334 : vector<1x12xf32> to vector<8x12xf32>
    %336 = arith.select %333, %335, %328 : vector<8x12xi1>, vector<8x12xf32>
    %c10_i32_44 = arith.constant 10 : i32
    %337 = vector.broadcast %c10_i32_44 : i32 to vector<8x1xi32>
    %338 = arith.cmpi eq, %255, %337 : vector<8x1xi32>
    %339 = vector.extract_strided_slice %0 {offsets = [10, 0], sizes = [1, 12], strides = [1, 1]} : vector<12x12xf32> to vector<1x12xf32>
    %340 = vector.shape_cast %338 : vector<8x1xi1> to vector<8x1xi1>
    %341 = vector.broadcast %340 : vector<8x1xi1> to vector<8x12xi1>
    %342 = vector.shape_cast %339 : vector<1x12xf32> to vector<1x12xf32>
    %343 = vector.broadcast %342 : vector<1x12xf32> to vector<8x12xf32>
    %344 = arith.select %341, %343, %336 : vector<8x12xi1>, vector<8x12xf32>
    %c11_i32_45 = arith.constant 11 : i32
    %345 = vector.broadcast %c11_i32_45 : i32 to vector<8x1xi32>
    %346 = arith.cmpi eq, %255, %345 : vector<8x1xi32>
    %347 = vector.extract_strided_slice %0 {offsets = [11, 0], sizes = [1, 12], strides = [1, 1]} : vector<12x12xf32> to vector<1x12xf32>
    %348 = vector.shape_cast %346 : vector<8x1xi1> to vector<8x1xi1>
    %349 = vector.broadcast %348 : vector<8x1xi1> to vector<8x12xi1>
    %350 = vector.shape_cast %347 : vector<1x12xf32> to vector<1x12xf32>
    %351 = vector.broadcast %350 : vector<1x12xf32> to vector<8x12xf32>
    %352 = arith.select %349, %351, %344 : vector<8x12xi1>, vector<8x12xf32>
    %c3 = arith.constant 3 : index
    %c0_46 = arith.constant 0 : index
    %c0_47 = arith.constant 0 : index
    %353 = vector.load %arg2[%c3, %c0_46, %c0_47] : memref<12x8x12xf32, #tpu.memory_space<vmem>>, vector<1x8x12xf32>
    %354 = vector.shape_cast %353 : vector<1x8x12xf32> to vector<8x12xf32>
    %355 = arith.addf %352, %354 : vector<8x12xf32>
    %356 = tpu.iota {dimensions = array<i32: 1>} : vector<8x12xi32>
    %cst_48 = arith.constant dense<0xFF800000> : vector<8xf32>
    %357 = vector.multi_reduction <maximumf>, %355, %cst_48 [1] : vector<8x12xf32> to vector<8xf32>
    %358 = vector.shape_cast %357 : vector<8xf32> to vector<8x1xf32>
    %359 = vector.broadcast %358 : vector<8x1xf32> to vector<8x12xf32>
    %360 = arith.cmpf oeq, %355, %359 : vector<8x12xf32>
    %c12_i32_49 = arith.constant 12 : i32
    %361 = vector.broadcast %c12_i32_49 : i32 to vector<8x12xi32>
    %362 = arith.select %360, %356, %361 : vector<8x12xi1>, vector<8x12xi32>
    %cst_50 = arith.constant dense<2147483647> : vector<8xi32>
    %363 = vector.multi_reduction <minsi>, %362, %cst_50 [1] : vector<8x12xi32> to vector<8xi32>
    %364 = vector.shape_cast %363 : vector<8xi32> to vector<8x1xi32>
    %365 = vector.broadcast %364 : vector<8x1xi32> to vector<8x12xi32>
    %366 = arith.cmpi eq, %356, %365 : vector<8x12xi32>
    %367 = arith.extui %366 : vector<8x12xi1> to vector<8x12xi32>
    %368 = arith.sitofp %367 : vector<8x12xi32> to vector<8x12xf32>
    %c11_i32_51 = arith.constant 11 : i32
    %369 = vector.broadcast %c11_i32_51 : i32 to vector<8x1xi32>
    %370 = arith.cmpi ne, %255, %369 : vector<8x1xi32>
    %371 = vector.shape_cast %370 : vector<8x1xi1> to vector<8x1xi1>
    %372 = vector.broadcast %371 : vector<8x1xi1> to vector<8x12xi1>
    %373 = arith.select %372, %368, %254 : vector<8x12xi1>, vector<8x12xf32>
    %374 = arith.select %370, %364, %255 : vector<8x1xi1>, vector<8x1xi32>
    %cst_52 = arith.constant 0.000000e+00 : f32
    %375 = vector.broadcast %cst_52 : f32 to vector<8x12xf32>
    %c0_i32_53 = arith.constant 0 : i32
    %376 = vector.broadcast %c0_i32_53 : i32 to vector<8x1xi32>
    %377 = arith.cmpi eq, %374, %376 : vector<8x1xi32>
    %378 = vector.extract_strided_slice %0 {offsets = [0, 0], sizes = [1, 12], strides = [1, 1]} : vector<12x12xf32> to vector<1x12xf32>
    %379 = vector.shape_cast %377 : vector<8x1xi1> to vector<8x1xi1>
    %380 = vector.broadcast %379 : vector<8x1xi1> to vector<8x12xi1>
    %381 = vector.shape_cast %378 : vector<1x12xf32> to vector<1x12xf32>
    %382 = vector.broadcast %381 : vector<1x12xf32> to vector<8x12xf32>
    %383 = arith.select %380, %382, %375 : vector<8x12xi1>, vector<8x12xf32>
    %c1_i32_54 = arith.constant 1 : i32
    %384 = vector.broadcast %c1_i32_54 : i32 to vector<8x1xi32>
    %385 = arith.cmpi eq, %374, %384 : vector<8x1xi32>
    %386 = vector.extract_strided_slice %0 {offsets = [1, 0], sizes = [1, 12], strides = [1, 1]} : vector<12x12xf32> to vector<1x12xf32>
    %387 = vector.shape_cast %385 : vector<8x1xi1> to vector<8x1xi1>
    %388 = vector.broadcast %387 : vector<8x1xi1> to vector<8x12xi1>
    %389 = vector.shape_cast %386 : vector<1x12xf32> to vector<1x12xf32>
    %390 = vector.broadcast %389 : vector<1x12xf32> to vector<8x12xf32>
    %391 = arith.select %388, %390, %383 : vector<8x12xi1>, vector<8x12xf32>
    %c2_i32_55 = arith.constant 2 : i32
    %392 = vector.broadcast %c2_i32_55 : i32 to vector<8x1xi32>
    %393 = arith.cmpi eq, %374, %392 : vector<8x1xi32>
    %394 = vector.extract_strided_slice %0 {offsets = [2, 0], sizes = [1, 12], strides = [1, 1]} : vector<12x12xf32> to vector<1x12xf32>
    %395 = vector.shape_cast %393 : vector<8x1xi1> to vector<8x1xi1>
    %396 = vector.broadcast %395 : vector<8x1xi1> to vector<8x12xi1>
    %397 = vector.shape_cast %394 : vector<1x12xf32> to vector<1x12xf32>
    %398 = vector.broadcast %397 : vector<1x12xf32> to vector<8x12xf32>
    %399 = arith.select %396, %398, %391 : vector<8x12xi1>, vector<8x12xf32>
    %c3_i32_56 = arith.constant 3 : i32
    %400 = vector.broadcast %c3_i32_56 : i32 to vector<8x1xi32>
    %401 = arith.cmpi eq, %374, %400 : vector<8x1xi32>
    %402 = vector.extract_strided_slice %0 {offsets = [3, 0], sizes = [1, 12], strides = [1, 1]} : vector<12x12xf32> to vector<1x12xf32>
    %403 = vector.shape_cast %401 : vector<8x1xi1> to vector<8x1xi1>
    %404 = vector.broadcast %403 : vector<8x1xi1> to vector<8x12xi1>
    %405 = vector.shape_cast %402 : vector<1x12xf32> to vector<1x12xf32>
    %406 = vector.broadcast %405 : vector<1x12xf32> to vector<8x12xf32>
    %407 = arith.select %404, %406, %399 : vector<8x12xi1>, vector<8x12xf32>
    %c4_i32_57 = arith.constant 4 : i32
    %408 = vector.broadcast %c4_i32_57 : i32 to vector<8x1xi32>
    %409 = arith.cmpi eq, %374, %408 : vector<8x1xi32>
    %410 = vector.extract_strided_slice %0 {offsets = [4, 0], sizes = [1, 12], strides = [1, 1]} : vector<12x12xf32> to vector<1x12xf32>
    %411 = vector.shape_cast %409 : vector<8x1xi1> to vector<8x1xi1>
    %412 = vector.broadcast %411 : vector<8x1xi1> to vector<8x12xi1>
    %413 = vector.shape_cast %410 : vector<1x12xf32> to vector<1x12xf32>
    %414 = vector.broadcast %413 : vector<1x12xf32> to vector<8x12xf32>
    %415 = arith.select %412, %414, %407 : vector<8x12xi1>, vector<8x12xf32>
    %c5_i32_58 = arith.constant 5 : i32
    %416 = vector.broadcast %c5_i32_58 : i32 to vector<8x1xi32>
    %417 = arith.cmpi eq, %374, %416 : vector<8x1xi32>
    %418 = vector.extract_strided_slice %0 {offsets = [5, 0], sizes = [1, 12], strides = [1, 1]} : vector<12x12xf32> to vector<1x12xf32>
    %419 = vector.shape_cast %417 : vector<8x1xi1> to vector<8x1xi1>
    %420 = vector.broadcast %419 : vector<8x1xi1> to vector<8x12xi1>
    %421 = vector.shape_cast %418 : vector<1x12xf32> to vector<1x12xf32>
    %422 = vector.broadcast %421 : vector<1x12xf32> to vector<8x12xf32>
    %423 = arith.select %420, %422, %415 : vector<8x12xi1>, vector<8x12xf32>
    %c6_i32_59 = arith.constant 6 : i32
    %424 = vector.broadcast %c6_i32_59 : i32 to vector<8x1xi32>
    %425 = arith.cmpi eq, %374, %424 : vector<8x1xi32>
    %426 = vector.extract_strided_slice %0 {offsets = [6, 0], sizes = [1, 12], strides = [1, 1]} : vector<12x12xf32> to vector<1x12xf32>
    %427 = vector.shape_cast %425 : vector<8x1xi1> to vector<8x1xi1>
    %428 = vector.broadcast %427 : vector<8x1xi1> to vector<8x12xi1>
    %429 = vector.shape_cast %426 : vector<1x12xf32> to vector<1x12xf32>
    %430 = vector.broadcast %429 : vector<1x12xf32> to vector<8x12xf32>
    %431 = arith.select %428, %430, %423 : vector<8x12xi1>, vector<8x12xf32>
    %c7_i32_60 = arith.constant 7 : i32
    %432 = vector.broadcast %c7_i32_60 : i32 to vector<8x1xi32>
    %433 = arith.cmpi eq, %374, %432 : vector<8x1xi32>
    %434 = vector.extract_strided_slice %0 {offsets = [7, 0], sizes = [1, 12], strides = [1, 1]} : vector<12x12xf32> to vector<1x12xf32>
    %435 = vector.shape_cast %433 : vector<8x1xi1> to vector<8x1xi1>
    %436 = vector.broadcast %435 : vector<8x1xi1> to vector<8x12xi1>
    %437 = vector.shape_cast %434 : vector<1x12xf32> to vector<1x12xf32>
    %438 = vector.broadcast %437 : vector<1x12xf32> to vector<8x12xf32>
    %439 = arith.select %436, %438, %431 : vector<8x12xi1>, vector<8x12xf32>
    %c8_i32_61 = arith.constant 8 : i32
    %440 = vector.broadcast %c8_i32_61 : i32 to vector<8x1xi32>
    %441 = arith.cmpi eq, %374, %440 : vector<8x1xi32>
    %442 = vector.extract_strided_slice %0 {offsets = [8, 0], sizes = [1, 12], strides = [1, 1]} : vector<12x12xf32> to vector<1x12xf32>
    %443 = vector.shape_cast %441 : vector<8x1xi1> to vector<8x1xi1>
    %444 = vector.broadcast %443 : vector<8x1xi1> to vector<8x12xi1>
    %445 = vector.shape_cast %442 : vector<1x12xf32> to vector<1x12xf32>
    %446 = vector.broadcast %445 : vector<1x12xf32> to vector<8x12xf32>
    %447 = arith.select %444, %446, %439 : vector<8x12xi1>, vector<8x12xf32>
    %c9_i32_62 = arith.constant 9 : i32
    %448 = vector.broadcast %c9_i32_62 : i32 to vector<8x1xi32>
    %449 = arith.cmpi eq, %374, %448 : vector<8x1xi32>
    %450 = vector.extract_strided_slice %0 {offsets = [9, 0], sizes = [1, 12], strides = [1, 1]} : vector<12x12xf32> to vector<1x12xf32>
    %451 = vector.shape_cast %449 : vector<8x1xi1> to vector<8x1xi1>
    %452 = vector.broadcast %451 : vector<8x1xi1> to vector<8x12xi1>
    %453 = vector.shape_cast %450 : vector<1x12xf32> to vector<1x12xf32>
    %454 = vector.broadcast %453 : vector<1x12xf32> to vector<8x12xf32>
    %455 = arith.select %452, %454, %447 : vector<8x12xi1>, vector<8x12xf32>
    %c10_i32_63 = arith.constant 10 : i32
    %456 = vector.broadcast %c10_i32_63 : i32 to vector<8x1xi32>
    %457 = arith.cmpi eq, %374, %456 : vector<8x1xi32>
    %458 = vector.extract_strided_slice %0 {offsets = [10, 0], sizes = [1, 12], strides = [1, 1]} : vector<12x12xf32> to vector<1x12xf32>
    %459 = vector.shape_cast %457 : vector<8x1xi1> to vector<8x1xi1>
    %460 = vector.broadcast %459 : vector<8x1xi1> to vector<8x12xi1>
    %461 = vector.shape_cast %458 : vector<1x12xf32> to vector<1x12xf32>
    %462 = vector.broadcast %461 : vector<1x12xf32> to vector<8x12xf32>
    %463 = arith.select %460, %462, %455 : vector<8x12xi1>, vector<8x12xf32>
    %c11_i32_64 = arith.constant 11 : i32
    %464 = vector.broadcast %c11_i32_64 : i32 to vector<8x1xi32>
    %465 = arith.cmpi eq, %374, %464 : vector<8x1xi32>
    %466 = vector.extract_strided_slice %0 {offsets = [11, 0], sizes = [1, 12], strides = [1, 1]} : vector<12x12xf32> to vector<1x12xf32>
    %467 = vector.shape_cast %465 : vector<8x1xi1> to vector<8x1xi1>
    %468 = vector.broadcast %467 : vector<8x1xi1> to vector<8x12xi1>
    %469 = vector.shape_cast %466 : vector<1x12xf32> to vector<1x12xf32>
    %470 = vector.broadcast %469 : vector<1x12xf32> to vector<8x12xf32>
    %471 = arith.select %468, %470, %463 : vector<8x12xi1>, vector<8x12xf32>
    %c4 = arith.constant 4 : index
    %c0_65 = arith.constant 0 : index
    %c0_66 = arith.constant 0 : index
    %472 = vector.load %arg2[%c4, %c0_65, %c0_66] : memref<12x8x12xf32, #tpu.memory_space<vmem>>, vector<1x8x12xf32>
    %473 = vector.shape_cast %472 : vector<1x8x12xf32> to vector<8x12xf32>
    %474 = arith.addf %471, %473 : vector<8x12xf32>
    %475 = tpu.iota {dimensions = array<i32: 1>} : vector<8x12xi32>
    %cst_67 = arith.constant dense<0xFF800000> : vector<8xf32>
    %476 = vector.multi_reduction <maximumf>, %474, %cst_67 [1] : vector<8x12xf32> to vector<8xf32>
    %477 = vector.shape_cast %476 : vector<8xf32> to vector<8x1xf32>
    %478 = vector.broadcast %477 : vector<8x1xf32> to vector<8x12xf32>
    %479 = arith.cmpf oeq, %474, %478 : vector<8x12xf32>
    %c12_i32_68 = arith.constant 12 : i32
    %480 = vector.broadcast %c12_i32_68 : i32 to vector<8x12xi32>
    %481 = arith.select %479, %475, %480 : vector<8x12xi1>, vector<8x12xi32>
    %cst_69 = arith.constant dense<2147483647> : vector<8xi32>
    %482 = vector.multi_reduction <minsi>, %481, %cst_69 [1] : vector<8x12xi32> to vector<8xi32>
    %483 = vector.shape_cast %482 : vector<8xi32> to vector<8x1xi32>
    %484 = vector.broadcast %483 : vector<8x1xi32> to vector<8x12xi32>
    %485 = arith.cmpi eq, %475, %484 : vector<8x12xi32>
    %486 = arith.extui %485 : vector<8x12xi1> to vector<8x12xi32>
    %487 = arith.sitofp %486 : vector<8x12xi32> to vector<8x12xf32>
    %c11_i32_70 = arith.constant 11 : i32
    %488 = vector.broadcast %c11_i32_70 : i32 to vector<8x1xi32>
    %489 = arith.cmpi ne, %374, %488 : vector<8x1xi32>
    %490 = vector.shape_cast %489 : vector<8x1xi1> to vector<8x1xi1>
    %491 = vector.broadcast %490 : vector<8x1xi1> to vector<8x12xi1>
    %492 = arith.select %491, %487, %373 : vector<8x12xi1>, vector<8x12xf32>
    %493 = arith.select %489, %483, %374 : vector<8x1xi1>, vector<8x1xi32>
    %cst_71 = arith.constant 0.000000e+00 : f32
    %494 = vector.broadcast %cst_71 : f32 to vector<8x12xf32>
    %c0_i32_72 = arith.constant 0 : i32
    %495 = vector.broadcast %c0_i32_72 : i32 to vector<8x1xi32>
    %496 = arith.cmpi eq, %493, %495 : vector<8x1xi32>
    %497 = vector.extract_strided_slice %0 {offsets = [0, 0], sizes = [1, 12], strides = [1, 1]} : vector<12x12xf32> to vector<1x12xf32>
    %498 = vector.shape_cast %496 : vector<8x1xi1> to vector<8x1xi1>
    %499 = vector.broadcast %498 : vector<8x1xi1> to vector<8x12xi1>
    %500 = vector.shape_cast %497 : vector<1x12xf32> to vector<1x12xf32>
    %501 = vector.broadcast %500 : vector<1x12xf32> to vector<8x12xf32>
    %502 = arith.select %499, %501, %494 : vector<8x12xi1>, vector<8x12xf32>
    %c1_i32_73 = arith.constant 1 : i32
    %503 = vector.broadcast %c1_i32_73 : i32 to vector<8x1xi32>
    %504 = arith.cmpi eq, %493, %503 : vector<8x1xi32>
    %505 = vector.extract_strided_slice %0 {offsets = [1, 0], sizes = [1, 12], strides = [1, 1]} : vector<12x12xf32> to vector<1x12xf32>
    %506 = vector.shape_cast %504 : vector<8x1xi1> to vector<8x1xi1>
    %507 = vector.broadcast %506 : vector<8x1xi1> to vector<8x12xi1>
    %508 = vector.shape_cast %505 : vector<1x12xf32> to vector<1x12xf32>
    %509 = vector.broadcast %508 : vector<1x12xf32> to vector<8x12xf32>
    %510 = arith.select %507, %509, %502 : vector<8x12xi1>, vector<8x12xf32>
    %c2_i32_74 = arith.constant 2 : i32
    %511 = vector.broadcast %c2_i32_74 : i32 to vector<8x1xi32>
    %512 = arith.cmpi eq, %493, %511 : vector<8x1xi32>
    %513 = vector.extract_strided_slice %0 {offsets = [2, 0], sizes = [1, 12], strides = [1, 1]} : vector<12x12xf32> to vector<1x12xf32>
    %514 = vector.shape_cast %512 : vector<8x1xi1> to vector<8x1xi1>
    %515 = vector.broadcast %514 : vector<8x1xi1> to vector<8x12xi1>
    %516 = vector.shape_cast %513 : vector<1x12xf32> to vector<1x12xf32>
    %517 = vector.broadcast %516 : vector<1x12xf32> to vector<8x12xf32>
    %518 = arith.select %515, %517, %510 : vector<8x12xi1>, vector<8x12xf32>
    %c3_i32_75 = arith.constant 3 : i32
    %519 = vector.broadcast %c3_i32_75 : i32 to vector<8x1xi32>
    %520 = arith.cmpi eq, %493, %519 : vector<8x1xi32>
    %521 = vector.extract_strided_slice %0 {offsets = [3, 0], sizes = [1, 12], strides = [1, 1]} : vector<12x12xf32> to vector<1x12xf32>
    %522 = vector.shape_cast %520 : vector<8x1xi1> to vector<8x1xi1>
    %523 = vector.broadcast %522 : vector<8x1xi1> to vector<8x12xi1>
    %524 = vector.shape_cast %521 : vector<1x12xf32> to vector<1x12xf32>
    %525 = vector.broadcast %524 : vector<1x12xf32> to vector<8x12xf32>
    %526 = arith.select %523, %525, %518 : vector<8x12xi1>, vector<8x12xf32>
    %c4_i32_76 = arith.constant 4 : i32
    %527 = vector.broadcast %c4_i32_76 : i32 to vector<8x1xi32>
    %528 = arith.cmpi eq, %493, %527 : vector<8x1xi32>
    %529 = vector.extract_strided_slice %0 {offsets = [4, 0], sizes = [1, 12], strides = [1, 1]} : vector<12x12xf32> to vector<1x12xf32>
    %530 = vector.shape_cast %528 : vector<8x1xi1> to vector<8x1xi1>
    %531 = vector.broadcast %530 : vector<8x1xi1> to vector<8x12xi1>
    %532 = vector.shape_cast %529 : vector<1x12xf32> to vector<1x12xf32>
    %533 = vector.broadcast %532 : vector<1x12xf32> to vector<8x12xf32>
    %534 = arith.select %531, %533, %526 : vector<8x12xi1>, vector<8x12xf32>
    %c5_i32_77 = arith.constant 5 : i32
    %535 = vector.broadcast %c5_i32_77 : i32 to vector<8x1xi32>
    %536 = arith.cmpi eq, %493, %535 : vector<8x1xi32>
    %537 = vector.extract_strided_slice %0 {offsets = [5, 0], sizes = [1, 12], strides = [1, 1]} : vector<12x12xf32> to vector<1x12xf32>
    %538 = vector.shape_cast %536 : vector<8x1xi1> to vector<8x1xi1>
    %539 = vector.broadcast %538 : vector<8x1xi1> to vector<8x12xi1>
    %540 = vector.shape_cast %537 : vector<1x12xf32> to vector<1x12xf32>
    %541 = vector.broadcast %540 : vector<1x12xf32> to vector<8x12xf32>
    %542 = arith.select %539, %541, %534 : vector<8x12xi1>, vector<8x12xf32>
    %c6_i32_78 = arith.constant 6 : i32
    %543 = vector.broadcast %c6_i32_78 : i32 to vector<8x1xi32>
    %544 = arith.cmpi eq, %493, %543 : vector<8x1xi32>
    %545 = vector.extract_strided_slice %0 {offsets = [6, 0], sizes = [1, 12], strides = [1, 1]} : vector<12x12xf32> to vector<1x12xf32>
    %546 = vector.shape_cast %544 : vector<8x1xi1> to vector<8x1xi1>
    %547 = vector.broadcast %546 : vector<8x1xi1> to vector<8x12xi1>
    %548 = vector.shape_cast %545 : vector<1x12xf32> to vector<1x12xf32>
    %549 = vector.broadcast %548 : vector<1x12xf32> to vector<8x12xf32>
    %550 = arith.select %547, %549, %542 : vector<8x12xi1>, vector<8x12xf32>
    %c7_i32_79 = arith.constant 7 : i32
    %551 = vector.broadcast %c7_i32_79 : i32 to vector<8x1xi32>
    %552 = arith.cmpi eq, %493, %551 : vector<8x1xi32>
    %553 = vector.extract_strided_slice %0 {offsets = [7, 0], sizes = [1, 12], strides = [1, 1]} : vector<12x12xf32> to vector<1x12xf32>
    %554 = vector.shape_cast %552 : vector<8x1xi1> to vector<8x1xi1>
    %555 = vector.broadcast %554 : vector<8x1xi1> to vector<8x12xi1>
    %556 = vector.shape_cast %553 : vector<1x12xf32> to vector<1x12xf32>
    %557 = vector.broadcast %556 : vector<1x12xf32> to vector<8x12xf32>
    %558 = arith.select %555, %557, %550 : vector<8x12xi1>, vector<8x12xf32>
    %c8_i32_80 = arith.constant 8 : i32
    %559 = vector.broadcast %c8_i32_80 : i32 to vector<8x1xi32>
    %560 = arith.cmpi eq, %493, %559 : vector<8x1xi32>
    %561 = vector.extract_strided_slice %0 {offsets = [8, 0], sizes = [1, 12], strides = [1, 1]} : vector<12x12xf32> to vector<1x12xf32>
    %562 = vector.shape_cast %560 : vector<8x1xi1> to vector<8x1xi1>
    %563 = vector.broadcast %562 : vector<8x1xi1> to vector<8x12xi1>
    %564 = vector.shape_cast %561 : vector<1x12xf32> to vector<1x12xf32>
    %565 = vector.broadcast %564 : vector<1x12xf32> to vector<8x12xf32>
    %566 = arith.select %563, %565, %558 : vector<8x12xi1>, vector<8x12xf32>
    %c9_i32_81 = arith.constant 9 : i32
    %567 = vector.broadcast %c9_i32_81 : i32 to vector<8x1xi32>
    %568 = arith.cmpi eq, %493, %567 : vector<8x1xi32>
    %569 = vector.extract_strided_slice %0 {offsets = [9, 0], sizes = [1, 12], strides = [1, 1]} : vector<12x12xf32> to vector<1x12xf32>
    %570 = vector.shape_cast %568 : vector<8x1xi1> to vector<8x1xi1>
    %571 = vector.broadcast %570 : vector<8x1xi1> to vector<8x12xi1>
    %572 = vector.shape_cast %569 : vector<1x12xf32> to vector<1x12xf32>
    %573 = vector.broadcast %572 : vector<1x12xf32> to vector<8x12xf32>
    %574 = arith.select %571, %573, %566 : vector<8x12xi1>, vector<8x12xf32>
    %c10_i32_82 = arith.constant 10 : i32
    %575 = vector.broadcast %c10_i32_82 : i32 to vector<8x1xi32>
    %576 = arith.cmpi eq, %493, %575 : vector<8x1xi32>
    %577 = vector.extract_strided_slice %0 {offsets = [10, 0], sizes = [1, 12], strides = [1, 1]} : vector<12x12xf32> to vector<1x12xf32>
    %578 = vector.shape_cast %576 : vector<8x1xi1> to vector<8x1xi1>
    %579 = vector.broadcast %578 : vector<8x1xi1> to vector<8x12xi1>
    %580 = vector.shape_cast %577 : vector<1x12xf32> to vector<1x12xf32>
    %581 = vector.broadcast %580 : vector<1x12xf32> to vector<8x12xf32>
    %582 = arith.select %579, %581, %574 : vector<8x12xi1>, vector<8x12xf32>
    %c11_i32_83 = arith.constant 11 : i32
    %583 = vector.broadcast %c11_i32_83 : i32 to vector<8x1xi32>
    %584 = arith.cmpi eq, %493, %583 : vector<8x1xi32>
    %585 = vector.extract_strided_slice %0 {offsets = [11, 0], sizes = [1, 12], strides = [1, 1]} : vector<12x12xf32> to vector<1x12xf32>
    %586 = vector.shape_cast %584 : vector<8x1xi1> to vector<8x1xi1>
    %587 = vector.broadcast %586 : vector<8x1xi1> to vector<8x12xi1>
    %588 = vector.shape_cast %585 : vector<1x12xf32> to vector<1x12xf32>
    %589 = vector.broadcast %588 : vector<1x12xf32> to vector<8x12xf32>
    %590 = arith.select %587, %589, %582 : vector<8x12xi1>, vector<8x12xf32>
    %c5 = arith.constant 5 : index
    %c0_84 = arith.constant 0 : index
    %c0_85 = arith.constant 0 : index
    %591 = vector.load %arg2[%c5, %c0_84, %c0_85] : memref<12x8x12xf32, #tpu.memory_space<vmem>>, vector<1x8x12xf32>
    %592 = vector.shape_cast %591 : vector<1x8x12xf32> to vector<8x12xf32>
    %593 = arith.addf %590, %592 : vector<8x12xf32>
    %594 = tpu.iota {dimensions = array<i32: 1>} : vector<8x12xi32>
    %cst_86 = arith.constant dense<0xFF800000> : vector<8xf32>
    %595 = vector.multi_reduction <maximumf>, %593, %cst_86 [1] : vector<8x12xf32> to vector<8xf32>
    %596 = vector.shape_cast %595 : vector<8xf32> to vector<8x1xf32>
    %597 = vector.broadcast %596 : vector<8x1xf32> to vector<8x12xf32>
    %598 = arith.cmpf oeq, %593, %597 : vector<8x12xf32>
    %c12_i32_87 = arith.constant 12 : i32
    %599 = vector.broadcast %c12_i32_87 : i32 to vector<8x12xi32>
    %600 = arith.select %598, %594, %599 : vector<8x12xi1>, vector<8x12xi32>
    %cst_88 = arith.constant dense<2147483647> : vector<8xi32>
    %601 = vector.multi_reduction <minsi>, %600, %cst_88 [1] : vector<8x12xi32> to vector<8xi32>
    %602 = vector.shape_cast %601 : vector<8xi32> to vector<8x1xi32>
    %603 = vector.broadcast %602 : vector<8x1xi32> to vector<8x12xi32>
    %604 = arith.cmpi eq, %594, %603 : vector<8x12xi32>
    %605 = arith.extui %604 : vector<8x12xi1> to vector<8x12xi32>
    %606 = arith.sitofp %605 : vector<8x12xi32> to vector<8x12xf32>
    %c11_i32_89 = arith.constant 11 : i32
    %607 = vector.broadcast %c11_i32_89 : i32 to vector<8x1xi32>
    %608 = arith.cmpi ne, %493, %607 : vector<8x1xi32>
    %609 = vector.shape_cast %608 : vector<8x1xi1> to vector<8x1xi1>
    %610 = vector.broadcast %609 : vector<8x1xi1> to vector<8x12xi1>
    %611 = arith.select %610, %606, %492 : vector<8x12xi1>, vector<8x12xf32>
    %612 = arith.select %608, %602, %493 : vector<8x1xi1>, vector<8x1xi32>
    %cst_90 = arith.constant 0.000000e+00 : f32
    %613 = vector.broadcast %cst_90 : f32 to vector<8x12xf32>
    %c0_i32_91 = arith.constant 0 : i32
    %614 = vector.broadcast %c0_i32_91 : i32 to vector<8x1xi32>
    %615 = arith.cmpi eq, %612, %614 : vector<8x1xi32>
    %616 = vector.extract_strided_slice %0 {offsets = [0, 0], sizes = [1, 12], strides = [1, 1]} : vector<12x12xf32> to vector<1x12xf32>
    %617 = vector.shape_cast %615 : vector<8x1xi1> to vector<8x1xi1>
    %618 = vector.broadcast %617 : vector<8x1xi1> to vector<8x12xi1>
    %619 = vector.shape_cast %616 : vector<1x12xf32> to vector<1x12xf32>
    %620 = vector.broadcast %619 : vector<1x12xf32> to vector<8x12xf32>
    %621 = arith.select %618, %620, %613 : vector<8x12xi1>, vector<8x12xf32>
    %c1_i32_92 = arith.constant 1 : i32
    %622 = vector.broadcast %c1_i32_92 : i32 to vector<8x1xi32>
    %623 = arith.cmpi eq, %612, %622 : vector<8x1xi32>
    %624 = vector.extract_strided_slice %0 {offsets = [1, 0], sizes = [1, 12], strides = [1, 1]} : vector<12x12xf32> to vector<1x12xf32>
    %625 = vector.shape_cast %623 : vector<8x1xi1> to vector<8x1xi1>
    %626 = vector.broadcast %625 : vector<8x1xi1> to vector<8x12xi1>
    %627 = vector.shape_cast %624 : vector<1x12xf32> to vector<1x12xf32>
    %628 = vector.broadcast %627 : vector<1x12xf32> to vector<8x12xf32>
    %629 = arith.select %626, %628, %621 : vector<8x12xi1>, vector<8x12xf32>
    %c2_i32_93 = arith.constant 2 : i32
    %630 = vector.broadcast %c2_i32_93 : i32 to vector<8x1xi32>
    %631 = arith.cmpi eq, %612, %630 : vector<8x1xi32>
    %632 = vector.extract_strided_slice %0 {offsets = [2, 0], sizes = [1, 12], strides = [1, 1]} : vector<12x12xf32> to vector<1x12xf32>
    %633 = vector.shape_cast %631 : vector<8x1xi1> to vector<8x1xi1>
    %634 = vector.broadcast %633 : vector<8x1xi1> to vector<8x12xi1>
    %635 = vector.shape_cast %632 : vector<1x12xf32> to vector<1x12xf32>
    %636 = vector.broadcast %635 : vector<1x12xf32> to vector<8x12xf32>
    %637 = arith.select %634, %636, %629 : vector<8x12xi1>, vector<8x12xf32>
    %c3_i32_94 = arith.constant 3 : i32
    %638 = vector.broadcast %c3_i32_94 : i32 to vector<8x1xi32>
    %639 = arith.cmpi eq, %612, %638 : vector<8x1xi32>
    %640 = vector.extract_strided_slice %0 {offsets = [3, 0], sizes = [1, 12], strides = [1, 1]} : vector<12x12xf32> to vector<1x12xf32>
    %641 = vector.shape_cast %639 : vector<8x1xi1> to vector<8x1xi1>
    %642 = vector.broadcast %641 : vector<8x1xi1> to vector<8x12xi1>
    %643 = vector.shape_cast %640 : vector<1x12xf32> to vector<1x12xf32>
    %644 = vector.broadcast %643 : vector<1x12xf32> to vector<8x12xf32>
    %645 = arith.select %642, %644, %637 : vector<8x12xi1>, vector<8x12xf32>
    %c4_i32_95 = arith.constant 4 : i32
    %646 = vector.broadcast %c4_i32_95 : i32 to vector<8x1xi32>
    %647 = arith.cmpi eq, %612, %646 : vector<8x1xi32>
    %648 = vector.extract_strided_slice %0 {offsets = [4, 0], sizes = [1, 12], strides = [1, 1]} : vector<12x12xf32> to vector<1x12xf32>
    %649 = vector.shape_cast %647 : vector<8x1xi1> to vector<8x1xi1>
    %650 = vector.broadcast %649 : vector<8x1xi1> to vector<8x12xi1>
    %651 = vector.shape_cast %648 : vector<1x12xf32> to vector<1x12xf32>
    %652 = vector.broadcast %651 : vector<1x12xf32> to vector<8x12xf32>
    %653 = arith.select %650, %652, %645 : vector<8x12xi1>, vector<8x12xf32>
    %c5_i32_96 = arith.constant 5 : i32
    %654 = vector.broadcast %c5_i32_96 : i32 to vector<8x1xi32>
    %655 = arith.cmpi eq, %612, %654 : vector<8x1xi32>
    %656 = vector.extract_strided_slice %0 {offsets = [5, 0], sizes = [1, 12], strides = [1, 1]} : vector<12x12xf32> to vector<1x12xf32>
    %657 = vector.shape_cast %655 : vector<8x1xi1> to vector<8x1xi1>
    %658 = vector.broadcast %657 : vector<8x1xi1> to vector<8x12xi1>
    %659 = vector.shape_cast %656 : vector<1x12xf32> to vector<1x12xf32>
    %660 = vector.broadcast %659 : vector<1x12xf32> to vector<8x12xf32>
    %661 = arith.select %658, %660, %653 : vector<8x12xi1>, vector<8x12xf32>
    %c6_i32_97 = arith.constant 6 : i32
    %662 = vector.broadcast %c6_i32_97 : i32 to vector<8x1xi32>
    %663 = arith.cmpi eq, %612, %662 : vector<8x1xi32>
    %664 = vector.extract_strided_slice %0 {offsets = [6, 0], sizes = [1, 12], strides = [1, 1]} : vector<12x12xf32> to vector<1x12xf32>
    %665 = vector.shape_cast %663 : vector<8x1xi1> to vector<8x1xi1>
    %666 = vector.broadcast %665 : vector<8x1xi1> to vector<8x12xi1>
    %667 = vector.shape_cast %664 : vector<1x12xf32> to vector<1x12xf32>
    %668 = vector.broadcast %667 : vector<1x12xf32> to vector<8x12xf32>
    %669 = arith.select %666, %668, %661 : vector<8x12xi1>, vector<8x12xf32>
    %c7_i32_98 = arith.constant 7 : i32
    %670 = vector.broadcast %c7_i32_98 : i32 to vector<8x1xi32>
    %671 = arith.cmpi eq, %612, %670 : vector<8x1xi32>
    %672 = vector.extract_strided_slice %0 {offsets = [7, 0], sizes = [1, 12], strides = [1, 1]} : vector<12x12xf32> to vector<1x12xf32>
    %673 = vector.shape_cast %671 : vector<8x1xi1> to vector<8x1xi1>
    %674 = vector.broadcast %673 : vector<8x1xi1> to vector<8x12xi1>
    %675 = vector.shape_cast %672 : vector<1x12xf32> to vector<1x12xf32>
    %676 = vector.broadcast %675 : vector<1x12xf32> to vector<8x12xf32>
    %677 = arith.select %674, %676, %669 : vector<8x12xi1>, vector<8x12xf32>
    %c8_i32_99 = arith.constant 8 : i32
    %678 = vector.broadcast %c8_i32_99 : i32 to vector<8x1xi32>
    %679 = arith.cmpi eq, %612, %678 : vector<8x1xi32>
    %680 = vector.extract_strided_slice %0 {offsets = [8, 0], sizes = [1, 12], strides = [1, 1]} : vector<12x12xf32> to vector<1x12xf32>
    %681 = vector.shape_cast %679 : vector<8x1xi1> to vector<8x1xi1>
    %682 = vector.broadcast %681 : vector<8x1xi1> to vector<8x12xi1>
    %683 = vector.shape_cast %680 : vector<1x12xf32> to vector<1x12xf32>
    %684 = vector.broadcast %683 : vector<1x12xf32> to vector<8x12xf32>
    %685 = arith.select %682, %684, %677 : vector<8x12xi1>, vector<8x12xf32>
    %c9_i32_100 = arith.constant 9 : i32
    %686 = vector.broadcast %c9_i32_100 : i32 to vector<8x1xi32>
    %687 = arith.cmpi eq, %612, %686 : vector<8x1xi32>
    %688 = vector.extract_strided_slice %0 {offsets = [9, 0], sizes = [1, 12], strides = [1, 1]} : vector<12x12xf32> to vector<1x12xf32>
    %689 = vector.shape_cast %687 : vector<8x1xi1> to vector<8x1xi1>
    %690 = vector.broadcast %689 : vector<8x1xi1> to vector<8x12xi1>
    %691 = vector.shape_cast %688 : vector<1x12xf32> to vector<1x12xf32>
    %692 = vector.broadcast %691 : vector<1x12xf32> to vector<8x12xf32>
    %693 = arith.select %690, %692, %685 : vector<8x12xi1>, vector<8x12xf32>
    %c10_i32_101 = arith.constant 10 : i32
    %694 = vector.broadcast %c10_i32_101 : i32 to vector<8x1xi32>
    %695 = arith.cmpi eq, %612, %694 : vector<8x1xi32>
    %696 = vector.extract_strided_slice %0 {offsets = [10, 0], sizes = [1, 12], strides = [1, 1]} : vector<12x12xf32> to vector<1x12xf32>
    %697 = vector.shape_cast %695 : vector<8x1xi1> to vector<8x1xi1>
    %698 = vector.broadcast %697 : vector<8x1xi1> to vector<8x12xi1>
    %699 = vector.shape_cast %696 : vector<1x12xf32> to vector<1x12xf32>
    %700 = vector.broadcast %699 : vector<1x12xf32> to vector<8x12xf32>
    %701 = arith.select %698, %700, %693 : vector<8x12xi1>, vector<8x12xf32>
    %c11_i32_102 = arith.constant 11 : i32
    %702 = vector.broadcast %c11_i32_102 : i32 to vector<8x1xi32>
    %703 = arith.cmpi eq, %612, %702 : vector<8x1xi32>
    %704 = vector.extract_strided_slice %0 {offsets = [11, 0], sizes = [1, 12], strides = [1, 1]} : vector<12x12xf32> to vector<1x12xf32>
    %705 = vector.shape_cast %703 : vector<8x1xi1> to vector<8x1xi1>
    %706 = vector.broadcast %705 : vector<8x1xi1> to vector<8x12xi1>
    %707 = vector.shape_cast %704 : vector<1x12xf32> to vector<1x12xf32>
    %708 = vector.broadcast %707 : vector<1x12xf32> to vector<8x12xf32>
    %709 = arith.select %706, %708, %701 : vector<8x12xi1>, vector<8x12xf32>
    %c6 = arith.constant 6 : index
    %c0_103 = arith.constant 0 : index
    %c0_104 = arith.constant 0 : index
    %710 = vector.load %arg2[%c6, %c0_103, %c0_104] : memref<12x8x12xf32, #tpu.memory_space<vmem>>, vector<1x8x12xf32>
    %711 = vector.shape_cast %710 : vector<1x8x12xf32> to vector<8x12xf32>
    %712 = arith.addf %709, %711 : vector<8x12xf32>
    %713 = tpu.iota {dimensions = array<i32: 1>} : vector<8x12xi32>
    %cst_105 = arith.constant dense<0xFF800000> : vector<8xf32>
    %714 = vector.multi_reduction <maximumf>, %712, %cst_105 [1] : vector<8x12xf32> to vector<8xf32>
    %715 = vector.shape_cast %714 : vector<8xf32> to vector<8x1xf32>
    %716 = vector.broadcast %715 : vector<8x1xf32> to vector<8x12xf32>
    %717 = arith.cmpf oeq, %712, %716 : vector<8x12xf32>
    %c12_i32_106 = arith.constant 12 : i32
    %718 = vector.broadcast %c12_i32_106 : i32 to vector<8x12xi32>
    %719 = arith.select %717, %713, %718 : vector<8x12xi1>, vector<8x12xi32>
    %cst_107 = arith.constant dense<2147483647> : vector<8xi32>
    %720 = vector.multi_reduction <minsi>, %719, %cst_107 [1] : vector<8x12xi32> to vector<8xi32>
    %721 = vector.shape_cast %720 : vector<8xi32> to vector<8x1xi32>
    %722 = vector.broadcast %721 : vector<8x1xi32> to vector<8x12xi32>
    %723 = arith.cmpi eq, %713, %722 : vector<8x12xi32>
    %724 = arith.extui %723 : vector<8x12xi1> to vector<8x12xi32>
    %725 = arith.sitofp %724 : vector<8x12xi32> to vector<8x12xf32>
    %c11_i32_108 = arith.constant 11 : i32
    %726 = vector.broadcast %c11_i32_108 : i32 to vector<8x1xi32>
    %727 = arith.cmpi ne, %612, %726 : vector<8x1xi32>
    %728 = vector.shape_cast %727 : vector<8x1xi1> to vector<8x1xi1>
    %729 = vector.broadcast %728 : vector<8x1xi1> to vector<8x12xi1>
    %730 = arith.select %729, %725, %611 : vector<8x12xi1>, vector<8x12xf32>
    %731 = arith.select %727, %721, %612 : vector<8x1xi1>, vector<8x1xi32>
    %cst_109 = arith.constant 0.000000e+00 : f32
    %732 = vector.broadcast %cst_109 : f32 to vector<8x12xf32>
    %c0_i32_110 = arith.constant 0 : i32
    %733 = vector.broadcast %c0_i32_110 : i32 to vector<8x1xi32>
    %734 = arith.cmpi eq, %731, %733 : vector<8x1xi32>
    %735 = vector.extract_strided_slice %0 {offsets = [0, 0], sizes = [1, 12], strides = [1, 1]} : vector<12x12xf32> to vector<1x12xf32>
    %736 = vector.shape_cast %734 : vector<8x1xi1> to vector<8x1xi1>
    %737 = vector.broadcast %736 : vector<8x1xi1> to vector<8x12xi1>
    %738 = vector.shape_cast %735 : vector<1x12xf32> to vector<1x12xf32>
    %739 = vector.broadcast %738 : vector<1x12xf32> to vector<8x12xf32>
    %740 = arith.select %737, %739, %732 : vector<8x12xi1>, vector<8x12xf32>
    %c1_i32_111 = arith.constant 1 : i32
    %741 = vector.broadcast %c1_i32_111 : i32 to vector<8x1xi32>
    %742 = arith.cmpi eq, %731, %741 : vector<8x1xi32>
    %743 = vector.extract_strided_slice %0 {offsets = [1, 0], sizes = [1, 12], strides = [1, 1]} : vector<12x12xf32> to vector<1x12xf32>
    %744 = vector.shape_cast %742 : vector<8x1xi1> to vector<8x1xi1>
    %745 = vector.broadcast %744 : vector<8x1xi1> to vector<8x12xi1>
    %746 = vector.shape_cast %743 : vector<1x12xf32> to vector<1x12xf32>
    %747 = vector.broadcast %746 : vector<1x12xf32> to vector<8x12xf32>
    %748 = arith.select %745, %747, %740 : vector<8x12xi1>, vector<8x12xf32>
    %c2_i32_112 = arith.constant 2 : i32
    %749 = vector.broadcast %c2_i32_112 : i32 to vector<8x1xi32>
    %750 = arith.cmpi eq, %731, %749 : vector<8x1xi32>
    %751 = vector.extract_strided_slice %0 {offsets = [2, 0], sizes = [1, 12], strides = [1, 1]} : vector<12x12xf32> to vector<1x12xf32>
    %752 = vector.shape_cast %750 : vector<8x1xi1> to vector<8x1xi1>
    %753 = vector.broadcast %752 : vector<8x1xi1> to vector<8x12xi1>
    %754 = vector.shape_cast %751 : vector<1x12xf32> to vector<1x12xf32>
    %755 = vector.broadcast %754 : vector<1x12xf32> to vector<8x12xf32>
    %756 = arith.select %753, %755, %748 : vector<8x12xi1>, vector<8x12xf32>
    %c3_i32_113 = arith.constant 3 : i32
    %757 = vector.broadcast %c3_i32_113 : i32 to vector<8x1xi32>
    %758 = arith.cmpi eq, %731, %757 : vector<8x1xi32>
    %759 = vector.extract_strided_slice %0 {offsets = [3, 0], sizes = [1, 12], strides = [1, 1]} : vector<12x12xf32> to vector<1x12xf32>
    %760 = vector.shape_cast %758 : vector<8x1xi1> to vector<8x1xi1>
    %761 = vector.broadcast %760 : vector<8x1xi1> to vector<8x12xi1>
    %762 = vector.shape_cast %759 : vector<1x12xf32> to vector<1x12xf32>
    %763 = vector.broadcast %762 : vector<1x12xf32> to vector<8x12xf32>
    %764 = arith.select %761, %763, %756 : vector<8x12xi1>, vector<8x12xf32>
    %c4_i32_114 = arith.constant 4 : i32
    %765 = vector.broadcast %c4_i32_114 : i32 to vector<8x1xi32>
    %766 = arith.cmpi eq, %731, %765 : vector<8x1xi32>
    %767 = vector.extract_strided_slice %0 {offsets = [4, 0], sizes = [1, 12], strides = [1, 1]} : vector<12x12xf32> to vector<1x12xf32>
    %768 = vector.shape_cast %766 : vector<8x1xi1> to vector<8x1xi1>
    %769 = vector.broadcast %768 : vector<8x1xi1> to vector<8x12xi1>
    %770 = vector.shape_cast %767 : vector<1x12xf32> to vector<1x12xf32>
    %771 = vector.broadcast %770 : vector<1x12xf32> to vector<8x12xf32>
    %772 = arith.select %769, %771, %764 : vector<8x12xi1>, vector<8x12xf32>
    %c5_i32_115 = arith.constant 5 : i32
    %773 = vector.broadcast %c5_i32_115 : i32 to vector<8x1xi32>
    %774 = arith.cmpi eq, %731, %773 : vector<8x1xi32>
    %775 = vector.extract_strided_slice %0 {offsets = [5, 0], sizes = [1, 12], strides = [1, 1]} : vector<12x12xf32> to vector<1x12xf32>
    %776 = vector.shape_cast %774 : vector<8x1xi1> to vector<8x1xi1>
    %777 = vector.broadcast %776 : vector<8x1xi1> to vector<8x12xi1>
    %778 = vector.shape_cast %775 : vector<1x12xf32> to vector<1x12xf32>
    %779 = vector.broadcast %778 : vector<1x12xf32> to vector<8x12xf32>
    %780 = arith.select %777, %779, %772 : vector<8x12xi1>, vector<8x12xf32>
    %c6_i32_116 = arith.constant 6 : i32
    %781 = vector.broadcast %c6_i32_116 : i32 to vector<8x1xi32>
    %782 = arith.cmpi eq, %731, %781 : vector<8x1xi32>
    %783 = vector.extract_strided_slice %0 {offsets = [6, 0], sizes = [1, 12], strides = [1, 1]} : vector<12x12xf32> to vector<1x12xf32>
    %784 = vector.shape_cast %782 : vector<8x1xi1> to vector<8x1xi1>
    %785 = vector.broadcast %784 : vector<8x1xi1> to vector<8x12xi1>
    %786 = vector.shape_cast %783 : vector<1x12xf32> to vector<1x12xf32>
    %787 = vector.broadcast %786 : vector<1x12xf32> to vector<8x12xf32>
    %788 = arith.select %785, %787, %780 : vector<8x12xi1>, vector<8x12xf32>
    %c7_i32_117 = arith.constant 7 : i32
    %789 = vector.broadcast %c7_i32_117 : i32 to vector<8x1xi32>
    %790 = arith.cmpi eq, %731, %789 : vector<8x1xi32>
    %791 = vector.extract_strided_slice %0 {offsets = [7, 0], sizes = [1, 12], strides = [1, 1]} : vector<12x12xf32> to vector<1x12xf32>
    %792 = vector.shape_cast %790 : vector<8x1xi1> to vector<8x1xi1>
    %793 = vector.broadcast %792 : vector<8x1xi1> to vector<8x12xi1>
    %794 = vector.shape_cast %791 : vector<1x12xf32> to vector<1x12xf32>
    %795 = vector.broadcast %794 : vector<1x12xf32> to vector<8x12xf32>
    %796 = arith.select %793, %795, %788 : vector<8x12xi1>, vector<8x12xf32>
    %c8_i32_118 = arith.constant 8 : i32
    %797 = vector.broadcast %c8_i32_118 : i32 to vector<8x1xi32>
    %798 = arith.cmpi eq, %731, %797 : vector<8x1xi32>
    %799 = vector.extract_strided_slice %0 {offsets = [8, 0], sizes = [1, 12], strides = [1, 1]} : vector<12x12xf32> to vector<1x12xf32>
    %800 = vector.shape_cast %798 : vector<8x1xi1> to vector<8x1xi1>
    %801 = vector.broadcast %800 : vector<8x1xi1> to vector<8x12xi1>
    %802 = vector.shape_cast %799 : vector<1x12xf32> to vector<1x12xf32>
    %803 = vector.broadcast %802 : vector<1x12xf32> to vector<8x12xf32>
    %804 = arith.select %801, %803, %796 : vector<8x12xi1>, vector<8x12xf32>
    %c9_i32_119 = arith.constant 9 : i32
    %805 = vector.broadcast %c9_i32_119 : i32 to vector<8x1xi32>
    %806 = arith.cmpi eq, %731, %805 : vector<8x1xi32>
    %807 = vector.extract_strided_slice %0 {offsets = [9, 0], sizes = [1, 12], strides = [1, 1]} : vector<12x12xf32> to vector<1x12xf32>
    %808 = vector.shape_cast %806 : vector<8x1xi1> to vector<8x1xi1>
    %809 = vector.broadcast %808 : vector<8x1xi1> to vector<8x12xi1>
    %810 = vector.shape_cast %807 : vector<1x12xf32> to vector<1x12xf32>
    %811 = vector.broadcast %810 : vector<1x12xf32> to vector<8x12xf32>
    %812 = arith.select %809, %811, %804 : vector<8x12xi1>, vector<8x12xf32>
    %c10_i32_120 = arith.constant 10 : i32
    %813 = vector.broadcast %c10_i32_120 : i32 to vector<8x1xi32>
    %814 = arith.cmpi eq, %731, %813 : vector<8x1xi32>
    %815 = vector.extract_strided_slice %0 {offsets = [10, 0], sizes = [1, 12], strides = [1, 1]} : vector<12x12xf32> to vector<1x12xf32>
    %816 = vector.shape_cast %814 : vector<8x1xi1> to vector<8x1xi1>
    %817 = vector.broadcast %816 : vector<8x1xi1> to vector<8x12xi1>
    %818 = vector.shape_cast %815 : vector<1x12xf32> to vector<1x12xf32>
    %819 = vector.broadcast %818 : vector<1x12xf32> to vector<8x12xf32>
    %820 = arith.select %817, %819, %812 : vector<8x12xi1>, vector<8x12xf32>
    %c11_i32_121 = arith.constant 11 : i32
    %821 = vector.broadcast %c11_i32_121 : i32 to vector<8x1xi32>
    %822 = arith.cmpi eq, %731, %821 : vector<8x1xi32>
    %823 = vector.extract_strided_slice %0 {offsets = [11, 0], sizes = [1, 12], strides = [1, 1]} : vector<12x12xf32> to vector<1x12xf32>
    %824 = vector.shape_cast %822 : vector<8x1xi1> to vector<8x1xi1>
    %825 = vector.broadcast %824 : vector<8x1xi1> to vector<8x12xi1>
    %826 = vector.shape_cast %823 : vector<1x12xf32> to vector<1x12xf32>
    %827 = vector.broadcast %826 : vector<1x12xf32> to vector<8x12xf32>
    %828 = arith.select %825, %827, %820 : vector<8x12xi1>, vector<8x12xf32>
    %c7 = arith.constant 7 : index
    %c0_122 = arith.constant 0 : index
    %c0_123 = arith.constant 0 : index
    %829 = vector.load %arg2[%c7, %c0_122, %c0_123] : memref<12x8x12xf32, #tpu.memory_space<vmem>>, vector<1x8x12xf32>
    %830 = vector.shape_cast %829 : vector<1x8x12xf32> to vector<8x12xf32>
    %831 = arith.addf %828, %830 : vector<8x12xf32>
    %832 = tpu.iota {dimensions = array<i32: 1>} : vector<8x12xi32>
    %cst_124 = arith.constant dense<0xFF800000> : vector<8xf32>
    %833 = vector.multi_reduction <maximumf>, %831, %cst_124 [1] : vector<8x12xf32> to vector<8xf32>
    %834 = vector.shape_cast %833 : vector<8xf32> to vector<8x1xf32>
    %835 = vector.broadcast %834 : vector<8x1xf32> to vector<8x12xf32>
    %836 = arith.cmpf oeq, %831, %835 : vector<8x12xf32>
    %c12_i32_125 = arith.constant 12 : i32
    %837 = vector.broadcast %c12_i32_125 : i32 to vector<8x12xi32>
    %838 = arith.select %836, %832, %837 : vector<8x12xi1>, vector<8x12xi32>
    %cst_126 = arith.constant dense<2147483647> : vector<8xi32>
    %839 = vector.multi_reduction <minsi>, %838, %cst_126 [1] : vector<8x12xi32> to vector<8xi32>
    %840 = vector.shape_cast %839 : vector<8xi32> to vector<8x1xi32>
    %841 = vector.broadcast %840 : vector<8x1xi32> to vector<8x12xi32>
    %842 = arith.cmpi eq, %832, %841 : vector<8x12xi32>
    %843 = arith.extui %842 : vector<8x12xi1> to vector<8x12xi32>
    %844 = arith.sitofp %843 : vector<8x12xi32> to vector<8x12xf32>
    %c11_i32_127 = arith.constant 11 : i32
    %845 = vector.broadcast %c11_i32_127 : i32 to vector<8x1xi32>
    %846 = arith.cmpi ne, %731, %845 : vector<8x1xi32>
    %847 = vector.shape_cast %846 : vector<8x1xi1> to vector<8x1xi1>
    %848 = vector.broadcast %847 : vector<8x1xi1> to vector<8x12xi1>
    %849 = arith.select %848, %844, %730 : vector<8x12xi1>, vector<8x12xf32>
    %850 = arith.select %846, %840, %731 : vector<8x1xi1>, vector<8x1xi32>
    %cst_128 = arith.constant 0.000000e+00 : f32
    %851 = vector.broadcast %cst_128 : f32 to vector<8x12xf32>
    %c0_i32_129 = arith.constant 0 : i32
    %852 = vector.broadcast %c0_i32_129 : i32 to vector<8x1xi32>
    %853 = arith.cmpi eq, %850, %852 : vector<8x1xi32>
    %854 = vector.extract_strided_slice %0 {offsets = [0, 0], sizes = [1, 12], strides = [1, 1]} : vector<12x12xf32> to vector<1x12xf32>
    %855 = vector.shape_cast %853 : vector<8x1xi1> to vector<8x1xi1>
    %856 = vector.broadcast %855 : vector<8x1xi1> to vector<8x12xi1>
    %857 = vector.shape_cast %854 : vector<1x12xf32> to vector<1x12xf32>
    %858 = vector.broadcast %857 : vector<1x12xf32> to vector<8x12xf32>
    %859 = arith.select %856, %858, %851 : vector<8x12xi1>, vector<8x12xf32>
    %c1_i32_130 = arith.constant 1 : i32
    %860 = vector.broadcast %c1_i32_130 : i32 to vector<8x1xi32>
    %861 = arith.cmpi eq, %850, %860 : vector<8x1xi32>
    %862 = vector.extract_strided_slice %0 {offsets = [1, 0], sizes = [1, 12], strides = [1, 1]} : vector<12x12xf32> to vector<1x12xf32>
    %863 = vector.shape_cast %861 : vector<8x1xi1> to vector<8x1xi1>
    %864 = vector.broadcast %863 : vector<8x1xi1> to vector<8x12xi1>
    %865 = vector.shape_cast %862 : vector<1x12xf32> to vector<1x12xf32>
    %866 = vector.broadcast %865 : vector<1x12xf32> to vector<8x12xf32>
    %867 = arith.select %864, %866, %859 : vector<8x12xi1>, vector<8x12xf32>
    %c2_i32_131 = arith.constant 2 : i32
    %868 = vector.broadcast %c2_i32_131 : i32 to vector<8x1xi32>
    %869 = arith.cmpi eq, %850, %868 : vector<8x1xi32>
    %870 = vector.extract_strided_slice %0 {offsets = [2, 0], sizes = [1, 12], strides = [1, 1]} : vector<12x12xf32> to vector<1x12xf32>
    %871 = vector.shape_cast %869 : vector<8x1xi1> to vector<8x1xi1>
    %872 = vector.broadcast %871 : vector<8x1xi1> to vector<8x12xi1>
    %873 = vector.shape_cast %870 : vector<1x12xf32> to vector<1x12xf32>
    %874 = vector.broadcast %873 : vector<1x12xf32> to vector<8x12xf32>
    %875 = arith.select %872, %874, %867 : vector<8x12xi1>, vector<8x12xf32>
    %c3_i32_132 = arith.constant 3 : i32
    %876 = vector.broadcast %c3_i32_132 : i32 to vector<8x1xi32>
    %877 = arith.cmpi eq, %850, %876 : vector<8x1xi32>
    %878 = vector.extract_strided_slice %0 {offsets = [3, 0], sizes = [1, 12], strides = [1, 1]} : vector<12x12xf32> to vector<1x12xf32>
    %879 = vector.shape_cast %877 : vector<8x1xi1> to vector<8x1xi1>
    %880 = vector.broadcast %879 : vector<8x1xi1> to vector<8x12xi1>
    %881 = vector.shape_cast %878 : vector<1x12xf32> to vector<1x12xf32>
    %882 = vector.broadcast %881 : vector<1x12xf32> to vector<8x12xf32>
    %883 = arith.select %880, %882, %875 : vector<8x12xi1>, vector<8x12xf32>
    %c4_i32_133 = arith.constant 4 : i32
    %884 = vector.broadcast %c4_i32_133 : i32 to vector<8x1xi32>
    %885 = arith.cmpi eq, %850, %884 : vector<8x1xi32>
    %886 = vector.extract_strided_slice %0 {offsets = [4, 0], sizes = [1, 12], strides = [1, 1]} : vector<12x12xf32> to vector<1x12xf32>
    %887 = vector.shape_cast %885 : vector<8x1xi1> to vector<8x1xi1>
    %888 = vector.broadcast %887 : vector<8x1xi1> to vector<8x12xi1>
    %889 = vector.shape_cast %886 : vector<1x12xf32> to vector<1x12xf32>
    %890 = vector.broadcast %889 : vector<1x12xf32> to vector<8x12xf32>
    %891 = arith.select %888, %890, %883 : vector<8x12xi1>, vector<8x12xf32>
    %c5_i32_134 = arith.constant 5 : i32
    %892 = vector.broadcast %c5_i32_134 : i32 to vector<8x1xi32>
    %893 = arith.cmpi eq, %850, %892 : vector<8x1xi32>
    %894 = vector.extract_strided_slice %0 {offsets = [5, 0], sizes = [1, 12], strides = [1, 1]} : vector<12x12xf32> to vector<1x12xf32>
    %895 = vector.shape_cast %893 : vector<8x1xi1> to vector<8x1xi1>
    %896 = vector.broadcast %895 : vector<8x1xi1> to vector<8x12xi1>
    %897 = vector.shape_cast %894 : vector<1x12xf32> to vector<1x12xf32>
    %898 = vector.broadcast %897 : vector<1x12xf32> to vector<8x12xf32>
    %899 = arith.select %896, %898, %891 : vector<8x12xi1>, vector<8x12xf32>
    %c6_i32_135 = arith.constant 6 : i32
    %900 = vector.broadcast %c6_i32_135 : i32 to vector<8x1xi32>
    %901 = arith.cmpi eq, %850, %900 : vector<8x1xi32>
    %902 = vector.extract_strided_slice %0 {offsets = [6, 0], sizes = [1, 12], strides = [1, 1]} : vector<12x12xf32> to vector<1x12xf32>
    %903 = vector.shape_cast %901 : vector<8x1xi1> to vector<8x1xi1>
    %904 = vector.broadcast %903 : vector<8x1xi1> to vector<8x12xi1>
    %905 = vector.shape_cast %902 : vector<1x12xf32> to vector<1x12xf32>
    %906 = vector.broadcast %905 : vector<1x12xf32> to vector<8x12xf32>
    %907 = arith.select %904, %906, %899 : vector<8x12xi1>, vector<8x12xf32>
    %c7_i32_136 = arith.constant 7 : i32
    %908 = vector.broadcast %c7_i32_136 : i32 to vector<8x1xi32>
    %909 = arith.cmpi eq, %850, %908 : vector<8x1xi32>
    %910 = vector.extract_strided_slice %0 {offsets = [7, 0], sizes = [1, 12], strides = [1, 1]} : vector<12x12xf32> to vector<1x12xf32>
    %911 = vector.shape_cast %909 : vector<8x1xi1> to vector<8x1xi1>
    %912 = vector.broadcast %911 : vector<8x1xi1> to vector<8x12xi1>
    %913 = vector.shape_cast %910 : vector<1x12xf32> to vector<1x12xf32>
    %914 = vector.broadcast %913 : vector<1x12xf32> to vector<8x12xf32>
    %915 = arith.select %912, %914, %907 : vector<8x12xi1>, vector<8x12xf32>
    %c8_i32_137 = arith.constant 8 : i32
    %916 = vector.broadcast %c8_i32_137 : i32 to vector<8x1xi32>
    %917 = arith.cmpi eq, %850, %916 : vector<8x1xi32>
    %918 = vector.extract_strided_slice %0 {offsets = [8, 0], sizes = [1, 12], strides = [1, 1]} : vector<12x12xf32> to vector<1x12xf32>
    %919 = vector.shape_cast %917 : vector<8x1xi1> to vector<8x1xi1>
    %920 = vector.broadcast %919 : vector<8x1xi1> to vector<8x12xi1>
    %921 = vector.shape_cast %918 : vector<1x12xf32> to vector<1x12xf32>
    %922 = vector.broadcast %921 : vector<1x12xf32> to vector<8x12xf32>
    %923 = arith.select %920, %922, %915 : vector<8x12xi1>, vector<8x12xf32>
    %c9_i32_138 = arith.constant 9 : i32
    %924 = vector.broadcast %c9_i32_138 : i32 to vector<8x1xi32>
    %925 = arith.cmpi eq, %850, %924 : vector<8x1xi32>
    %926 = vector.extract_strided_slice %0 {offsets = [9, 0], sizes = [1, 12], strides = [1, 1]} : vector<12x12xf32> to vector<1x12xf32>
    %927 = vector.shape_cast %925 : vector<8x1xi1> to vector<8x1xi1>
    %928 = vector.broadcast %927 : vector<8x1xi1> to vector<8x12xi1>
    %929 = vector.shape_cast %926 : vector<1x12xf32> to vector<1x12xf32>
    %930 = vector.broadcast %929 : vector<1x12xf32> to vector<8x12xf32>
    %931 = arith.select %928, %930, %923 : vector<8x12xi1>, vector<8x12xf32>
    %c10_i32_139 = arith.constant 10 : i32
    %932 = vector.broadcast %c10_i32_139 : i32 to vector<8x1xi32>
    %933 = arith.cmpi eq, %850, %932 : vector<8x1xi32>
    %934 = vector.extract_strided_slice %0 {offsets = [10, 0], sizes = [1, 12], strides = [1, 1]} : vector<12x12xf32> to vector<1x12xf32>
    %935 = vector.shape_cast %933 : vector<8x1xi1> to vector<8x1xi1>
    %936 = vector.broadcast %935 : vector<8x1xi1> to vector<8x12xi1>
    %937 = vector.shape_cast %934 : vector<1x12xf32> to vector<1x12xf32>
    %938 = vector.broadcast %937 : vector<1x12xf32> to vector<8x12xf32>
    %939 = arith.select %936, %938, %931 : vector<8x12xi1>, vector<8x12xf32>
    %c11_i32_140 = arith.constant 11 : i32
    %940 = vector.broadcast %c11_i32_140 : i32 to vector<8x1xi32>
    %941 = arith.cmpi eq, %850, %940 : vector<8x1xi32>
    %942 = vector.extract_strided_slice %0 {offsets = [11, 0], sizes = [1, 12], strides = [1, 1]} : vector<12x12xf32> to vector<1x12xf32>
    %943 = vector.shape_cast %941 : vector<8x1xi1> to vector<8x1xi1>
    %944 = vector.broadcast %943 : vector<8x1xi1> to vector<8x12xi1>
    %945 = vector.shape_cast %942 : vector<1x12xf32> to vector<1x12xf32>
    %946 = vector.broadcast %945 : vector<1x12xf32> to vector<8x12xf32>
    %947 = arith.select %944, %946, %939 : vector<8x12xi1>, vector<8x12xf32>
    %c8 = arith.constant 8 : index
    %c0_141 = arith.constant 0 : index
    %c0_142 = arith.constant 0 : index
    %948 = vector.load %arg2[%c8, %c0_141, %c0_142] : memref<12x8x12xf32, #tpu.memory_space<vmem>>, vector<1x8x12xf32>
    %949 = vector.shape_cast %948 : vector<1x8x12xf32> to vector<8x12xf32>
    %950 = arith.addf %947, %949 : vector<8x12xf32>
    %951 = tpu.iota {dimensions = array<i32: 1>} : vector<8x12xi32>
    %cst_143 = arith.constant dense<0xFF800000> : vector<8xf32>
    %952 = vector.multi_reduction <maximumf>, %950, %cst_143 [1] : vector<8x12xf32> to vector<8xf32>
    %953 = vector.shape_cast %952 : vector<8xf32> to vector<8x1xf32>
    %954 = vector.broadcast %953 : vector<8x1xf32> to vector<8x12xf32>
    %955 = arith.cmpf oeq, %950, %954 : vector<8x12xf32>
    %c12_i32_144 = arith.constant 12 : i32
    %956 = vector.broadcast %c12_i32_144 : i32 to vector<8x12xi32>
    %957 = arith.select %955, %951, %956 : vector<8x12xi1>, vector<8x12xi32>
    %cst_145 = arith.constant dense<2147483647> : vector<8xi32>
    %958 = vector.multi_reduction <minsi>, %957, %cst_145 [1] : vector<8x12xi32> to vector<8xi32>
    %959 = vector.shape_cast %958 : vector<8xi32> to vector<8x1xi32>
    %960 = vector.broadcast %959 : vector<8x1xi32> to vector<8x12xi32>
    %961 = arith.cmpi eq, %951, %960 : vector<8x12xi32>
    %962 = arith.extui %961 : vector<8x12xi1> to vector<8x12xi32>
    %963 = arith.sitofp %962 : vector<8x12xi32> to vector<8x12xf32>
    %c11_i32_146 = arith.constant 11 : i32
    %964 = vector.broadcast %c11_i32_146 : i32 to vector<8x1xi32>
    %965 = arith.cmpi ne, %850, %964 : vector<8x1xi32>
    %966 = vector.shape_cast %965 : vector<8x1xi1> to vector<8x1xi1>
    %967 = vector.broadcast %966 : vector<8x1xi1> to vector<8x12xi1>
    %968 = arith.select %967, %963, %849 : vector<8x12xi1>, vector<8x12xf32>
    %969 = arith.select %965, %959, %850 : vector<8x1xi1>, vector<8x1xi32>
    %cst_147 = arith.constant 0.000000e+00 : f32
    %970 = vector.broadcast %cst_147 : f32 to vector<8x12xf32>
    %c0_i32_148 = arith.constant 0 : i32
    %971 = vector.broadcast %c0_i32_148 : i32 to vector<8x1xi32>
    %972 = arith.cmpi eq, %969, %971 : vector<8x1xi32>
    %973 = vector.extract_strided_slice %0 {offsets = [0, 0], sizes = [1, 12], strides = [1, 1]} : vector<12x12xf32> to vector<1x12xf32>
    %974 = vector.shape_cast %972 : vector<8x1xi1> to vector<8x1xi1>
    %975 = vector.broadcast %974 : vector<8x1xi1> to vector<8x12xi1>
    %976 = vector.shape_cast %973 : vector<1x12xf32> to vector<1x12xf32>
    %977 = vector.broadcast %976 : vector<1x12xf32> to vector<8x12xf32>
    %978 = arith.select %975, %977, %970 : vector<8x12xi1>, vector<8x12xf32>
    %c1_i32_149 = arith.constant 1 : i32
    %979 = vector.broadcast %c1_i32_149 : i32 to vector<8x1xi32>
    %980 = arith.cmpi eq, %969, %979 : vector<8x1xi32>
    %981 = vector.extract_strided_slice %0 {offsets = [1, 0], sizes = [1, 12], strides = [1, 1]} : vector<12x12xf32> to vector<1x12xf32>
    %982 = vector.shape_cast %980 : vector<8x1xi1> to vector<8x1xi1>
    %983 = vector.broadcast %982 : vector<8x1xi1> to vector<8x12xi1>
    %984 = vector.shape_cast %981 : vector<1x12xf32> to vector<1x12xf32>
    %985 = vector.broadcast %984 : vector<1x12xf32> to vector<8x12xf32>
    %986 = arith.select %983, %985, %978 : vector<8x12xi1>, vector<8x12xf32>
    %c2_i32_150 = arith.constant 2 : i32
    %987 = vector.broadcast %c2_i32_150 : i32 to vector<8x1xi32>
    %988 = arith.cmpi eq, %969, %987 : vector<8x1xi32>
    %989 = vector.extract_strided_slice %0 {offsets = [2, 0], sizes = [1, 12], strides = [1, 1]} : vector<12x12xf32> to vector<1x12xf32>
    %990 = vector.shape_cast %988 : vector<8x1xi1> to vector<8x1xi1>
    %991 = vector.broadcast %990 : vector<8x1xi1> to vector<8x12xi1>
    %992 = vector.shape_cast %989 : vector<1x12xf32> to vector<1x12xf32>
    %993 = vector.broadcast %992 : vector<1x12xf32> to vector<8x12xf32>
    %994 = arith.select %991, %993, %986 : vector<8x12xi1>, vector<8x12xf32>
    %c3_i32_151 = arith.constant 3 : i32
    %995 = vector.broadcast %c3_i32_151 : i32 to vector<8x1xi32>
    %996 = arith.cmpi eq, %969, %995 : vector<8x1xi32>
    %997 = vector.extract_strided_slice %0 {offsets = [3, 0], sizes = [1, 12], strides = [1, 1]} : vector<12x12xf32> to vector<1x12xf32>
    %998 = vector.shape_cast %996 : vector<8x1xi1> to vector<8x1xi1>
    %999 = vector.broadcast %998 : vector<8x1xi1> to vector<8x12xi1>
    %1000 = vector.shape_cast %997 : vector<1x12xf32> to vector<1x12xf32>
    %1001 = vector.broadcast %1000 : vector<1x12xf32> to vector<8x12xf32>
    %1002 = arith.select %999, %1001, %994 : vector<8x12xi1>, vector<8x12xf32>
    %c4_i32_152 = arith.constant 4 : i32
    %1003 = vector.broadcast %c4_i32_152 : i32 to vector<8x1xi32>
    %1004 = arith.cmpi eq, %969, %1003 : vector<8x1xi32>
    %1005 = vector.extract_strided_slice %0 {offsets = [4, 0], sizes = [1, 12], strides = [1, 1]} : vector<12x12xf32> to vector<1x12xf32>
    %1006 = vector.shape_cast %1004 : vector<8x1xi1> to vector<8x1xi1>
    %1007 = vector.broadcast %1006 : vector<8x1xi1> to vector<8x12xi1>
    %1008 = vector.shape_cast %1005 : vector<1x12xf32> to vector<1x12xf32>
    %1009 = vector.broadcast %1008 : vector<1x12xf32> to vector<8x12xf32>
    %1010 = arith.select %1007, %1009, %1002 : vector<8x12xi1>, vector<8x12xf32>
    %c5_i32_153 = arith.constant 5 : i32
    %1011 = vector.broadcast %c5_i32_153 : i32 to vector<8x1xi32>
    %1012 = arith.cmpi eq, %969, %1011 : vector<8x1xi32>
    %1013 = vector.extract_strided_slice %0 {offsets = [5, 0], sizes = [1, 12], strides = [1, 1]} : vector<12x12xf32> to vector<1x12xf32>
    %1014 = vector.shape_cast %1012 : vector<8x1xi1> to vector<8x1xi1>
    %1015 = vector.broadcast %1014 : vector<8x1xi1> to vector<8x12xi1>
    %1016 = vector.shape_cast %1013 : vector<1x12xf32> to vector<1x12xf32>
    %1017 = vector.broadcast %1016 : vector<1x12xf32> to vector<8x12xf32>
    %1018 = arith.select %1015, %1017, %1010 : vector<8x12xi1>, vector<8x12xf32>
    %c6_i32_154 = arith.constant 6 : i32
    %1019 = vector.broadcast %c6_i32_154 : i32 to vector<8x1xi32>
    %1020 = arith.cmpi eq, %969, %1019 : vector<8x1xi32>
    %1021 = vector.extract_strided_slice %0 {offsets = [6, 0], sizes = [1, 12], strides = [1, 1]} : vector<12x12xf32> to vector<1x12xf32>
    %1022 = vector.shape_cast %1020 : vector<8x1xi1> to vector<8x1xi1>
    %1023 = vector.broadcast %1022 : vector<8x1xi1> to vector<8x12xi1>
    %1024 = vector.shape_cast %1021 : vector<1x12xf32> to vector<1x12xf32>
    %1025 = vector.broadcast %1024 : vector<1x12xf32> to vector<8x12xf32>
    %1026 = arith.select %1023, %1025, %1018 : vector<8x12xi1>, vector<8x12xf32>
    %c7_i32_155 = arith.constant 7 : i32
    %1027 = vector.broadcast %c7_i32_155 : i32 to vector<8x1xi32>
    %1028 = arith.cmpi eq, %969, %1027 : vector<8x1xi32>
    %1029 = vector.extract_strided_slice %0 {offsets = [7, 0], sizes = [1, 12], strides = [1, 1]} : vector<12x12xf32> to vector<1x12xf32>
    %1030 = vector.shape_cast %1028 : vector<8x1xi1> to vector<8x1xi1>
    %1031 = vector.broadcast %1030 : vector<8x1xi1> to vector<8x12xi1>
    %1032 = vector.shape_cast %1029 : vector<1x12xf32> to vector<1x12xf32>
    %1033 = vector.broadcast %1032 : vector<1x12xf32> to vector<8x12xf32>
    %1034 = arith.select %1031, %1033, %1026 : vector<8x12xi1>, vector<8x12xf32>
    %c8_i32_156 = arith.constant 8 : i32
    %1035 = vector.broadcast %c8_i32_156 : i32 to vector<8x1xi32>
    %1036 = arith.cmpi eq, %969, %1035 : vector<8x1xi32>
    %1037 = vector.extract_strided_slice %0 {offsets = [8, 0], sizes = [1, 12], strides = [1, 1]} : vector<12x12xf32> to vector<1x12xf32>
    %1038 = vector.shape_cast %1036 : vector<8x1xi1> to vector<8x1xi1>
    %1039 = vector.broadcast %1038 : vector<8x1xi1> to vector<8x12xi1>
    %1040 = vector.shape_cast %1037 : vector<1x12xf32> to vector<1x12xf32>
    %1041 = vector.broadcast %1040 : vector<1x12xf32> to vector<8x12xf32>
    %1042 = arith.select %1039, %1041, %1034 : vector<8x12xi1>, vector<8x12xf32>
    %c9_i32_157 = arith.constant 9 : i32
    %1043 = vector.broadcast %c9_i32_157 : i32 to vector<8x1xi32>
    %1044 = arith.cmpi eq, %969, %1043 : vector<8x1xi32>
    %1045 = vector.extract_strided_slice %0 {offsets = [9, 0], sizes = [1, 12], strides = [1, 1]} : vector<12x12xf32> to vector<1x12xf32>
    %1046 = vector.shape_cast %1044 : vector<8x1xi1> to vector<8x1xi1>
    %1047 = vector.broadcast %1046 : vector<8x1xi1> to vector<8x12xi1>
    %1048 = vector.shape_cast %1045 : vector<1x12xf32> to vector<1x12xf32>
    %1049 = vector.broadcast %1048 : vector<1x12xf32> to vector<8x12xf32>
    %1050 = arith.select %1047, %1049, %1042 : vector<8x12xi1>, vector<8x12xf32>
    %c10_i32_158 = arith.constant 10 : i32
    %1051 = vector.broadcast %c10_i32_158 : i32 to vector<8x1xi32>
    %1052 = arith.cmpi eq, %969, %1051 : vector<8x1xi32>
    %1053 = vector.extract_strided_slice %0 {offsets = [10, 0], sizes = [1, 12], strides = [1, 1]} : vector<12x12xf32> to vector<1x12xf32>
    %1054 = vector.shape_cast %1052 : vector<8x1xi1> to vector<8x1xi1>
    %1055 = vector.broadcast %1054 : vector<8x1xi1> to vector<8x12xi1>
    %1056 = vector.shape_cast %1053 : vector<1x12xf32> to vector<1x12xf32>
    %1057 = vector.broadcast %1056 : vector<1x12xf32> to vector<8x12xf32>
    %1058 = arith.select %1055, %1057, %1050 : vector<8x12xi1>, vector<8x12xf32>
    %c11_i32_159 = arith.constant 11 : i32
    %1059 = vector.broadcast %c11_i32_159 : i32 to vector<8x1xi32>
    %1060 = arith.cmpi eq, %969, %1059 : vector<8x1xi32>
    %1061 = vector.extract_strided_slice %0 {offsets = [11, 0], sizes = [1, 12], strides = [1, 1]} : vector<12x12xf32> to vector<1x12xf32>
    %1062 = vector.shape_cast %1060 : vector<8x1xi1> to vector<8x1xi1>
    %1063 = vector.broadcast %1062 : vector<8x1xi1> to vector<8x12xi1>
    %1064 = vector.shape_cast %1061 : vector<1x12xf32> to vector<1x12xf32>
    %1065 = vector.broadcast %1064 : vector<1x12xf32> to vector<8x12xf32>
    %1066 = arith.select %1063, %1065, %1058 : vector<8x12xi1>, vector<8x12xf32>
    %c9 = arith.constant 9 : index
    %c0_160 = arith.constant 0 : index
    %c0_161 = arith.constant 0 : index
    %1067 = vector.load %arg2[%c9, %c0_160, %c0_161] : memref<12x8x12xf32, #tpu.memory_space<vmem>>, vector<1x8x12xf32>
    %1068 = vector.shape_cast %1067 : vector<1x8x12xf32> to vector<8x12xf32>
    %1069 = arith.addf %1066, %1068 : vector<8x12xf32>
    %1070 = tpu.iota {dimensions = array<i32: 1>} : vector<8x12xi32>
    %cst_162 = arith.constant dense<0xFF800000> : vector<8xf32>
    %1071 = vector.multi_reduction <maximumf>, %1069, %cst_162 [1] : vector<8x12xf32> to vector<8xf32>
    %1072 = vector.shape_cast %1071 : vector<8xf32> to vector<8x1xf32>
    %1073 = vector.broadcast %1072 : vector<8x1xf32> to vector<8x12xf32>
    %1074 = arith.cmpf oeq, %1069, %1073 : vector<8x12xf32>
    %c12_i32_163 = arith.constant 12 : i32
    %1075 = vector.broadcast %c12_i32_163 : i32 to vector<8x12xi32>
    %1076 = arith.select %1074, %1070, %1075 : vector<8x12xi1>, vector<8x12xi32>
    %cst_164 = arith.constant dense<2147483647> : vector<8xi32>
    %1077 = vector.multi_reduction <minsi>, %1076, %cst_164 [1] : vector<8x12xi32> to vector<8xi32>
    %1078 = vector.shape_cast %1077 : vector<8xi32> to vector<8x1xi32>
    %1079 = vector.broadcast %1078 : vector<8x1xi32> to vector<8x12xi32>
    %1080 = arith.cmpi eq, %1070, %1079 : vector<8x12xi32>
    %1081 = arith.extui %1080 : vector<8x12xi1> to vector<8x12xi32>
    %1082 = arith.sitofp %1081 : vector<8x12xi32> to vector<8x12xf32>
    %c11_i32_165 = arith.constant 11 : i32
    %1083 = vector.broadcast %c11_i32_165 : i32 to vector<8x1xi32>
    %1084 = arith.cmpi ne, %969, %1083 : vector<8x1xi32>
    %1085 = vector.shape_cast %1084 : vector<8x1xi1> to vector<8x1xi1>
    %1086 = vector.broadcast %1085 : vector<8x1xi1> to vector<8x12xi1>
    %1087 = arith.select %1086, %1082, %968 : vector<8x12xi1>, vector<8x12xf32>
    %1088 = arith.select %1084, %1078, %969 : vector<8x1xi1>, vector<8x1xi32>
    %cst_166 = arith.constant 0.000000e+00 : f32
    %1089 = vector.broadcast %cst_166 : f32 to vector<8x12xf32>
    %c0_i32_167 = arith.constant 0 : i32
    %1090 = vector.broadcast %c0_i32_167 : i32 to vector<8x1xi32>
    %1091 = arith.cmpi eq, %1088, %1090 : vector<8x1xi32>
    %1092 = vector.extract_strided_slice %0 {offsets = [0, 0], sizes = [1, 12], strides = [1, 1]} : vector<12x12xf32> to vector<1x12xf32>
    %1093 = vector.shape_cast %1091 : vector<8x1xi1> to vector<8x1xi1>
    %1094 = vector.broadcast %1093 : vector<8x1xi1> to vector<8x12xi1>
    %1095 = vector.shape_cast %1092 : vector<1x12xf32> to vector<1x12xf32>
    %1096 = vector.broadcast %1095 : vector<1x12xf32> to vector<8x12xf32>
    %1097 = arith.select %1094, %1096, %1089 : vector<8x12xi1>, vector<8x12xf32>
    %c1_i32_168 = arith.constant 1 : i32
    %1098 = vector.broadcast %c1_i32_168 : i32 to vector<8x1xi32>
    %1099 = arith.cmpi eq, %1088, %1098 : vector<8x1xi32>
    %1100 = vector.extract_strided_slice %0 {offsets = [1, 0], sizes = [1, 12], strides = [1, 1]} : vector<12x12xf32> to vector<1x12xf32>
    %1101 = vector.shape_cast %1099 : vector<8x1xi1> to vector<8x1xi1>
    %1102 = vector.broadcast %1101 : vector<8x1xi1> to vector<8x12xi1>
    %1103 = vector.shape_cast %1100 : vector<1x12xf32> to vector<1x12xf32>
    %1104 = vector.broadcast %1103 : vector<1x12xf32> to vector<8x12xf32>
    %1105 = arith.select %1102, %1104, %1097 : vector<8x12xi1>, vector<8x12xf32>
    %c2_i32_169 = arith.constant 2 : i32
    %1106 = vector.broadcast %c2_i32_169 : i32 to vector<8x1xi32>
    %1107 = arith.cmpi eq, %1088, %1106 : vector<8x1xi32>
    %1108 = vector.extract_strided_slice %0 {offsets = [2, 0], sizes = [1, 12], strides = [1, 1]} : vector<12x12xf32> to vector<1x12xf32>
    %1109 = vector.shape_cast %1107 : vector<8x1xi1> to vector<8x1xi1>
    %1110 = vector.broadcast %1109 : vector<8x1xi1> to vector<8x12xi1>
    %1111 = vector.shape_cast %1108 : vector<1x12xf32> to vector<1x12xf32>
    %1112 = vector.broadcast %1111 : vector<1x12xf32> to vector<8x12xf32>
    %1113 = arith.select %1110, %1112, %1105 : vector<8x12xi1>, vector<8x12xf32>
    %c3_i32_170 = arith.constant 3 : i32
    %1114 = vector.broadcast %c3_i32_170 : i32 to vector<8x1xi32>
    %1115 = arith.cmpi eq, %1088, %1114 : vector<8x1xi32>
    %1116 = vector.extract_strided_slice %0 {offsets = [3, 0], sizes = [1, 12], strides = [1, 1]} : vector<12x12xf32> to vector<1x12xf32>
    %1117 = vector.shape_cast %1115 : vector<8x1xi1> to vector<8x1xi1>
    %1118 = vector.broadcast %1117 : vector<8x1xi1> to vector<8x12xi1>
    %1119 = vector.shape_cast %1116 : vector<1x12xf32> to vector<1x12xf32>
    %1120 = vector.broadcast %1119 : vector<1x12xf32> to vector<8x12xf32>
    %1121 = arith.select %1118, %1120, %1113 : vector<8x12xi1>, vector<8x12xf32>
    %c4_i32_171 = arith.constant 4 : i32
    %1122 = vector.broadcast %c4_i32_171 : i32 to vector<8x1xi32>
    %1123 = arith.cmpi eq, %1088, %1122 : vector<8x1xi32>
    %1124 = vector.extract_strided_slice %0 {offsets = [4, 0], sizes = [1, 12], strides = [1, 1]} : vector<12x12xf32> to vector<1x12xf32>
    %1125 = vector.shape_cast %1123 : vector<8x1xi1> to vector<8x1xi1>
    %1126 = vector.broadcast %1125 : vector<8x1xi1> to vector<8x12xi1>
    %1127 = vector.shape_cast %1124 : vector<1x12xf32> to vector<1x12xf32>
    %1128 = vector.broadcast %1127 : vector<1x12xf32> to vector<8x12xf32>
    %1129 = arith.select %1126, %1128, %1121 : vector<8x12xi1>, vector<8x12xf32>
    %c5_i32_172 = arith.constant 5 : i32
    %1130 = vector.broadcast %c5_i32_172 : i32 to vector<8x1xi32>
    %1131 = arith.cmpi eq, %1088, %1130 : vector<8x1xi32>
    %1132 = vector.extract_strided_slice %0 {offsets = [5, 0], sizes = [1, 12], strides = [1, 1]} : vector<12x12xf32> to vector<1x12xf32>
    %1133 = vector.shape_cast %1131 : vector<8x1xi1> to vector<8x1xi1>
    %1134 = vector.broadcast %1133 : vector<8x1xi1> to vector<8x12xi1>
    %1135 = vector.shape_cast %1132 : vector<1x12xf32> to vector<1x12xf32>
    %1136 = vector.broadcast %1135 : vector<1x12xf32> to vector<8x12xf32>
    %1137 = arith.select %1134, %1136, %1129 : vector<8x12xi1>, vector<8x12xf32>
    %c6_i32_173 = arith.constant 6 : i32
    %1138 = vector.broadcast %c6_i32_173 : i32 to vector<8x1xi32>
    %1139 = arith.cmpi eq, %1088, %1138 : vector<8x1xi32>
    %1140 = vector.extract_strided_slice %0 {offsets = [6, 0], sizes = [1, 12], strides = [1, 1]} : vector<12x12xf32> to vector<1x12xf32>
    %1141 = vector.shape_cast %1139 : vector<8x1xi1> to vector<8x1xi1>
    %1142 = vector.broadcast %1141 : vector<8x1xi1> to vector<8x12xi1>
    %1143 = vector.shape_cast %1140 : vector<1x12xf32> to vector<1x12xf32>
    %1144 = vector.broadcast %1143 : vector<1x12xf32> to vector<8x12xf32>
    %1145 = arith.select %1142, %1144, %1137 : vector<8x12xi1>, vector<8x12xf32>
    %c7_i32_174 = arith.constant 7 : i32
    %1146 = vector.broadcast %c7_i32_174 : i32 to vector<8x1xi32>
    %1147 = arith.cmpi eq, %1088, %1146 : vector<8x1xi32>
    %1148 = vector.extract_strided_slice %0 {offsets = [7, 0], sizes = [1, 12], strides = [1, 1]} : vector<12x12xf32> to vector<1x12xf32>
    %1149 = vector.shape_cast %1147 : vector<8x1xi1> to vector<8x1xi1>
    %1150 = vector.broadcast %1149 : vector<8x1xi1> to vector<8x12xi1>
    %1151 = vector.shape_cast %1148 : vector<1x12xf32> to vector<1x12xf32>
    %1152 = vector.broadcast %1151 : vector<1x12xf32> to vector<8x12xf32>
    %1153 = arith.select %1150, %1152, %1145 : vector<8x12xi1>, vector<8x12xf32>
    %c8_i32_175 = arith.constant 8 : i32
    %1154 = vector.broadcast %c8_i32_175 : i32 to vector<8x1xi32>
    %1155 = arith.cmpi eq, %1088, %1154 : vector<8x1xi32>
    %1156 = vector.extract_strided_slice %0 {offsets = [8, 0], sizes = [1, 12], strides = [1, 1]} : vector<12x12xf32> to vector<1x12xf32>
    %1157 = vector.shape_cast %1155 : vector<8x1xi1> to vector<8x1xi1>
    %1158 = vector.broadcast %1157 : vector<8x1xi1> to vector<8x12xi1>
    %1159 = vector.shape_cast %1156 : vector<1x12xf32> to vector<1x12xf32>
    %1160 = vector.broadcast %1159 : vector<1x12xf32> to vector<8x12xf32>
    %1161 = arith.select %1158, %1160, %1153 : vector<8x12xi1>, vector<8x12xf32>
    %c9_i32_176 = arith.constant 9 : i32
    %1162 = vector.broadcast %c9_i32_176 : i32 to vector<8x1xi32>
    %1163 = arith.cmpi eq, %1088, %1162 : vector<8x1xi32>
    %1164 = vector.extract_strided_slice %0 {offsets = [9, 0], sizes = [1, 12], strides = [1, 1]} : vector<12x12xf32> to vector<1x12xf32>
    %1165 = vector.shape_cast %1163 : vector<8x1xi1> to vector<8x1xi1>
    %1166 = vector.broadcast %1165 : vector<8x1xi1> to vector<8x12xi1>
    %1167 = vector.shape_cast %1164 : vector<1x12xf32> to vector<1x12xf32>
    %1168 = vector.broadcast %1167 : vector<1x12xf32> to vector<8x12xf32>
    %1169 = arith.select %1166, %1168, %1161 : vector<8x12xi1>, vector<8x12xf32>
    %c10_i32_177 = arith.constant 10 : i32
    %1170 = vector.broadcast %c10_i32_177 : i32 to vector<8x1xi32>
    %1171 = arith.cmpi eq, %1088, %1170 : vector<8x1xi32>
    %1172 = vector.extract_strided_slice %0 {offsets = [10, 0], sizes = [1, 12], strides = [1, 1]} : vector<12x12xf32> to vector<1x12xf32>
    %1173 = vector.shape_cast %1171 : vector<8x1xi1> to vector<8x1xi1>
    %1174 = vector.broadcast %1173 : vector<8x1xi1> to vector<8x12xi1>
    %1175 = vector.shape_cast %1172 : vector<1x12xf32> to vector<1x12xf32>
    %1176 = vector.broadcast %1175 : vector<1x12xf32> to vector<8x12xf32>
    %1177 = arith.select %1174, %1176, %1169 : vector<8x12xi1>, vector<8x12xf32>
    %c11_i32_178 = arith.constant 11 : i32
    %1178 = vector.broadcast %c11_i32_178 : i32 to vector<8x1xi32>
    %1179 = arith.cmpi eq, %1088, %1178 : vector<8x1xi32>
    %1180 = vector.extract_strided_slice %0 {offsets = [11, 0], sizes = [1, 12], strides = [1, 1]} : vector<12x12xf32> to vector<1x12xf32>
    %1181 = vector.shape_cast %1179 : vector<8x1xi1> to vector<8x1xi1>
    %1182 = vector.broadcast %1181 : vector<8x1xi1> to vector<8x12xi1>
    %1183 = vector.shape_cast %1180 : vector<1x12xf32> to vector<1x12xf32>
    %1184 = vector.broadcast %1183 : vector<1x12xf32> to vector<8x12xf32>
    %1185 = arith.select %1182, %1184, %1177 : vector<8x12xi1>, vector<8x12xf32>
    %c10 = arith.constant 10 : index
    %c0_179 = arith.constant 0 : index
    %c0_180 = arith.constant 0 : index
    %1186 = vector.load %arg2[%c10, %c0_179, %c0_180] : memref<12x8x12xf32, #tpu.memory_space<vmem>>, vector<1x8x12xf32>
    %1187 = vector.shape_cast %1186 : vector<1x8x12xf32> to vector<8x12xf32>
    %1188 = arith.addf %1185, %1187 : vector<8x12xf32>
    %1189 = tpu.iota {dimensions = array<i32: 1>} : vector<8x12xi32>
    %cst_181 = arith.constant dense<0xFF800000> : vector<8xf32>
    %1190 = vector.multi_reduction <maximumf>, %1188, %cst_181 [1] : vector<8x12xf32> to vector<8xf32>
    %1191 = vector.shape_cast %1190 : vector<8xf32> to vector<8x1xf32>
    %1192 = vector.broadcast %1191 : vector<8x1xf32> to vector<8x12xf32>
    %1193 = arith.cmpf oeq, %1188, %1192 : vector<8x12xf32>
    %c12_i32_182 = arith.constant 12 : i32
    %1194 = vector.broadcast %c12_i32_182 : i32 to vector<8x12xi32>
    %1195 = arith.select %1193, %1189, %1194 : vector<8x12xi1>, vector<8x12xi32>
    %cst_183 = arith.constant dense<2147483647> : vector<8xi32>
    %1196 = vector.multi_reduction <minsi>, %1195, %cst_183 [1] : vector<8x12xi32> to vector<8xi32>
    %1197 = vector.shape_cast %1196 : vector<8xi32> to vector<8x1xi32>
    %1198 = vector.broadcast %1197 : vector<8x1xi32> to vector<8x12xi32>
    %1199 = arith.cmpi eq, %1189, %1198 : vector<8x12xi32>
    %1200 = arith.extui %1199 : vector<8x12xi1> to vector<8x12xi32>
    %1201 = arith.sitofp %1200 : vector<8x12xi32> to vector<8x12xf32>
    %c11_i32_184 = arith.constant 11 : i32
    %1202 = vector.broadcast %c11_i32_184 : i32 to vector<8x1xi32>
    %1203 = arith.cmpi ne, %1088, %1202 : vector<8x1xi32>
    %1204 = vector.shape_cast %1203 : vector<8x1xi1> to vector<8x1xi1>
    %1205 = vector.broadcast %1204 : vector<8x1xi1> to vector<8x12xi1>
    %1206 = arith.select %1205, %1201, %1087 : vector<8x12xi1>, vector<8x12xf32>
    %1207 = arith.select %1203, %1197, %1088 : vector<8x1xi1>, vector<8x1xi32>
    %cst_185 = arith.constant 0.000000e+00 : f32
    %1208 = vector.broadcast %cst_185 : f32 to vector<8x12xf32>
    %c0_i32_186 = arith.constant 0 : i32
    %1209 = vector.broadcast %c0_i32_186 : i32 to vector<8x1xi32>
    %1210 = arith.cmpi eq, %1207, %1209 : vector<8x1xi32>
    %1211 = vector.extract_strided_slice %0 {offsets = [0, 0], sizes = [1, 12], strides = [1, 1]} : vector<12x12xf32> to vector<1x12xf32>
    %1212 = vector.shape_cast %1210 : vector<8x1xi1> to vector<8x1xi1>
    %1213 = vector.broadcast %1212 : vector<8x1xi1> to vector<8x12xi1>
    %1214 = vector.shape_cast %1211 : vector<1x12xf32> to vector<1x12xf32>
    %1215 = vector.broadcast %1214 : vector<1x12xf32> to vector<8x12xf32>
    %1216 = arith.select %1213, %1215, %1208 : vector<8x12xi1>, vector<8x12xf32>
    %c1_i32_187 = arith.constant 1 : i32
    %1217 = vector.broadcast %c1_i32_187 : i32 to vector<8x1xi32>
    %1218 = arith.cmpi eq, %1207, %1217 : vector<8x1xi32>
    %1219 = vector.extract_strided_slice %0 {offsets = [1, 0], sizes = [1, 12], strides = [1, 1]} : vector<12x12xf32> to vector<1x12xf32>
    %1220 = vector.shape_cast %1218 : vector<8x1xi1> to vector<8x1xi1>
    %1221 = vector.broadcast %1220 : vector<8x1xi1> to vector<8x12xi1>
    %1222 = vector.shape_cast %1219 : vector<1x12xf32> to vector<1x12xf32>
    %1223 = vector.broadcast %1222 : vector<1x12xf32> to vector<8x12xf32>
    %1224 = arith.select %1221, %1223, %1216 : vector<8x12xi1>, vector<8x12xf32>
    %c2_i32_188 = arith.constant 2 : i32
    %1225 = vector.broadcast %c2_i32_188 : i32 to vector<8x1xi32>
    %1226 = arith.cmpi eq, %1207, %1225 : vector<8x1xi32>
    %1227 = vector.extract_strided_slice %0 {offsets = [2, 0], sizes = [1, 12], strides = [1, 1]} : vector<12x12xf32> to vector<1x12xf32>
    %1228 = vector.shape_cast %1226 : vector<8x1xi1> to vector<8x1xi1>
    %1229 = vector.broadcast %1228 : vector<8x1xi1> to vector<8x12xi1>
    %1230 = vector.shape_cast %1227 : vector<1x12xf32> to vector<1x12xf32>
    %1231 = vector.broadcast %1230 : vector<1x12xf32> to vector<8x12xf32>
    %1232 = arith.select %1229, %1231, %1224 : vector<8x12xi1>, vector<8x12xf32>
    %c3_i32_189 = arith.constant 3 : i32
    %1233 = vector.broadcast %c3_i32_189 : i32 to vector<8x1xi32>
    %1234 = arith.cmpi eq, %1207, %1233 : vector<8x1xi32>
    %1235 = vector.extract_strided_slice %0 {offsets = [3, 0], sizes = [1, 12], strides = [1, 1]} : vector<12x12xf32> to vector<1x12xf32>
    %1236 = vector.shape_cast %1234 : vector<8x1xi1> to vector<8x1xi1>
    %1237 = vector.broadcast %1236 : vector<8x1xi1> to vector<8x12xi1>
    %1238 = vector.shape_cast %1235 : vector<1x12xf32> to vector<1x12xf32>
    %1239 = vector.broadcast %1238 : vector<1x12xf32> to vector<8x12xf32>
    %1240 = arith.select %1237, %1239, %1232 : vector<8x12xi1>, vector<8x12xf32>
    %c4_i32_190 = arith.constant 4 : i32
    %1241 = vector.broadcast %c4_i32_190 : i32 to vector<8x1xi32>
    %1242 = arith.cmpi eq, %1207, %1241 : vector<8x1xi32>
    %1243 = vector.extract_strided_slice %0 {offsets = [4, 0], sizes = [1, 12], strides = [1, 1]} : vector<12x12xf32> to vector<1x12xf32>
    %1244 = vector.shape_cast %1242 : vector<8x1xi1> to vector<8x1xi1>
    %1245 = vector.broadcast %1244 : vector<8x1xi1> to vector<8x12xi1>
    %1246 = vector.shape_cast %1243 : vector<1x12xf32> to vector<1x12xf32>
    %1247 = vector.broadcast %1246 : vector<1x12xf32> to vector<8x12xf32>
    %1248 = arith.select %1245, %1247, %1240 : vector<8x12xi1>, vector<8x12xf32>
    %c5_i32_191 = arith.constant 5 : i32
    %1249 = vector.broadcast %c5_i32_191 : i32 to vector<8x1xi32>
    %1250 = arith.cmpi eq, %1207, %1249 : vector<8x1xi32>
    %1251 = vector.extract_strided_slice %0 {offsets = [5, 0], sizes = [1, 12], strides = [1, 1]} : vector<12x12xf32> to vector<1x12xf32>
    %1252 = vector.shape_cast %1250 : vector<8x1xi1> to vector<8x1xi1>
    %1253 = vector.broadcast %1252 : vector<8x1xi1> to vector<8x12xi1>
    %1254 = vector.shape_cast %1251 : vector<1x12xf32> to vector<1x12xf32>
    %1255 = vector.broadcast %1254 : vector<1x12xf32> to vector<8x12xf32>
    %1256 = arith.select %1253, %1255, %1248 : vector<8x12xi1>, vector<8x12xf32>
    %c6_i32_192 = arith.constant 6 : i32
    %1257 = vector.broadcast %c6_i32_192 : i32 to vector<8x1xi32>
    %1258 = arith.cmpi eq, %1207, %1257 : vector<8x1xi32>
    %1259 = vector.extract_strided_slice %0 {offsets = [6, 0], sizes = [1, 12], strides = [1, 1]} : vector<12x12xf32> to vector<1x12xf32>
    %1260 = vector.shape_cast %1258 : vector<8x1xi1> to vector<8x1xi1>
    %1261 = vector.broadcast %1260 : vector<8x1xi1> to vector<8x12xi1>
    %1262 = vector.shape_cast %1259 : vector<1x12xf32> to vector<1x12xf32>
    %1263 = vector.broadcast %1262 : vector<1x12xf32> to vector<8x12xf32>
    %1264 = arith.select %1261, %1263, %1256 : vector<8x12xi1>, vector<8x12xf32>
    %c7_i32_193 = arith.constant 7 : i32
    %1265 = vector.broadcast %c7_i32_193 : i32 to vector<8x1xi32>
    %1266 = arith.cmpi eq, %1207, %1265 : vector<8x1xi32>
    %1267 = vector.extract_strided_slice %0 {offsets = [7, 0], sizes = [1, 12], strides = [1, 1]} : vector<12x12xf32> to vector<1x12xf32>
    %1268 = vector.shape_cast %1266 : vector<8x1xi1> to vector<8x1xi1>
    %1269 = vector.broadcast %1268 : vector<8x1xi1> to vector<8x12xi1>
    %1270 = vector.shape_cast %1267 : vector<1x12xf32> to vector<1x12xf32>
    %1271 = vector.broadcast %1270 : vector<1x12xf32> to vector<8x12xf32>
    %1272 = arith.select %1269, %1271, %1264 : vector<8x12xi1>, vector<8x12xf32>
    %c8_i32_194 = arith.constant 8 : i32
    %1273 = vector.broadcast %c8_i32_194 : i32 to vector<8x1xi32>
    %1274 = arith.cmpi eq, %1207, %1273 : vector<8x1xi32>
    %1275 = vector.extract_strided_slice %0 {offsets = [8, 0], sizes = [1, 12], strides = [1, 1]} : vector<12x12xf32> to vector<1x12xf32>
    %1276 = vector.shape_cast %1274 : vector<8x1xi1> to vector<8x1xi1>
    %1277 = vector.broadcast %1276 : vector<8x1xi1> to vector<8x12xi1>
    %1278 = vector.shape_cast %1275 : vector<1x12xf32> to vector<1x12xf32>
    %1279 = vector.broadcast %1278 : vector<1x12xf32> to vector<8x12xf32>
    %1280 = arith.select %1277, %1279, %1272 : vector<8x12xi1>, vector<8x12xf32>
    %c9_i32_195 = arith.constant 9 : i32
    %1281 = vector.broadcast %c9_i32_195 : i32 to vector<8x1xi32>
    %1282 = arith.cmpi eq, %1207, %1281 : vector<8x1xi32>
    %1283 = vector.extract_strided_slice %0 {offsets = [9, 0], sizes = [1, 12], strides = [1, 1]} : vector<12x12xf32> to vector<1x12xf32>
    %1284 = vector.shape_cast %1282 : vector<8x1xi1> to vector<8x1xi1>
    %1285 = vector.broadcast %1284 : vector<8x1xi1> to vector<8x12xi1>
    %1286 = vector.shape_cast %1283 : vector<1x12xf32> to vector<1x12xf32>
    %1287 = vector.broadcast %1286 : vector<1x12xf32> to vector<8x12xf32>
    %1288 = arith.select %1285, %1287, %1280 : vector<8x12xi1>, vector<8x12xf32>
    %c10_i32_196 = arith.constant 10 : i32
    %1289 = vector.broadcast %c10_i32_196 : i32 to vector<8x1xi32>
    %1290 = arith.cmpi eq, %1207, %1289 : vector<8x1xi32>
    %1291 = vector.extract_strided_slice %0 {offsets = [10, 0], sizes = [1, 12], strides = [1, 1]} : vector<12x12xf32> to vector<1x12xf32>
    %1292 = vector.shape_cast %1290 : vector<8x1xi1> to vector<8x1xi1>
    %1293 = vector.broadcast %1292 : vector<8x1xi1> to vector<8x12xi1>
    %1294 = vector.shape_cast %1291 : vector<1x12xf32> to vector<1x12xf32>
    %1295 = vector.broadcast %1294 : vector<1x12xf32> to vector<8x12xf32>
    %1296 = arith.select %1293, %1295, %1288 : vector<8x12xi1>, vector<8x12xf32>
    %c11_i32_197 = arith.constant 11 : i32
    %1297 = vector.broadcast %c11_i32_197 : i32 to vector<8x1xi32>
    %1298 = arith.cmpi eq, %1207, %1297 : vector<8x1xi32>
    %1299 = vector.extract_strided_slice %0 {offsets = [11, 0], sizes = [1, 12], strides = [1, 1]} : vector<12x12xf32> to vector<1x12xf32>
    %1300 = vector.shape_cast %1298 : vector<8x1xi1> to vector<8x1xi1>
    %1301 = vector.broadcast %1300 : vector<8x1xi1> to vector<8x12xi1>
    %1302 = vector.shape_cast %1299 : vector<1x12xf32> to vector<1x12xf32>
    %1303 = vector.broadcast %1302 : vector<1x12xf32> to vector<8x12xf32>
    %1304 = arith.select %1301, %1303, %1296 : vector<8x12xi1>, vector<8x12xf32>
    %c11 = arith.constant 11 : index
    %c0_198 = arith.constant 0 : index
    %c0_199 = arith.constant 0 : index
    %1305 = vector.load %arg2[%c11, %c0_198, %c0_199] : memref<12x8x12xf32, #tpu.memory_space<vmem>>, vector<1x8x12xf32>
    %1306 = vector.shape_cast %1305 : vector<1x8x12xf32> to vector<8x12xf32>
    %1307 = arith.addf %1304, %1306 : vector<8x12xf32>
    %1308 = tpu.iota {dimensions = array<i32: 1>} : vector<8x12xi32>
    %cst_200 = arith.constant dense<0xFF800000> : vector<8xf32>
    %1309 = vector.multi_reduction <maximumf>, %1307, %cst_200 [1] : vector<8x12xf32> to vector<8xf32>
    %1310 = vector.shape_cast %1309 : vector<8xf32> to vector<8x1xf32>
    %1311 = vector.broadcast %1310 : vector<8x1xf32> to vector<8x12xf32>
    %1312 = arith.cmpf oeq, %1307, %1311 : vector<8x12xf32>
    %c12_i32_201 = arith.constant 12 : i32
    %1313 = vector.broadcast %c12_i32_201 : i32 to vector<8x12xi32>
    %1314 = arith.select %1312, %1308, %1313 : vector<8x12xi1>, vector<8x12xi32>
    %cst_202 = arith.constant dense<2147483647> : vector<8xi32>
    %1315 = vector.multi_reduction <minsi>, %1314, %cst_202 [1] : vector<8x12xi32> to vector<8xi32>
    %1316 = vector.shape_cast %1315 : vector<8xi32> to vector<8x1xi32>
    %1317 = vector.broadcast %1316 : vector<8x1xi32> to vector<8x12xi32>
    %1318 = arith.cmpi eq, %1308, %1317 : vector<8x12xi32>
    %1319 = arith.extui %1318 : vector<8x12xi1> to vector<8x12xi32>
    %1320 = arith.sitofp %1319 : vector<8x12xi32> to vector<8x12xf32>
    %c11_i32_203 = arith.constant 11 : i32
    %1321 = vector.broadcast %c11_i32_203 : i32 to vector<8x1xi32>
    %1322 = arith.cmpi ne, %1207, %1321 : vector<8x1xi32>
    %1323 = vector.shape_cast %1322 : vector<8x1xi1> to vector<8x1xi1>
    %1324 = vector.broadcast %1323 : vector<8x1xi1> to vector<8x12xi1>
    %1325 = arith.select %1324, %1320, %1206 : vector<8x12xi1>, vector<8x12xf32>
    %c0_204 = arith.constant 0 : index
    %c0_205 = arith.constant 0 : index
    %1326 = vector.load %arg4[%c0_204, %c0_205] : memref<12x512xbf16, #tpu.memory_space<vmem>>, vector<12x512xbf16>
    %c0_206 = arith.constant 0 : index
    %c0_207 = arith.constant 0 : index
    %1327 = vector.load %arg5[%c0_206, %c0_207] : memref<128x512xbf16, #tpu.memory_space<vmem>>, vector<128x512xbf16>
    %1328 = arith.truncf %1325 : vector<8x12xf32> to vector<8x12xbf16>
    %cst_208 = arith.constant dense<0.000000e+00> : vector<8x512xf32>
    %1329 = tpu.matmul %1328, %1326, %cst_208 {dimension_numbers = #tpu.dot_dimension_numbers<[1], [0], [0], [1], [0, 0, 1, 1], [], []>} : vector<8x12xbf16>, vector<12x512xbf16>, vector<8x512xf32> -> vector<8x512xf32>
    %c0_209 = arith.constant 0 : index
    %c0_210 = arith.constant 0 : index
    %1330 = vector.load %arg6[%c0_209, %c0_210] : memref<1x512xf32, #tpu.memory_space<vmem>>, vector<1x512xf32>
    %1331 = vector.broadcast %1330 : vector<1x512xf32> to vector<8x512xf32>
    %1332 = arith.addf %1329, %1331 : vector<8x512xf32>
    %cst_211 = arith.constant 0.000000e+00 : f32
    %1333 = vector.broadcast %cst_211 : f32 to vector<1x128xf32>
    %cst_212 = arith.constant 0.000000e+00 : f32
    %1334 = vector.broadcast %cst_212 : f32 to vector<1x128xf32>
    %1335 = vector.extract_strided_slice %1332 {offsets = [0, 0], sizes = [1, 512], strides = [1, 1]} : vector<8x512xf32> to vector<1x512xf32>
    %1336 = arith.truncf %1333 : vector<1x128xf32> to vector<1x128xbf16>
    %cst_213 = arith.constant dense<0.000000e+00> : vector<1x512xf32>
    %1337 = tpu.matmul %1336, %1327, %cst_213 {dimension_numbers = #tpu.dot_dimension_numbers<[1], [0], [0], [1], [0, 0, 1, 1], [], []>} : vector<1x128xbf16>, vector<128x512xbf16>, vector<1x512xf32> -> vector<1x512xf32>
    %1338 = arith.addf %1335, %1337 : vector<1x512xf32>
    %1339 = vector.extract_strided_slice %1338 {offsets = [0, 0], sizes = [1, 128], strides = [1, 1]} : vector<1x512xf32> to vector<1x128xf32>
    %1340 = arith.negf %1339 : vector<1x128xf32>
    %1341 = math.exp %1340 : vector<1x128xf32>
    %cst_214 = arith.constant 1.000000e+00 : f32
    %1342 = vector.broadcast %cst_214 : f32 to vector<1x128xf32>
    %1343 = arith.addf %1342, %1341 : vector<1x128xf32>
    %1344 = arith.divf %1342, %1343 : vector<1x128xf32>
    %1345 = vector.extract_strided_slice %1338 {offsets = [0, 128], sizes = [1, 128], strides = [1, 1]} : vector<1x512xf32> to vector<1x128xf32>
    %1346 = arith.negf %1345 : vector<1x128xf32>
    %1347 = math.exp %1346 : vector<1x128xf32>
    %cst_215 = arith.constant 1.000000e+00 : f32
    %1348 = vector.broadcast %cst_215 : f32 to vector<1x128xf32>
    %1349 = arith.addf %1348, %1347 : vector<1x128xf32>
    %1350 = arith.divf %1348, %1349 : vector<1x128xf32>
    %1351 = vector.extract_strided_slice %1338 {offsets = [0, 256], sizes = [1, 128], strides = [1, 1]} : vector<1x512xf32> to vector<1x128xf32>
    %1352 = math.tanh %1351 : vector<1x128xf32>
    %1353 = vector.extract_strided_slice %1338 {offsets = [0, 384], sizes = [1, 128], strides = [1, 1]} : vector<1x512xf32> to vector<1x128xf32>
    %1354 = arith.negf %1353 : vector<1x128xf32>
    %1355 = math.exp %1354 : vector<1x128xf32>
    %cst_216 = arith.constant 1.000000e+00 : f32
    %1356 = vector.broadcast %cst_216 : f32 to vector<1x128xf32>
    %1357 = arith.addf %1356, %1355 : vector<1x128xf32>
    %1358 = arith.divf %1356, %1357 : vector<1x128xf32>
    %1359 = arith.mulf %1350, %1334 : vector<1x128xf32>
    %1360 = arith.mulf %1344, %1352 : vector<1x128xf32>
    %1361 = arith.addf %1359, %1360 : vector<1x128xf32>
    %1362 = math.tanh %1361 : vector<1x128xf32>
    %1363 = arith.mulf %1358, %1362 : vector<1x128xf32>
    %c0_217 = arith.constant 0 : index
    %c0_218 = arith.constant 0 : index
    %1364 = vector.load %arg7[%c0_217, %c0_218] : memref<8x128xf32, #tpu.memory_space<vmem>>, vector<1x128xf32>
    tpu.vector_store %arg7[%c0_217, %c0_218], %1363 {strides = array<i32>} : memref<8x128xf32, #tpu.memory_space<vmem>>, vector<1x128xf32>,
    %1365 = vector.extract_strided_slice %1332 {offsets = [1, 0], sizes = [1, 512], strides = [1, 1]} : vector<8x512xf32> to vector<1x512xf32>
    %1366 = arith.truncf %1363 : vector<1x128xf32> to vector<1x128xbf16>
    %cst_219 = arith.constant dense<0.000000e+00> : vector<1x512xf32>
    %1367 = tpu.matmul %1366, %1327, %cst_219 {dimension_numbers = #tpu.dot_dimension_numbers<[1], [0], [0], [1], [0, 0, 1, 1], [], []>} : vector<1x128xbf16>, vector<128x512xbf16>, vector<1x512xf32> -> vector<1x512xf32>
    %1368 = arith.addf %1365, %1367 : vector<1x512xf32>
    %1369 = vector.extract_strided_slice %1368 {offsets = [0, 0], sizes = [1, 128], strides = [1, 1]} : vector<1x512xf32> to vector<1x128xf32>
    %1370 = arith.negf %1369 : vector<1x128xf32>
    %1371 = math.exp %1370 : vector<1x128xf32>
    %cst_220 = arith.constant 1.000000e+00 : f32
    %1372 = vector.broadcast %cst_220 : f32 to vector<1x128xf32>
    %1373 = arith.addf %1372, %1371 : vector<1x128xf32>
    %1374 = arith.divf %1372, %1373 : vector<1x128xf32>
    %1375 = vector.extract_strided_slice %1368 {offsets = [0, 128], sizes = [1, 128], strides = [1, 1]} : vector<1x512xf32> to vector<1x128xf32>
    %1376 = arith.negf %1375 : vector<1x128xf32>
    %1377 = math.exp %1376 : vector<1x128xf32>
    %cst_221 = arith.constant 1.000000e+00 : f32
    %1378 = vector.broadcast %cst_221 : f32 to vector<1x128xf32>
    %1379 = arith.addf %1378, %1377 : vector<1x128xf32>
    %1380 = arith.divf %1378, %1379 : vector<1x128xf32>
    %1381 = vector.extract_strided_slice %1368 {offsets = [0, 256], sizes = [1, 128], strides = [1, 1]} : vector<1x512xf32> to vector<1x128xf32>
    %1382 = math.tanh %1381 : vector<1x128xf32>
    %1383 = vector.extract_strided_slice %1368 {offsets = [0, 384], sizes = [1, 128], strides = [1, 1]} : vector<1x512xf32> to vector<1x128xf32>
    %1384 = arith.negf %1383 : vector<1x128xf32>
    %1385 = math.exp %1384 : vector<1x128xf32>
    %cst_222 = arith.constant 1.000000e+00 : f32
    %1386 = vector.broadcast %cst_222 : f32 to vector<1x128xf32>
    %1387 = arith.addf %1386, %1385 : vector<1x128xf32>
    %1388 = arith.divf %1386, %1387 : vector<1x128xf32>
    %1389 = arith.mulf %1380, %1361 : vector<1x128xf32>
    %1390 = arith.mulf %1374, %1382 : vector<1x128xf32>
    %1391 = arith.addf %1389, %1390 : vector<1x128xf32>
    %1392 = math.tanh %1391 : vector<1x128xf32>
    %1393 = arith.mulf %1388, %1392 : vector<1x128xf32>
    %c1_223 = arith.constant 1 : index
    %c0_224 = arith.constant 0 : index
    %1394 = vector.load %arg7[%c1_223, %c0_224] : memref<8x128xf32, #tpu.memory_space<vmem>>, vector<1x128xf32>
    tpu.vector_store %arg7[%c1_223, %c0_224], %1393 {strides = array<i32>} : memref<8x128xf32, #tpu.memory_space<vmem>>, vector<1x128xf32>,
    %1395 = vector.extract_strided_slice %1332 {offsets = [2, 0], sizes = [1, 512], strides = [1, 1]} : vector<8x512xf32> to vector<1x512xf32>
    %1396 = arith.truncf %1393 : vector<1x128xf32> to vector<1x128xbf16>
    %cst_225 = arith.constant dense<0.000000e+00> : vector<1x512xf32>
    %1397 = tpu.matmul %1396, %1327, %cst_225 {dimension_numbers = #tpu.dot_dimension_numbers<[1], [0], [0], [1], [0, 0, 1, 1], [], []>} : vector<1x128xbf16>, vector<128x512xbf16>, vector<1x512xf32> -> vector<1x512xf32>
    %1398 = arith.addf %1395, %1397 : vector<1x512xf32>
    %1399 = vector.extract_strided_slice %1398 {offsets = [0, 0], sizes = [1, 128], strides = [1, 1]} : vector<1x512xf32> to vector<1x128xf32>
    %1400 = arith.negf %1399 : vector<1x128xf32>
    %1401 = math.exp %1400 : vector<1x128xf32>
    %cst_226 = arith.constant 1.000000e+00 : f32
    %1402 = vector.broadcast %cst_226 : f32 to vector<1x128xf32>
    %1403 = arith.addf %1402, %1401 : vector<1x128xf32>
    %1404 = arith.divf %1402, %1403 : vector<1x128xf32>
    %1405 = vector.extract_strided_slice %1398 {offsets = [0, 128], sizes = [1, 128], strides = [1, 1]} : vector<1x512xf32> to vector<1x128xf32>
    %1406 = arith.negf %1405 : vector<1x128xf32>
    %1407 = math.exp %1406 : vector<1x128xf32>
    %cst_227 = arith.constant 1.000000e+00 : f32
    %1408 = vector.broadcast %cst_227 : f32 to vector<1x128xf32>
    %1409 = arith.addf %1408, %1407 : vector<1x128xf32>
    %1410 = arith.divf %1408, %1409 : vector<1x128xf32>
    %1411 = vector.extract_strided_slice %1398 {offsets = [0, 256], sizes = [1, 128], strides = [1, 1]} : vector<1x512xf32> to vector<1x128xf32>
    %1412 = math.tanh %1411 : vector<1x128xf32>
    %1413 = vector.extract_strided_slice %1398 {offsets = [0, 384], sizes = [1, 128], strides = [1, 1]} : vector<1x512xf32> to vector<1x128xf32>
    %1414 = arith.negf %1413 : vector<1x128xf32>
    %1415 = math.exp %1414 : vector<1x128xf32>
    %cst_228 = arith.constant 1.000000e+00 : f32
    %1416 = vector.broadcast %cst_228 : f32 to vector<1x128xf32>
    %1417 = arith.addf %1416, %1415 : vector<1x128xf32>
    %1418 = arith.divf %1416, %1417 : vector<1x128xf32>
    %1419 = arith.mulf %1410, %1391 : vector<1x128xf32>
    %1420 = arith.mulf %1404, %1412 : vector<1x128xf32>
    %1421 = arith.addf %1419, %1420 : vector<1x128xf32>
    %1422 = math.tanh %1421 : vector<1x128xf32>
    %1423 = arith.mulf %1418, %1422 : vector<1x128xf32>
    %c2_229 = arith.constant 2 : index
    %c0_230 = arith.constant 0 : index
    %1424 = vector.load %arg7[%c2_229, %c0_230] : memref<8x128xf32, #tpu.memory_space<vmem>>, vector<1x128xf32>
    tpu.vector_store %arg7[%c2_229, %c0_230], %1423 {strides = array<i32>} : memref<8x128xf32, #tpu.memory_space<vmem>>, vector<1x128xf32>,
    %1425 = vector.extract_strided_slice %1332 {offsets = [3, 0], sizes = [1, 512], strides = [1, 1]} : vector<8x512xf32> to vector<1x512xf32>
    %1426 = arith.truncf %1423 : vector<1x128xf32> to vector<1x128xbf16>
    %cst_231 = arith.constant dense<0.000000e+00> : vector<1x512xf32>
    %1427 = tpu.matmul %1426, %1327, %cst_231 {dimension_numbers = #tpu.dot_dimension_numbers<[1], [0], [0], [1], [0, 0, 1, 1], [], []>} : vector<1x128xbf16>, vector<128x512xbf16>, vector<1x512xf32> -> vector<1x512xf32>
    %1428 = arith.addf %1425, %1427 : vector<1x512xf32>
    %1429 = vector.extract_strided_slice %1428 {offsets = [0, 0], sizes = [1, 128], strides = [1, 1]} : vector<1x512xf32> to vector<1x128xf32>
    %1430 = arith.negf %1429 : vector<1x128xf32>
    %1431 = math.exp %1430 : vector<1x128xf32>
    %cst_232 = arith.constant 1.000000e+00 : f32
    %1432 = vector.broadcast %cst_232 : f32 to vector<1x128xf32>
    %1433 = arith.addf %1432, %1431 : vector<1x128xf32>
    %1434 = arith.divf %1432, %1433 : vector<1x128xf32>
    %1435 = vector.extract_strided_slice %1428 {offsets = [0, 128], sizes = [1, 128], strides = [1, 1]} : vector<1x512xf32> to vector<1x128xf32>
    %1436 = arith.negf %1435 : vector<1x128xf32>
    %1437 = math.exp %1436 : vector<1x128xf32>
    %cst_233 = arith.constant 1.000000e+00 : f32
    %1438 = vector.broadcast %cst_233 : f32 to vector<1x128xf32>
    %1439 = arith.addf %1438, %1437 : vector<1x128xf32>
    %1440 = arith.divf %1438, %1439 : vector<1x128xf32>
    %1441 = vector.extract_strided_slice %1428 {offsets = [0, 256], sizes = [1, 128], strides = [1, 1]} : vector<1x512xf32> to vector<1x128xf32>
    %1442 = math.tanh %1441 : vector<1x128xf32>
    %1443 = vector.extract_strided_slice %1428 {offsets = [0, 384], sizes = [1, 128], strides = [1, 1]} : vector<1x512xf32> to vector<1x128xf32>
    %1444 = arith.negf %1443 : vector<1x128xf32>
    %1445 = math.exp %1444 : vector<1x128xf32>
    %cst_234 = arith.constant 1.000000e+00 : f32
    %1446 = vector.broadcast %cst_234 : f32 to vector<1x128xf32>
    %1447 = arith.addf %1446, %1445 : vector<1x128xf32>
    %1448 = arith.divf %1446, %1447 : vector<1x128xf32>
    %1449 = arith.mulf %1440, %1421 : vector<1x128xf32>
    %1450 = arith.mulf %1434, %1442 : vector<1x128xf32>
    %1451 = arith.addf %1449, %1450 : vector<1x128xf32>
    %1452 = math.tanh %1451 : vector<1x128xf32>
    %1453 = arith.mulf %1448, %1452 : vector<1x128xf32>
    %c3_235 = arith.constant 3 : index
    %c0_236 = arith.constant 0 : index
    %1454 = vector.load %arg7[%c3_235, %c0_236] : memref<8x128xf32, #tpu.memory_space<vmem>>, vector<1x128xf32>
    tpu.vector_store %arg7[%c3_235, %c0_236], %1453 {strides = array<i32>} : memref<8x128xf32, #tpu.memory_space<vmem>>, vector<1x128xf32>,
    %1455 = vector.extract_strided_slice %1332 {offsets = [4, 0], sizes = [1, 512], strides = [1, 1]} : vector<8x512xf32> to vector<1x512xf32>
    %1456 = arith.truncf %1453 : vector<1x128xf32> to vector<1x128xbf16>
    %cst_237 = arith.constant dense<0.000000e+00> : vector<1x512xf32>
    %1457 = tpu.matmul %1456, %1327, %cst_237 {dimension_numbers = #tpu.dot_dimension_numbers<[1], [0], [0], [1], [0, 0, 1, 1], [], []>} : vector<1x128xbf16>, vector<128x512xbf16>, vector<1x512xf32> -> vector<1x512xf32>
    %1458 = arith.addf %1455, %1457 : vector<1x512xf32>
    %1459 = vector.extract_strided_slice %1458 {offsets = [0, 0], sizes = [1, 128], strides = [1, 1]} : vector<1x512xf32> to vector<1x128xf32>
    %1460 = arith.negf %1459 : vector<1x128xf32>
    %1461 = math.exp %1460 : vector<1x128xf32>
    %cst_238 = arith.constant 1.000000e+00 : f32
    %1462 = vector.broadcast %cst_238 : f32 to vector<1x128xf32>
    %1463 = arith.addf %1462, %1461 : vector<1x128xf32>
    %1464 = arith.divf %1462, %1463 : vector<1x128xf32>
    %1465 = vector.extract_strided_slice %1458 {offsets = [0, 128], sizes = [1, 128], strides = [1, 1]} : vector<1x512xf32> to vector<1x128xf32>
    %1466 = arith.negf %1465 : vector<1x128xf32>
    %1467 = math.exp %1466 : vector<1x128xf32>
    %cst_239 = arith.constant 1.000000e+00 : f32
    %1468 = vector.broadcast %cst_239 : f32 to vector<1x128xf32>
    %1469 = arith.addf %1468, %1467 : vector<1x128xf32>
    %1470 = arith.divf %1468, %1469 : vector<1x128xf32>
    %1471 = vector.extract_strided_slice %1458 {offsets = [0, 256], sizes = [1, 128], strides = [1, 1]} : vector<1x512xf32> to vector<1x128xf32>
    %1472 = math.tanh %1471 : vector<1x128xf32>
    %1473 = vector.extract_strided_slice %1458 {offsets = [0, 384], sizes = [1, 128], strides = [1, 1]} : vector<1x512xf32> to vector<1x128xf32>
    %1474 = arith.negf %1473 : vector<1x128xf32>
    %1475 = math.exp %1474 : vector<1x128xf32>
    %cst_240 = arith.constant 1.000000e+00 : f32
    %1476 = vector.broadcast %cst_240 : f32 to vector<1x128xf32>
    %1477 = arith.addf %1476, %1475 : vector<1x128xf32>
    %1478 = arith.divf %1476, %1477 : vector<1x128xf32>
    %1479 = arith.mulf %1470, %1451 : vector<1x128xf32>
    %1480 = arith.mulf %1464, %1472 : vector<1x128xf32>
    %1481 = arith.addf %1479, %1480 : vector<1x128xf32>
    %1482 = math.tanh %1481 : vector<1x128xf32>
    %1483 = arith.mulf %1478, %1482 : vector<1x128xf32>
    %c4_241 = arith.constant 4 : index
    %c0_242 = arith.constant 0 : index
    %1484 = vector.load %arg7[%c4_241, %c0_242] : memref<8x128xf32, #tpu.memory_space<vmem>>, vector<1x128xf32>
    tpu.vector_store %arg7[%c4_241, %c0_242], %1483 {strides = array<i32>} : memref<8x128xf32, #tpu.memory_space<vmem>>, vector<1x128xf32>,
    %1485 = vector.extract_strided_slice %1332 {offsets = [5, 0], sizes = [1, 512], strides = [1, 1]} : vector<8x512xf32> to vector<1x512xf32>
    %1486 = arith.truncf %1483 : vector<1x128xf32> to vector<1x128xbf16>
    %cst_243 = arith.constant dense<0.000000e+00> : vector<1x512xf32>
    %1487 = tpu.matmul %1486, %1327, %cst_243 {dimension_numbers = #tpu.dot_dimension_numbers<[1], [0], [0], [1], [0, 0, 1, 1], [], []>} : vector<1x128xbf16>, vector<128x512xbf16>, vector<1x512xf32> -> vector<1x512xf32>
    %1488 = arith.addf %1485, %1487 : vector<1x512xf32>
    %1489 = vector.extract_strided_slice %1488 {offsets = [0, 0], sizes = [1, 128], strides = [1, 1]} : vector<1x512xf32> to vector<1x128xf32>
    %1490 = arith.negf %1489 : vector<1x128xf32>
    %1491 = math.exp %1490 : vector<1x128xf32>
    %cst_244 = arith.constant 1.000000e+00 : f32
    %1492 = vector.broadcast %cst_244 : f32 to vector<1x128xf32>
    %1493 = arith.addf %1492, %1491 : vector<1x128xf32>
    %1494 = arith.divf %1492, %1493 : vector<1x128xf32>
    %1495 = vector.extract_strided_slice %1488 {offsets = [0, 128], sizes = [1, 128], strides = [1, 1]} : vector<1x512xf32> to vector<1x128xf32>
    %1496 = arith.negf %1495 : vector<1x128xf32>
    %1497 = math.exp %1496 : vector<1x128xf32>
    %cst_245 = arith.constant 1.000000e+00 : f32
    %1498 = vector.broadcast %cst_245 : f32 to vector<1x128xf32>
    %1499 = arith.addf %1498, %1497 : vector<1x128xf32>
    %1500 = arith.divf %1498, %1499 : vector<1x128xf32>
    %1501 = vector.extract_strided_slice %1488 {offsets = [0, 256], sizes = [1, 128], strides = [1, 1]} : vector<1x512xf32> to vector<1x128xf32>
    %1502 = math.tanh %1501 : vector<1x128xf32>
    %1503 = vector.extract_strided_slice %1488 {offsets = [0, 384], sizes = [1, 128], strides = [1, 1]} : vector<1x512xf32> to vector<1x128xf32>
    %1504 = arith.negf %1503 : vector<1x128xf32>
    %1505 = math.exp %1504 : vector<1x128xf32>
    %cst_246 = arith.constant 1.000000e+00 : f32
    %1506 = vector.broadcast %cst_246 : f32 to vector<1x128xf32>
    %1507 = arith.addf %1506, %1505 : vector<1x128xf32>
    %1508 = arith.divf %1506, %1507 : vector<1x128xf32>
    %1509 = arith.mulf %1500, %1481 : vector<1x128xf32>
    %1510 = arith.mulf %1494, %1502 : vector<1x128xf32>
    %1511 = arith.addf %1509, %1510 : vector<1x128xf32>
    %1512 = math.tanh %1511 : vector<1x128xf32>
    %1513 = arith.mulf %1508, %1512 : vector<1x128xf32>
    %c5_247 = arith.constant 5 : index
    %c0_248 = arith.constant 0 : index
    %1514 = vector.load %arg7[%c5_247, %c0_248] : memref<8x128xf32, #tpu.memory_space<vmem>>, vector<1x128xf32>
    tpu.vector_store %arg7[%c5_247, %c0_248], %1513 {strides = array<i32>} : memref<8x128xf32, #tpu.memory_space<vmem>>, vector<1x128xf32>,
    %1515 = vector.extract_strided_slice %1332 {offsets = [6, 0], sizes = [1, 512], strides = [1, 1]} : vector<8x512xf32> to vector<1x512xf32>
    %1516 = arith.truncf %1513 : vector<1x128xf32> to vector<1x128xbf16>
    %cst_249 = arith.constant dense<0.000000e+00> : vector<1x512xf32>
    %1517 = tpu.matmul %1516, %1327, %cst_249 {dimension_numbers = #tpu.dot_dimension_numbers<[1], [0], [0], [1], [0, 0, 1, 1], [], []>} : vector<1x128xbf16>, vector<128x512xbf16>, vector<1x512xf32> -> vector<1x512xf32>
    %1518 = arith.addf %1515, %1517 : vector<1x512xf32>
    %1519 = vector.extract_strided_slice %1518 {offsets = [0, 0], sizes = [1, 128], strides = [1, 1]} : vector<1x512xf32> to vector<1x128xf32>
    %1520 = arith.negf %1519 : vector<1x128xf32>
    %1521 = math.exp %1520 : vector<1x128xf32>
    %cst_250 = arith.constant 1.000000e+00 : f32
    %1522 = vector.broadcast %cst_250 : f32 to vector<1x128xf32>
    %1523 = arith.addf %1522, %1521 : vector<1x128xf32>
    %1524 = arith.divf %1522, %1523 : vector<1x128xf32>
    %1525 = vector.extract_strided_slice %1518 {offsets = [0, 128], sizes = [1, 128], strides = [1, 1]} : vector<1x512xf32> to vector<1x128xf32>
    %1526 = arith.negf %1525 : vector<1x128xf32>
    %1527 = math.exp %1526 : vector<1x128xf32>
    %cst_251 = arith.constant 1.000000e+00 : f32
    %1528 = vector.broadcast %cst_251 : f32 to vector<1x128xf32>
    %1529 = arith.addf %1528, %1527 : vector<1x128xf32>
    %1530 = arith.divf %1528, %1529 : vector<1x128xf32>
    %1531 = vector.extract_strided_slice %1518 {offsets = [0, 256], sizes = [1, 128], strides = [1, 1]} : vector<1x512xf32> to vector<1x128xf32>
    %1532 = math.tanh %1531 : vector<1x128xf32>
    %1533 = vector.extract_strided_slice %1518 {offsets = [0, 384], sizes = [1, 128], strides = [1, 1]} : vector<1x512xf32> to vector<1x128xf32>
    %1534 = arith.negf %1533 : vector<1x128xf32>
    %1535 = math.exp %1534 : vector<1x128xf32>
    %cst_252 = arith.constant 1.000000e+00 : f32
    %1536 = vector.broadcast %cst_252 : f32 to vector<1x128xf32>
    %1537 = arith.addf %1536, %1535 : vector<1x128xf32>
    %1538 = arith.divf %1536, %1537 : vector<1x128xf32>
    %1539 = arith.mulf %1530, %1511 : vector<1x128xf32>
    %1540 = arith.mulf %1524, %1532 : vector<1x128xf32>
    %1541 = arith.addf %1539, %1540 : vector<1x128xf32>
    %1542 = math.tanh %1541 : vector<1x128xf32>
    %1543 = arith.mulf %1538, %1542 : vector<1x128xf32>
    %c6_253 = arith.constant 6 : index
    %c0_254 = arith.constant 0 : index
    %1544 = vector.load %arg7[%c6_253, %c0_254] : memref<8x128xf32, #tpu.memory_space<vmem>>, vector<1x128xf32>
    tpu.vector_store %arg7[%c6_253, %c0_254], %1543 {strides = array<i32>} : memref<8x128xf32, #tpu.memory_space<vmem>>, vector<1x128xf32>,
    %1545 = vector.extract_strided_slice %1332 {offsets = [7, 0], sizes = [1, 512], strides = [1, 1]} : vector<8x512xf32> to vector<1x512xf32>
    %1546 = arith.truncf %1543 : vector<1x128xf32> to vector<1x128xbf16>
    %cst_255 = arith.constant dense<0.000000e+00> : vector<1x512xf32>
    %1547 = tpu.matmul %1546, %1327, %cst_255 {dimension_numbers = #tpu.dot_dimension_numbers<[1], [0], [0], [1], [0, 0, 1, 1], [], []>} : vector<1x128xbf16>, vector<128x512xbf16>, vector<1x512xf32> -> vector<1x512xf32>
    %1548 = arith.addf %1545, %1547 : vector<1x512xf32>
    %1549 = vector.extract_strided_slice %1548 {offsets = [0, 0], sizes = [1, 128], strides = [1, 1]} : vector<1x512xf32> to vector<1x128xf32>
    %1550 = arith.negf %1549 : vector<1x128xf32>
    %1551 = math.exp %1550 : vector<1x128xf32>
    %cst_256 = arith.constant 1.000000e+00 : f32
    %1552 = vector.broadcast %cst_256 : f32 to vector<1x128xf32>
    %1553 = arith.addf %1552, %1551 : vector<1x128xf32>
    %1554 = arith.divf %1552, %1553 : vector<1x128xf32>
    %1555 = vector.extract_strided_slice %1548 {offsets = [0, 128], sizes = [1, 128], strides = [1, 1]} : vector<1x512xf32> to vector<1x128xf32>
    %1556 = arith.negf %1555 : vector<1x128xf32>
    %1557 = math.exp %1556 : vector<1x128xf32>
    %cst_257 = arith.constant 1.000000e+00 : f32
    %1558 = vector.broadcast %cst_257 : f32 to vector<1x128xf32>
    %1559 = arith.addf %1558, %1557 : vector<1x128xf32>
    %1560 = arith.divf %1558, %1559 : vector<1x128xf32>
    %1561 = vector.extract_strided_slice %1548 {offsets = [0, 256], sizes = [1, 128], strides = [1, 1]} : vector<1x512xf32> to vector<1x128xf32>
    %1562 = math.tanh %1561 : vector<1x128xf32>
    %1563 = vector.extract_strided_slice %1548 {offsets = [0, 384], sizes = [1, 128], strides = [1, 1]} : vector<1x512xf32> to vector<1x128xf32>
    %1564 = arith.negf %1563 : vector<1x128xf32>
    %1565 = math.exp %1564 : vector<1x128xf32>
    %cst_258 = arith.constant 1.000000e+00 : f32
    %1566 = vector.broadcast %cst_258 : f32 to vector<1x128xf32>
    %1567 = arith.addf %1566, %1565 : vector<1x128xf32>
    %1568 = arith.divf %1566, %1567 : vector<1x128xf32>
    %1569 = arith.mulf %1560, %1541 : vector<1x128xf32>
    %1570 = arith.mulf %1554, %1562 : vector<1x128xf32>
    %1571 = arith.addf %1569, %1570 : vector<1x128xf32>
    %1572 = math.tanh %1571 : vector<1x128xf32>
    %1573 = arith.mulf %1568, %1572 : vector<1x128xf32>
    %c7_259 = arith.constant 7 : index
    %c0_260 = arith.constant 0 : index
    %1574 = vector.load %arg7[%c7_259, %c0_260] : memref<8x128xf32, #tpu.memory_space<vmem>>, vector<1x128xf32>
    tpu.vector_store %arg7[%c7_259, %c0_260], %1573 {strides = array<i32>} : memref<8x128xf32, #tpu.memory_space<vmem>>, vector<1x128xf32>,
    return
  }
  func.func @transform_0(%arg0: i32) -> (i32, i32) {
    %c0_i32 = arith.constant 0 : i32
    %c0_i32_0 = arith.constant 0 : i32
    %c0_i32_1 = arith.constant 0 : i32
    return %c0_i32, %c0_i32_0 : i32, i32
  }
  func.func @transform_1(%arg0: i32) -> (i32, i32, i32) {
    %c0_i32 = arith.constant 0 : i32
    %c0_i32_0 = arith.constant 0 : i32
    %c0_i32_1 = arith.constant 0 : i32
    %c0_i32_2 = arith.constant 0 : i32
    return %c0_i32, %c0_i32_0, %c0_i32_1 : i32, i32, i32
  }
  func.func @transform_2(%arg0: i32) -> (i32, i32) {
    %c0_i32 = arith.constant 0 : i32
    %c0_i32_0 = arith.constant 0 : i32
    %c0_i32_1 = arith.constant 0 : i32
    return %c0_i32, %c0_i32_0 : i32, i32
  }
  func.func @transform_3(%arg0: i32) -> (i32, i32) {
    %c0_i32 = arith.constant 0 : i32
    %c0_i32_0 = arith.constant 0 : i32
    %c0_i32_1 = arith.constant 0 : i32
    return %c0_i32, %c0_i32_0 : i32, i32
  }
  func.func @transform_4(%arg0: i32) -> (i32, i32) {
    %c0_i32 = arith.constant 0 : i32
    %c0_i32_0 = arith.constant 0 : i32
    %c0_i32_1 = arith.constant 0 : i32
    return %c0_i32, %c0_i32_0 : i32, i32
  }
  func.func @transform_5(%arg0: i32) -> (i32, i32) {
    %c0_i32 = arith.constant 0 : i32
    %c0_i32_0 = arith.constant 0 : i32
    %c0_i32_1 = arith.constant 0 : i32
    return %c0_i32, %c0_i32_0 : i32, i32
  }
  func.func @transform_6(%arg0: i32) -> (i32, i32) {
    %c0_i32 = arith.constant 0 : i32
    %c0_i32_0 = arith.constant 0 : i32
    %c0_i32_1 = arith.constant 0 : i32
    return %c0_i32, %c0_i32_0 : i32, i32
  }
}

</mosaic_0001>

<llo_original>
// kernel: differentiable_grammar_forward.1
$region0: #{differentiable_grammar_forward.1}
  #allocation0 [shape = 'u32[]', space=smem, size = 0x4, offset = 0x4, fixed_abs, tag = 'smem constant byte address 0x4 - core index']
  #allocation1 [shape = 'u32[144,128]{1,0:T(1,128)}', space=vmem, size = 0x12000, scoped, tag = 'internal scratch']
  %s0 = inlined_call_operand.hbm [shape: f32[8,12], index: 0, kind: input, shape index: {}]
  %s1 = inlined_call_operand.hbm [shape: f32[12,8,12], index: 1, kind: input, shape index: {}]
  %s2 = inlined_call_operand.hbm [shape: f32[12,12], index: 2, kind: input, shape index: {}]
  %s3 = inlined_call_operand.hbm [shape: bf16[12,512], index: 3, kind: input, shape index: {}]
  %s4 = inlined_call_operand.hbm [shape: bf16[128,512], index: 4, kind: input, shape index: {}]
  %s5 = inlined_call_operand.vmem [shape: f32[1,512], index: 5, kind: input, shape index: {}]
  %s6 = inlined_call_operand.hbm [shape: f32[8,128], index: 6, kind: output, shape index: {}]
  %s7 = sld [smem:[#allocation0]]
  $region54: #{differentiable_grammar_forward.1} parent=0
    _
  %s9 = ssub.s32 1, %s7
  %s10 = scalar_select 0, %s9, %s7
  $region1: #{differentiable_grammar_forward.1} parent=0
    #allocation2 [shape = 'u8[4096]{0}', space=vmem, size = 0x1000, scoped, tag = 'input window, operand 0, single buffered']
    #allocation3 [shape = 's32[1]{0}', space=sflag, size = 0x4, scoped, tag = 'scoped memory for differentiable_grammar_forward.1']
    #allocation4 [shape = 's32[1]{0}', space=sflag, size = 0x4, scoped, tag = 'scoped memory for differentiable_grammar_forward.1']
    #allocation5 [shape = 'u8[49152]{0}', space=vmem, size = 0xc000, scoped, tag = 'input window, operand 1, single buffered']
    #allocation6 [shape = 's32[1]{0}', space=sflag, size = 0x4, scoped, tag = 'scoped memory for differentiable_grammar_forward.1']
    #allocation7 [shape = 'u8[8192]{0}', space=vmem, size = 0x2000, scoped, tag = 'input window, operand 2, single buffered']
    #allocation8 [shape = 'u8[16384]{0}', space=vmem, size = 0x4000, scoped, tag = 'input window, operand 3, single buffered']
    #allocation9 [shape = 's32[1]{0}', space=sflag, size = 0x4, scoped, tag = 'scoped memory for differentiable_grammar_forward.1']
    #allocation10 [shape = 'u8[131072]{0}', space=vmem, size = 0x20000, scoped, tag = 'input window, operand 4, single buffered']
    #allocation11 [shape = 'u8[4096]{0}', space=vmem, size = 0x1000, scoped, tag = 'output window, operand 0, single buffered']
    %11 = vsyncpa [#allocation3], 0
    %12 = vsyncpa [#allocation6], 0
    %13 = vsyncpa [#allocation9], 0
    %14 = vsyncpa [#allocation4], 0
    // Predicated region
    $region2: #{differentiable_grammar_forward.1} parent=1 // pred_check
      _
    $region3: #{differentiable_grammar_forward.1} parent=1 // pred_check_branch
      %16 = sbr.rel (0) target = $region5
    $region4: #{differentiable_grammar_forward.1} parent=1 // pred_region
      %s18 = ssub.s32 128, 128
      %19 = vsyncadd [#allocation3], %s18
      %s21 = sshll.u32 [#allocation2], 4
      %s22 = int_to_ptr.vmem [resolvable:$true] %s21
      %24 = dma.hbm_to_vmem [thread:$0]  %s0, 128, %s22, [#allocation3]
    $region5: #{differentiable_grammar_forward.1} parent=1 // pred_fallthru
      _
    // Predicated region
    $region6: #{differentiable_grammar_forward.1} parent=1 // pred_check
      _
    $region7: #{differentiable_grammar_forward.1} parent=1 // pred_check_branch
      %26 = sbr.rel (0) target = $region9
    $region8: #{differentiable_grammar_forward.1} parent=1 // pred_region
      %s28 = ssub.s32 1536, 1536
      %29 = vsyncadd [#allocation6], %s28
      %s30 = sshll.u32 [#allocation5], 4
      %s31 = int_to_ptr.vmem [resolvable:$true] %s30
      %36 = dma.hbm_to_vmem [thread:$0]  %s1, 1536, %s31, [#allocation6], 128, 128, 8
    $region9: #{differentiable_grammar_forward.1} parent=1 // pred_fallthru
      _
    // Predicated region
    $region10: #{differentiable_grammar_forward.1} parent=1 // pred_check
      _
    $region11: #{differentiable_grammar_forward.1} parent=1 // pred_check_branch
      %38 = sbr.rel (0) target = $region13
    $region12: #{differentiable_grammar_forward.1} parent=1 // pred_region
      %s40 = ssub.s32 256, 256
      %41 = vsyncadd [#allocation6], %s40
      %s42 = sshll.u32 [#allocation7], 4
      %s43 = int_to_ptr.vmem [resolvable:$true] %s42
      %48 = dma.hbm_to_vmem [thread:$0]  %s2, 256, %s43, [#allocation6], 128, 128, 8
    $region13: #{differentiable_grammar_forward.1} parent=1 // pred_fallthru
      _
    // Predicated region
    $region14: #{differentiable_grammar_forward.1} parent=1 // pred_check
      _
    $region15: #{differentiable_grammar_forward.1} parent=1 // pred_check_branch
      %50 = sbr.rel (0) target = $region17
    $region16: #{differentiable_grammar_forward.1} parent=1 // pred_region
      %s52 = ssub.s32 512, 512
      %53 = vsyncadd [#allocation9], %s52
      %s54 = sshll.u32 [#allocation8], 4
      %s55 = int_to_ptr.vmem [resolvable:$true] %s54
      %60 = dma.hbm_to_vmem [thread:$0]  %s3, 512, %s55, [#allocation9], 256, 256, 16
    $region17: #{differentiable_grammar_forward.1} parent=1 // pred_fallthru
      _
    // Predicated region
    $region18: #{differentiable_grammar_forward.1} parent=1 // pred_check
      _
    $region19: #{differentiable_grammar_forward.1} parent=1 // pred_check_branch
      %62 = sbr.rel (0) target = $region21
    $region20: #{differentiable_grammar_forward.1} parent=1 // pred_region
      %s64 = ssub.s32 4096, 4096
      %65 = vsyncadd [#allocation9], %s64
      %s66 = sshll.u32 [#allocation10], 4
      %s67 = int_to_ptr.vmem [resolvable:$true] %s66
      %72 = dma.hbm_to_vmem [thread:$0]  %s4, 4096, %s67, [#allocation9], 256, 256, 16
    $region21: #{differentiable_grammar_forward.1} parent=1 // pred_fallthru
      _
    // Predicated region
    $region22: #{differentiable_grammar_forward.1} parent=1 // pred_check
      _
    $region23: #{differentiable_grammar_forward.1} parent=1 // pred_check_branch
      %74 = sbr.rel (0) target = $region25
    $region24: #{differentiable_grammar_forward.1} parent=1 // pred_region
      _
    $region25: #{differentiable_grammar_forward.1} parent=1 // pred_fallthru
      _
    // Predicated region
    $region26: #{differentiable_grammar_forward.1} parent=1 // pred_check
      _
    $region27: #{differentiable_grammar_forward.1} parent=1 // pred_check_branch
      %76 = sbr.rel (0) target = $region29
    $region28: #{differentiable_grammar_forward.1} parent=1 // pred_region
      %77 = dma.done [#allocation3], 128
    $region29: #{differentiable_grammar_forward.1} parent=1 // pred_fallthru
      _
    // Predicated region
    $region30: #{differentiable_grammar_forward.1} parent=1 // pred_check
      _
    $region31: #{differentiable_grammar_forward.1} parent=1 // pred_check_branch
      %79 = sbr.rel (0) target = $region33
    $region32: #{differentiable_grammar_forward.1} parent=1 // pred_region
      %80 = dma.done [#allocation6], 1536
    $region33: #{differentiable_grammar_forward.1} parent=1 // pred_fallthru
      _
    // Predicated region
    $region34: #{differentiable_grammar_forward.1} parent=1 // pred_check
      _
    $region35: #{differentiable_grammar_forward.1} parent=1 // pred_check_branch
      %82 = sbr.rel (0) target = $region37
    $region36: #{differentiable_grammar_forward.1} parent=1 // pred_region
      %83 = dma.done [#allocation6], 256
    $region37: #{differentiable_grammar_forward.1} parent=1 // pred_fallthru
      _
    // Predicated region
    $region38: #{differentiable_grammar_forward.1} parent=1 // pred_check
      _
    $region39: #{differentiable_grammar_forward.1} parent=1 // pred_check_branch
      %85 = sbr.rel (0) target = $region41
    $region40: #{differentiable_grammar_forward.1} parent=1 // pred_region
      %86 = dma.done [#allocation9], 512
    $region41: #{differentiable_grammar_forward.1} parent=1 // pred_fallthru
      _
    // Predicated region
    $region42: #{differentiable_grammar_forward.1} parent=1 // pred_check
      _
    $region43: #{differentiable_grammar_forward.1} parent=1 // pred_check_branch
      %88 = sbr.rel (0) target = $region45
    $region44: #{differentiable_grammar_forward.1} parent=1 // pred_region
      %89 = dma.done [#allocation9], 4096
    $region45: #{differentiable_grammar_forward.1} parent=1 // pred_fallthru
      _
    %v91 = vld [vmem:[#allocation7] sm:$0xff]
    %v92 = vld [vmem:[#allocation7 + $0x8] sm:$0xf]
    %v93 = vld [vmem:[#allocation2] sm:$0xff]
    %v94 = vld [vmem:[#allocation5] sm:$0xff]
    %v95 = vadd.f32 %v93, %v94
    %v96 = vlaneseq
    %v97 = vand.u32 %v96, 127
    %vm98 = vcmask 97280
    %v99 = vsel %vm98, %v95, -inf
    %100 = vmax.xlane.f32.xlu0 %v99
    %v101 = vpop.xlane.xlu0 %100
    %vm102 = vcmp.eq.f32.partialorder %v95, %v101
    %v103 = vsel %vm102, %v97, 12
    %v104 = vsel %vm98, %v103, 2147483647
    %v105 = vand.u32 %v104, 65535
    %v106 = vshra.s32 %v104, 16
    %v107 = vcvt.s32.f32 %v105
    %v108 = vcvt.s32.f32 %v106
    %109 = vmin.xlane.f32.xlu0 %v108
    %v110 = vpop.xlane.xlu0 %109
    %vm111 = vcmp.eq.f32.partialorder %v108, %v110
    %v112 = vsel %vm111, %v107, inf
    %113 = vmin.xlane.f32.xlu0 %v112
    %v114 = vpop.xlane.xlu0 %113
    %v115 = vcvt.f32.s32 %v114
    %v116 = vcvt.f32.s32 %v110
    %v117 = vshll.u32 %v116, 16
    %v118 = vadd.s32 %v117, %v115
    %vm119 = vcmp.eq.s32.totalorder %v97, %v118
    %v120 = vsel %vm119, 1, 0
    %v121 = vcvt.s32.f32 %v120
    %vm122 = vcmp.eq.s32.totalorder %v118, 0
    %v123 = vsel %vm122, 1, 0
    %vm124 = vcmp.eq.s32.totalorder %v123, 1
    %v125 = vlaneseq
    %v126 = vshrl.u32 %v125, 7
    %v127 = vsub.s32 0, %v126
    %v128 = vrot.slane %v91, %v127
    %v129 = vsel %vm124, %v128, 0.0
    %vm130 = vcmp.eq.s32.totalorder %v118, 1
    %v131 = vsel %vm130, 1, 0
    %vm132 = vcmp.eq.s32.totalorder %v131, 1
    %v133 = vlaneseq
    %v134 = vshrl.u32 %v133, 7
    %v135 = vsub.s32 1, %v134
    %v136 = vrot.slane %v91, %v135
    %v137 = vsel %vm132, %v136, %v129
    %vm138 = vcmp.eq.s32.totalorder %v118, 2
    %v139 = vsel %vm138, 1, 0
    %vm140 = vcmp.eq.s32.totalorder %v139, 1
    %v141 = vlaneseq
    %v142 = vshrl.u32 %v141, 7
    %v143 = vsub.s32 2, %v142
    %v144 = vrot.slane %v91, %v143
    %v145 = vsel %vm140, %v144, %v137
    %vm146 = vcmp.eq.s32.totalorder %v118, 3
    %v147 = vsel %vm146, 1, 0
    %vm148 = vcmp.eq.s32.totalorder %v147, 1
    %v149 = vlaneseq
    %v150 = vshrl.u32 %v149, 7
    %v151 = vsub.s32 3, %v150
    %v152 = vrot.slane %v91, %v151
    %v153 = vsel %vm148, %v152, %v145
    %vm154 = vcmp.eq.s32.totalorder %v118, 4
    %v155 = vsel %vm154, 1, 0
    %vm156 = vcmp.eq.s32.totalorder %v155, 1
    %v157 = vlaneseq
    %v158 = vshrl.u32 %v157, 7
    %v159 = vsub.s32 4, %v158
    %v160 = vrot.slane %v91, %v159
    %v161 = vsel %vm156, %v160, %v153
    %vm162 = vcmp.eq.s32.totalorder %v118, 5
    %v163 = vsel %vm162, 1, 0
    %vm164 = vcmp.eq.s32.totalorder %v163, 1
    %v165 = vlaneseq
    %v166 = vshrl.u32 %v165, 7
    %v167 = vsub.s32 5, %v166
    %v168 = vrot.slane %v91, %v167
    %v169 = vsel %vm164, %v168, %v161
    %vm170 = vcmp.eq.s32.totalorder %v118, 6
    %v171 = vsel %vm170, 1, 0
    %vm172 = vcmp.eq.s32.totalorder %v171, 1
    %v173 = vlaneseq
    %v174 = vshrl.u32 %v173, 7
    %v175 = vsub.s32 6, %v174
    %v176 = vrot.slane %v91, %v175
    %v177 = vsel %vm172, %v176, %v169
    %vm178 = vcmp.eq.s32.totalorder %v118, 7
    %v179 = vsel %vm178, 1, 0
    %vm180 = vcmp.eq.s32.totalorder %v179, 1
    %v181 = vlaneseq
    %v182 = vshrl.u32 %v181, 7
    %v183 = vsub.s32 7, %v182
    %v184 = vrot.slane %v91, %v183
    %v185 = vsel %vm180, %v184, %v177
    %vm186 = vcmp.eq.s32.totalorder %v118, 8
    %v187 = vsel %vm186, 1, 0
    %vm188 = vcmp.eq.s32.totalorder %v187, 1
    %v189 = vlaneseq
    %v190 = vshrl.u32 %v189, 7
    %v191 = vsub.s32 0, %v190
    %v192 = vrot.slane %v92, %v191
    %v193 = vsel %vm188, %v192, %v185
    %vm194 = vcmp.eq.s32.totalorder %v118, 9
    %v195 = vsel %vm194, 1, 0
    %vm196 = vcmp.eq.s32.totalorder %v195, 1
    %v197 = vlaneseq
    %v198 = vshrl.u32 %v197, 7
    %v199 = vsub.s32 1, %v198
    %v200 = vrot.slane %v92, %v199
    %v201 = vsel %vm196, %v200, %v193
    %vm202 = vcmp.eq.s32.totalorder %v118, 10
    %v203 = vsel %vm202, 1, 0
    %vm204 = vcmp.eq.s32.totalorder %v203, 1
    %v205 = vlaneseq
    %v206 = vshrl.u32 %v205, 7
    %v207 = vsub.s32 2, %v206
    %v208 = vrot.slane %v92, %v207
    %v209 = vsel %vm204, %v208, %v201
    %vm210 = vcmp.eq.s32.totalorder %v118, 11
    %v211 = vsel %vm210, 1, 0
    %vm212 = vcmp.eq.s32.totalorder %v211, 1
    %v213 = vlaneseq
    %v214 = vshrl.u32 %v213, 7
    %v215 = vsub.s32 3, %v214
    %v216 = vrot.slane %v92, %v215
    %v217 = vsel %vm212, %v216, %v209
    %s218 = scalar_lea.vmem [#allocation5], 8
    %v219 = vld [vmem:[%s218] sm:$0xff]
    %v220 = vadd.f32 %v217, %v219
    %v221 = vsel %vm98, %v220, -inf
    %222 = vmax.xlane.f32.xlu0 %v221
    %v223 = vpop.xlane.xlu0 %222
    %vm224 = vcmp.eq.f32.partialorder %v220, %v223
    %v225 = vsel %vm224, %v97, 12
    %v226 = vsel %vm98, %v225, 2147483647
    %v227 = vand.u32 %v226, 65535
    %v228 = vshra.s32 %v226, 16
    %v229 = vcvt.s32.f32 %v227
    %v230 = vcvt.s32.f32 %v228
    %231 = vmin.xlane.f32.xlu0 %v230
    %v232 = vpop.xlane.xlu0 %231
    %vm233 = vcmp.eq.f32.partialorder %v230, %v232
    %v234 = vsel %vm233, %v229, inf
    %235 = vmin.xlane.f32.xlu0 %v234
    %v236 = vpop.xlane.xlu0 %235
    %v237 = vcvt.f32.s32 %v236
    %v238 = vcvt.f32.s32 %v232
    %v239 = vshll.u32 %v238, 16
    %v240 = vadd.s32 %v239, %v237
    %vm241 = vcmp.eq.s32.totalorder %v97, %v240
    %v242 = vsel %vm241, 1, 0
    %v243 = vcvt.s32.f32 %v242
    %vm244 = vcmp.ne.s32.totalorder %v118, 11
    %v245 = vsel %vm244, 1, 0
    %vm246 = vcmp.eq.s32.totalorder %v245, 1
    %v247 = vsel %vm246, %v243, %v121
    %v248 = vsel %vm244, %v240, %v118
    %vm249 = vcmp.eq.s32.totalorder %v248, 0
    %v250 = vsel %vm249, 1, 0
    %vm251 = vcmp.eq.s32.totalorder %v250, 1
    %v252 = vsel %vm251, %v128, 0.0
    %vm253 = vcmp.eq.s32.totalorder %v248, 1
    %v254 = vsel %vm253, 1, 0
    %vm255 = vcmp.eq.s32.totalorder %v254, 1
    %v256 = vsel %vm255, %v136, %v252
    %vm257 = vcmp.eq.s32.totalorder %v248, 2
    %v258 = vsel %vm257, 1, 0
    %vm259 = vcmp.eq.s32.totalorder %v258, 1
    %v260 = vsel %vm259, %v144, %v256
    %vm261 = vcmp.eq.s32.totalorder %v248, 3
    %v262 = vsel %vm261, 1, 0
    %vm263 = vcmp.eq.s32.totalorder %v262, 1
    %v264 = vsel %vm263, %v152, %v260
    %vm265 = vcmp.eq.s32.totalorder %v248, 4
    %v266 = vsel %vm265, 1, 0
    %vm267 = vcmp.eq.s32.totalorder %v266, 1
    %v268 = vsel %vm267, %v160, %v264
    %vm269 = vcmp.eq.s32.totalorder %v248, 5
    %v270 = vsel %vm269, 1, 0
    %vm271 = vcmp.eq.s32.totalorder %v270, 1
    %v272 = vsel %vm271, %v168, %v268
    %vm273 = vcmp.eq.s32.totalorder %v248, 6
    %v274 = vsel %vm273, 1, 0
    %vm275 = vcmp.eq.s32.totalorder %v274, 1
    %v276 = vsel %vm275, %v176, %v272
    %vm277 = vcmp.eq.s32.totalorder %v248, 7
    %v278 = vsel %vm277, 1, 0
    %vm279 = vcmp.eq.s32.totalorder %v278, 1
    %v280 = vsel %vm279, %v184, %v276
    %vm281 = vcmp.eq.s32.totalorder %v248, 8
    %v282 = vsel %vm281, 1, 0
    %vm283 = vcmp.eq.s32.totalorder %v282, 1
    %v284 = vsel %vm283, %v192, %v280
    %vm285 = vcmp.eq.s32.totalorder %v248, 9
    %v286 = vsel %vm285, 1, 0
    %vm287 = vcmp.eq.s32.totalorder %v286, 1
    %v288 = vsel %vm287, %v200, %v284
    %vm289 = vcmp.eq.s32.totalorder %v248, 10
    %v290 = vsel %vm289, 1, 0
    %vm291 = vcmp.eq.s32.totalorder %v290, 1
    %v292 = vsel %vm291, %v208, %v288
    %vm293 = vcmp.eq.s32.totalorder %v248, 11
    %v294 = vsel %vm293, 1, 0
    %vm295 = vcmp.eq.s32.totalorder %v294, 1
    %v296 = vsel %vm295, %v216, %v292
    %s297 = scalar_lea.vmem [#allocation5], 16
    %v298 = vld [vmem:[%s297] sm:$0xff]
    %v299 = vadd.f32 %v296, %v298
    %v300 = vsel %vm98, %v299, -inf
    %301 = vmax.xlane.f32.xlu0 %v300
    %v302 = vpop.xlane.xlu0 %301
    %vm303 = vcmp.eq.f32.partialorder %v299, %v302
    %v304 = vsel %vm303, %v97, 12
    %v305 = vsel %vm98, %v304, 2147483647
    %v306 = vand.u32 %v305, 65535
    %v307 = vshra.s32 %v305, 16
    %v308 = vcvt.s32.f32 %v306
    %v309 = vcvt.s32.f32 %v307
    %310 = vmin.xlane.f32.xlu0 %v309
    %v311 = vpop.xlane.xlu0 %310
    %vm312 = vcmp.eq.f32.partialorder %v309, %v311
    %v313 = vsel %vm312, %v308, inf
    %314 = vmin.xlane.f32.xlu0 %v313
    %v315 = vpop.xlane.xlu0 %314
    %v316 = vcvt.f32.s32 %v315
    %v317 = vcvt.f32.s32 %v311
    %v318 = vshll.u32 %v317, 16
    %v319 = vadd.s32 %v318, %v316
    %vm320 = vcmp.eq.s32.totalorder %v97, %v319
    %v321 = vsel %vm320, 1, 0
    %v322 = vcvt.s32.f32 %v321
    %vm323 = vcmp.ne.s32.totalorder %v248, 11
    %v324 = vsel %vm323, 1, 0
    %vm325 = vcmp.eq.s32.totalorder %v324, 1
    %v326 = vsel %vm325, %v322, %v247
    %v327 = vsel %vm323, %v319, %v248
    %vm328 = vcmp.eq.s32.totalorder %v327, 0
    %v329 = vsel %vm328, 1, 0
    %vm330 = vcmp.eq.s32.totalorder %v329, 1
    %v331 = vsel %vm330, %v128, 0.0
    %vm332 = vcmp.eq.s32.totalorder %v327, 1
    %v333 = vsel %vm332, 1, 0
    %vm334 = vcmp.eq.s32.totalorder %v333, 1
    %v335 = vsel %vm334, %v136, %v331
    %vm336 = vcmp.eq.s32.totalorder %v327, 2
    %v337 = vsel %vm336, 1, 0
    %vm338 = vcmp.eq.s32.totalorder %v337, 1
    %v339 = vsel %vm338, %v144, %v335
    %vm340 = vcmp.eq.s32.totalorder %v327, 3
    %v341 = vsel %vm340, 1, 0
    %vm342 = vcmp.eq.s32.totalorder %v341, 1
    %v343 = vsel %vm342, %v152, %v339
    %vm344 = vcmp.eq.s32.totalorder %v327, 4
    %v345 = vsel %vm344, 1, 0
    %vm346 = vcmp.eq.s32.totalorder %v345, 1
    %v347 = vsel %vm346, %v160, %v343
    %vm348 = vcmp.eq.s32.totalorder %v327, 5
    %v349 = vsel %vm348, 1, 0
    %vm350 = vcmp.eq.s32.totalorder %v349, 1
    %v351 = vsel %vm350, %v168, %v347
    %vm352 = vcmp.eq.s32.totalorder %v327, 6
    %v353 = vsel %vm352, 1, 0
    %vm354 = vcmp.eq.s32.totalorder %v353, 1
    %v355 = vsel %vm354, %v176, %v351
    %vm356 = vcmp.eq.s32.totalorder %v327, 7
    %v357 = vsel %vm356, 1, 0
    %vm358 = vcmp.eq.s32.totalorder %v357, 1
    %v359 = vsel %vm358, %v184, %v355
    %vm360 = vcmp.eq.s32.totalorder %v327, 8
    %v361 = vsel %vm360, 1, 0
    %vm362 = vcmp.eq.s32.totalorder %v361, 1
    %v363 = vsel %vm362, %v192, %v359
    %vm364 = vcmp.eq.s32.totalorder %v327, 9
    %v365 = vsel %vm364, 1, 0
    %vm366 = vcmp.eq.s32.totalorder %v365, 1
    %v367 = vsel %vm366, %v200, %v363
    %vm368 = vcmp.eq.s32.totalorder %v327, 10
    %v369 = vsel %vm368, 1, 0
    %vm370 = vcmp.eq.s32.totalorder %v369, 1
    %v371 = vsel %vm370, %v208, %v367
    %vm372 = vcmp.eq.s32.totalorder %v327, 11
    %v373 = vsel %vm372, 1, 0
    %vm374 = vcmp.eq.s32.totalorder %v373, 1
    %v375 = vsel %vm374, %v216, %v371
    %s376 = scalar_lea.vmem [#allocation5], 24
    %v377 = vld [vmem:[%s376] sm:$0xff]
    %v378 = vadd.f32 %v375, %v377
    %v379 = vsel %vm98, %v378, -inf
    %380 = vmax.xlane.f32.xlu0 %v379
    %v381 = vpop.xlane.xlu0 %380
    %vm382 = vcmp.eq.f32.partialorder %v378, %v381
    %v383 = vsel %vm382, %v97, 12
    %v384 = vsel %vm98, %v383, 2147483647
    %v385 = vand.u32 %v384, 65535
    %v386 = vshra.s32 %v384, 16
    %v387 = vcvt.s32.f32 %v385
    %v388 = vcvt.s32.f32 %v386
    %389 = vmin.xlane.f32.xlu0 %v388
    %v390 = vpop.xlane.xlu0 %389
    %vm391 = vcmp.eq.f32.partialorder %v388, %v390
    %v392 = vsel %vm391, %v387, inf
    %393 = vmin.xlane.f32.xlu0 %v392
    %v394 = vpop.xlane.xlu0 %393
    %v395 = vcvt.f32.s32 %v394
    %v396 = vcvt.f32.s32 %v390
    %v397 = vshll.u32 %v396, 16
    %v398 = vadd.s32 %v397, %v395
    %vm399 = vcmp.eq.s32.totalorder %v97, %v398
    %v400 = vsel %vm399, 1, 0
    %v401 = vcvt.s32.f32 %v400
    %vm402 = vcmp.ne.s32.totalorder %v327, 11
    %v403 = vsel %vm402, 1, 0
    %vm404 = vcmp.eq.s32.totalorder %v403, 1
    %v405 = vsel %vm404, %v401, %v326
    %v406 = vsel %vm402, %v398, %v327
    %vm407 = vcmp.eq.s32.totalorder %v406, 0
    %v408 = vsel %vm407, 1, 0
    %vm409 = vcmp.eq.s32.totalorder %v408, 1
    %v410 = vsel %vm409, %v128, 0.0
    %vm411 = vcmp.eq.s32.totalorder %v406, 1
    %v412 = vsel %vm411, 1, 0
    %vm413 = vcmp.eq.s32.totalorder %v412, 1
    %v414 = vsel %vm413, %v136, %v410
    %vm415 = vcmp.eq.s32.totalorder %v406, 2
    %v416 = vsel %vm415, 1, 0
    %vm417 = vcmp.eq.s32.totalorder %v416, 1
    %v418 = vsel %vm417, %v144, %v414
    %vm419 = vcmp.eq.s32.totalorder %v406, 3
    %v420 = vsel %vm419, 1, 0
    %vm421 = vcmp.eq.s32.totalorder %v420, 1
    %v422 = vsel %vm421, %v152, %v418
    %vm423 = vcmp.eq.s32.totalorder %v406, 4
    %v424 = vsel %vm423, 1, 0
    %vm425 = vcmp.eq.s32.totalorder %v424, 1
    %v426 = vsel %vm425, %v160, %v422
    %vm427 = vcmp.eq.s32.totalorder %v406, 5
    %v428 = vsel %vm427, 1, 0
    %vm429 = vcmp.eq.s32.totalorder %v428, 1
    %v430 = vsel %vm429, %v168, %v426
    %vm431 = vcmp.eq.s32.totalorder %v406, 6
    %v432 = vsel %vm431, 1, 0
    %vm433 = vcmp.eq.s32.totalorder %v432, 1
    %v434 = vsel %vm433, %v176, %v430
    %vm435 = vcmp.eq.s32.totalorder %v406, 7
    %v436 = vsel %vm435, 1, 0
    %vm437 = vcmp.eq.s32.totalorder %v436, 1
    %v438 = vsel %vm437, %v184, %v434
    %vm439 = vcmp.eq.s32.totalorder %v406, 8
    %v440 = vsel %vm439, 1, 0
    %vm441 = vcmp.eq.s32.totalorder %v440, 1
    %v442 = vsel %vm441, %v192, %v438
    %vm443 = vcmp.eq.s32.totalorder %v406, 9
    %v444 = vsel %vm443, 1, 0
    %vm445 = vcmp.eq.s32.totalorder %v444, 1
    %v446 = vsel %vm445, %v200, %v442
    %vm447 = vcmp.eq.s32.totalorder %v406, 10
    %v448 = vsel %vm447, 1, 0
    %vm449 = vcmp.eq.s32.totalorder %v448, 1
    %v450 = vsel %vm449, %v208, %v446
    %vm451 = vcmp.eq.s32.totalorder %v406, 11
    %v452 = vsel %vm451, 1, 0
    %vm453 = vcmp.eq.s32.totalorder %v452, 1
    %v454 = vsel %vm453, %v216, %v450
    %s455 = scalar_lea.vmem [#allocation5], 32
    %v456 = vld [vmem:[%s455] sm:$0xff]
    %v457 = vadd.f32 %v454, %v456
    %v458 = vsel %vm98, %v457, -inf
    %459 = vmax.xlane.f32.xlu0 %v458
    %v460 = vpop.xlane.xlu0 %459
    %vm461 = vcmp.eq.f32.partialorder %v457, %v460
    %v462 = vsel %vm461, %v97, 12
    %v463 = vsel %vm98, %v462, 2147483647
    %v464 = vand.u32 %v463, 65535
    %v465 = vshra.s32 %v463, 16
    %v466 = vcvt.s32.f32 %v464
    %v467 = vcvt.s32.f32 %v465
    %468 = vmin.xlane.f32.xlu0 %v467
    %v469 = vpop.xlane.xlu0 %468
    %vm470 = vcmp.eq.f32.partialorder %v467, %v469
    %v471 = vsel %vm470, %v466, inf
    %472 = vmin.xlane.f32.xlu0 %v471
    %v473 = vpop.xlane.xlu0 %472
    %v474 = vcvt.f32.s32 %v473
    %v475 = vcvt.f32.s32 %v469
    %v476 = vshll.u32 %v475, 16
    %v477 = vadd.s32 %v476, %v474
    %vm478 = vcmp.eq.s32.totalorder %v97, %v477
    %v479 = vsel %vm478, 1, 0
    %v480 = vcvt.s32.f32 %v479
    %vm481 = vcmp.ne.s32.totalorder %v406, 11
    %v482 = vsel %vm481, 1, 0
    %vm483 = vcmp.eq.s32.totalorder %v482, 1
    %v484 = vsel %vm483, %v480, %v405
    %v485 = vsel %vm481, %v477, %v406
    %vm486 = vcmp.eq.s32.totalorder %v485, 0
    %v487 = vsel %vm486, 1, 0
    %vm488 = vcmp.eq.s32.totalorder %v487, 1
    %v489 = vsel %vm488, %v128, 0.0
    %vm490 = vcmp.eq.s32.totalorder %v485, 1
    %v491 = vsel %vm490, 1, 0
    %vm492 = vcmp.eq.s32.totalorder %v491, 1
    %v493 = vsel %vm492, %v136, %v489
    %vm494 = vcmp.eq.s32.totalorder %v485, 2
    %v495 = vsel %vm494, 1, 0
    %vm496 = vcmp.eq.s32.totalorder %v495, 1
    %v497 = vsel %vm496, %v144, %v493
    %vm498 = vcmp.eq.s32.totalorder %v485, 3
    %v499 = vsel %vm498, 1, 0
    %vm500 = vcmp.eq.s32.totalorder %v499, 1
    %v501 = vsel %vm500, %v152, %v497
    %vm502 = vcmp.eq.s32.totalorder %v485, 4
    %v503 = vsel %vm502, 1, 0
    %vm504 = vcmp.eq.s32.totalorder %v503, 1
    %v505 = vsel %vm504, %v160, %v501
    %vm506 = vcmp.eq.s32.totalorder %v485, 5
    %v507 = vsel %vm506, 1, 0
    %vm508 = vcmp.eq.s32.totalorder %v507, 1
    %v509 = vsel %vm508, %v168, %v505
    %vm510 = vcmp.eq.s32.totalorder %v485, 6
    %v511 = vsel %vm510, 1, 0
    %vm512 = vcmp.eq.s32.totalorder %v511, 1
    %v513 = vsel %vm512, %v176, %v509
    %vm514 = vcmp.eq.s32.totalorder %v485, 7
    %v515 = vsel %vm514, 1, 0
    %vm516 = vcmp.eq.s32.totalorder %v515, 1
    %v517 = vsel %vm516, %v184, %v513
    %vm518 = vcmp.eq.s32.totalorder %v485, 8
    %v519 = vsel %vm518, 1, 0
    %vm520 = vcmp.eq.s32.totalorder %v519, 1
    %v521 = vsel %vm520, %v192, %v517
    %vm522 = vcmp.eq.s32.totalorder %v485, 9
    %v523 = vsel %vm522, 1, 0
    %vm524 = vcmp.eq.s32.totalorder %v523, 1
    %v525 = vsel %vm524, %v200, %v521
    %vm526 = vcmp.eq.s32.totalorder %v485, 10
    %v527 = vsel %vm526, 1, 0
    %vm528 = vcmp.eq.s32.totalorder %v527, 1
    %v529 = vsel %vm528, %v208, %v525
    %vm530 = vcmp.eq.s32.totalorder %v485, 11
    %v531 = vsel %vm530, 1, 0
    %vm532 = vcmp.eq.s32.totalorder %v531, 1
    %v533 = vsel %vm532, %v216, %v529
    %s534 = scalar_lea.vmem [#allocation5], 40
    %v535 = vld [vmem:[%s534] sm:$0xff]
    %v536 = vadd.f32 %v533, %v535
    %v537 = vsel %vm98, %v536, -inf
    %538 = vmax.xlane.f32.xlu0 %v537
    %v539 = vpop.xlane.xlu0 %538
    %vm540 = vcmp.eq.f32.partialorder %v536, %v539
    %v541 = vsel %vm540, %v97, 12
    %v542 = vsel %vm98, %v541, 2147483647
    %v543 = vand.u32 %v542, 65535
    %v544 = vshra.s32 %v542, 16
    %v545 = vcvt.s32.f32 %v543
    %v546 = vcvt.s32.f32 %v544
    %547 = vmin.xlane.f32.xlu0 %v546
    %v548 = vpop.xlane.xlu0 %547
    %vm549 = vcmp.eq.f32.partialorder %v546, %v548
    %v550 = vsel %vm549, %v545, inf
    %551 = vmin.xlane.f32.xlu0 %v550
    %v552 = vpop.xlane.xlu0 %551
    %v553 = vcvt.f32.s32 %v552
    %v554 = vcvt.f32.s32 %v548
    %v555 = vshll.u32 %v554, 16
    %v556 = vadd.s32 %v555, %v553
    %vm557 = vcmp.eq.s32.totalorder %v97, %v556
    %v558 = vsel %vm557, 1, 0
    %v559 = vcvt.s32.f32 %v558
    %vm560 = vcmp.ne.s32.totalorder %v485, 11
    %v561 = vsel %vm560, 1, 0
    %vm562 = vcmp.eq.s32.totalorder %v561, 1
    %v563 = vsel %vm562, %v559, %v484
    %v564 = vsel %vm560, %v556, %v485
    %vm565 = vcmp.eq.s32.totalorder %v564, 0
    %v566 = vsel %vm565, 1, 0
    %vm567 = vcmp.eq.s32.totalorder %v566, 1
    %v568 = vsel %vm567, %v128, 0.0
    %vm569 = vcmp.eq.s32.totalorder %v564, 1
    %v570 = vsel %vm569, 1, 0
    %vm571 = vcmp.eq.s32.totalorder %v570, 1
    %v572 = vsel %vm571, %v136, %v568
    %vm573 = vcmp.eq.s32.totalorder %v564, 2
    %v574 = vsel %vm573, 1, 0
    %vm575 = vcmp.eq.s32.totalorder %v574, 1
    %v576 = vsel %vm575, %v144, %v572
    %vm577 = vcmp.eq.s32.totalorder %v564, 3
    %v578 = vsel %vm577, 1, 0
    %vm579 = vcmp.eq.s32.totalorder %v578, 1
    %v580 = vsel %vm579, %v152, %v576
    %vm581 = vcmp.eq.s32.totalorder %v564, 4
    %v582 = vsel %vm581, 1, 0
    %vm583 = vcmp.eq.s32.totalorder %v582, 1
    %v584 = vsel %vm583, %v160, %v580
    %vm585 = vcmp.eq.s32.totalorder %v564, 5
    %v586 = vsel %vm585, 1, 0
    %vm587 = vcmp.eq.s32.totalorder %v586, 1
    %v588 = vsel %vm587, %v168, %v584
    %vm589 = vcmp.eq.s32.totalorder %v564, 6
    %v590 = vsel %vm589, 1, 0
    %vm591 = vcmp.eq.s32.totalorder %v590, 1
    %v592 = vsel %vm591, %v176, %v588
    %vm593 = vcmp.eq.s32.totalorder %v564, 7
    %v594 = vsel %vm593, 1, 0
    %vm595 = vcmp.eq.s32.totalorder %v594, 1
    %v596 = vsel %vm595, %v184, %v592
    %vm597 = vcmp.eq.s32.totalorder %v564, 8
    %v598 = vsel %vm597, 1, 0
    %vm599 = vcmp.eq.s32.totalorder %v598, 1
    %v600 = vsel %vm599, %v192, %v596
    %vm601 = vcmp.eq.s32.totalorder %v564, 9
    %v602 = vsel %vm601, 1, 0
    %vm603 = vcmp.eq.s32.totalorder %v602, 1
    %v604 = vsel %vm603, %v200, %v600
    %vm605 = vcmp.eq.s32.totalorder %v564, 10
    %v606 = vsel %vm605, 1, 0
    %vm607 = vcmp.eq.s32.totalorder %v606, 1
    %v608 = vsel %vm607, %v208, %v604
    %vm609 = vcmp.eq.s32.totalorder %v564, 11
    %v610 = vsel %vm609, 1, 0
    %vm611 = vcmp.eq.s32.totalorder %v610, 1
    %v612 = vsel %vm611, %v216, %v608
    %s613 = scalar_lea.vmem [#allocation5], 48
    %v614 = vld [vmem:[%s613] sm:$0xff]
    %v615 = vadd.f32 %v612, %v614
    %v616 = vsel %vm98, %v615, -inf
    %617 = vmax.xlane.f32.xlu0 %v616
    %v618 = vpop.xlane.xlu0 %617
    %vm619 = vcmp.eq.f32.partialorder %v615, %v618
    %v620 = vsel %vm619, %v97, 12
    %v621 = vsel %vm98, %v620, 2147483647
    %v622 = vand.u32 %v621, 65535
    %v623 = vshra.s32 %v621, 16
    %v624 = vcvt.s32.f32 %v622
    %v625 = vcvt.s32.f32 %v623
    %626 = vmin.xlane.f32.xlu0 %v625
    %v627 = vpop.xlane.xlu0 %626
    %vm628 = vcmp.eq.f32.partialorder %v625, %v627
    %v629 = vsel %vm628, %v624, inf
    %630 = vmin.xlane.f32.xlu0 %v629
    %v631 = vpop.xlane.xlu0 %630
    %v632 = vcvt.f32.s32 %v631
    %v633 = vcvt.f32.s32 %v627
    %v634 = vshll.u32 %v633, 16
    %v635 = vadd.s32 %v634, %v632
    %vm636 = vcmp.eq.s32.totalorder %v97, %v635
    %v637 = vsel %vm636, 1, 0
    %v638 = vcvt.s32.f32 %v637
    %vm639 = vcmp.ne.s32.totalorder %v564, 11
    %v640 = vsel %vm639, 1, 0
    %vm641 = vcmp.eq.s32.totalorder %v640, 1
    %v642 = vsel %vm641, %v638, %v563
    %v643 = vsel %vm639, %v635, %v564
    %vm644 = vcmp.eq.s32.totalorder %v643, 0
    %v645 = vsel %vm644, 1, 0
    %vm646 = vcmp.eq.s32.totalorder %v645, 1
    %v647 = vsel %vm646, %v128, 0.0
    %vm648 = vcmp.eq.s32.totalorder %v643, 1
    %v649 = vsel %vm648, 1, 0
    %vm650 = vcmp.eq.s32.totalorder %v649, 1
    %v651 = vsel %vm650, %v136, %v647
    %vm652 = vcmp.eq.s32.totalorder %v643, 2
    %v653 = vsel %vm652, 1, 0
    %vm654 = vcmp.eq.s32.totalorder %v653, 1
    %v655 = vsel %vm654, %v144, %v651
    %vm656 = vcmp.eq.s32.totalorder %v643, 3
    %v657 = vsel %vm656, 1, 0
    %vm658 = vcmp.eq.s32.totalorder %v657, 1
    %v659 = vsel %vm658, %v152, %v655
    %vm660 = vcmp.eq.s32.totalorder %v643, 4
    %v661 = vsel %vm660, 1, 0
    %vm662 = vcmp.eq.s32.totalorder %v661, 1
    %v663 = vsel %vm662, %v160, %v659
    %vm664 = vcmp.eq.s32.totalorder %v643, 5
    %v665 = vsel %vm664, 1, 0
    %vm666 = vcmp.eq.s32.totalorder %v665, 1
    %v667 = vsel %vm666, %v168, %v663
    %vm668 = vcmp.eq.s32.totalorder %v643, 6
    %v669 = vsel %vm668, 1, 0
    %vm670 = vcmp.eq.s32.totalorder %v669, 1
    %v671 = vsel %vm670, %v176, %v667
    %vm672 = vcmp.eq.s32.totalorder %v643, 7
    %v673 = vsel %vm672, 1, 0
    %vm674 = vcmp.eq.s32.totalorder %v673, 1
    %v675 = vsel %vm674, %v184, %v671
    %vm676 = vcmp.eq.s32.totalorder %v643, 8
    %v677 = vsel %vm676, 1, 0
    %vm678 = vcmp.eq.s32.totalorder %v677, 1
    %v679 = vsel %vm678, %v192, %v675
    %vm680 = vcmp.eq.s32.totalorder %v643, 9
    %v681 = vsel %vm680, 1, 0
    %vm682 = vcmp.eq.s32.totalorder %v681, 1
    %v683 = vsel %vm682, %v200, %v679
    %vm684 = vcmp.eq.s32.totalorder %v643, 10
    %v685 = vsel %vm684, 1, 0
    %vm686 = vcmp.eq.s32.totalorder %v685, 1
    %v687 = vsel %vm686, %v208, %v683
    %vm688 = vcmp.eq.s32.totalorder %v643, 11
    %v689 = vsel %vm688, 1, 0
    %vm690 = vcmp.eq.s32.totalorder %v689, 1
    %v691 = vsel %vm690, %v216, %v687
    %s692 = scalar_lea.vmem [#allocation5], 56
    %v693 = vld [vmem:[%s692] sm:$0xff]
    %v694 = vadd.f32 %v691, %v693
    %v695 = vsel %vm98, %v694, -inf
    %696 = vmax.xlane.f32.xlu0 %v695
    %v697 = vpop.xlane.xlu0 %696
    %vm698 = vcmp.eq.f32.partialorder %v694, %v697
    %v699 = vsel %vm698, %v97, 12
    %v700 = vsel %vm98, %v699, 2147483647
    %v701 = vand.u32 %v700, 65535
    %v702 = vshra.s32 %v700, 16
    %v703 = vcvt.s32.f32 %v701
    %v704 = vcvt.s32.f32 %v702
    %705 = vmin.xlane.f32.xlu0 %v704
    %v706 = vpop.xlane.xlu0 %705
    %vm707 = vcmp.eq.f32.partialorder %v704, %v706
    %v708 = vsel %vm707, %v703, inf
    %709 = vmin.xlane.f32.xlu0 %v708
    %v710 = vpop.xlane.xlu0 %709
    %v711 = vcvt.f32.s32 %v710
    %v712 = vcvt.f32.s32 %v706
    %v713 = vshll.u32 %v712, 16
    %v714 = vadd.s32 %v713, %v711
    %vm715 = vcmp.eq.s32.totalorder %v97, %v714
    %v716 = vsel %vm715, 1, 0
    %v717 = vcvt.s32.f32 %v716
    %vm718 = vcmp.ne.s32.totalorder %v643, 11
    %v719 = vsel %vm718, 1, 0
    %vm720 = vcmp.eq.s32.totalorder %v719, 1
    %v721 = vsel %vm720, %v717, %v642
    %v722 = vsel %vm718, %v714, %v643
    %vm723 = vcmp.eq.s32.totalorder %v722, 0
    %v724 = vsel %vm723, 1, 0
    %vm725 = vcmp.eq.s32.totalorder %v724, 1
    %v726 = vsel %vm725, %v128, 0.0
    %vm727 = vcmp.eq.s32.totalorder %v722, 1
    %v728 = vsel %vm727, 1, 0
    %vm729 = vcmp.eq.s32.totalorder %v728, 1
    %v730 = vsel %vm729, %v136, %v726
    %vm731 = vcmp.eq.s32.totalorder %v722, 2
    %v732 = vsel %vm731, 1, 0
    %vm733 = vcmp.eq.s32.totalorder %v732, 1
    %v734 = vsel %vm733, %v144, %v730
    %vm735 = vcmp.eq.s32.totalorder %v722, 3
    %v736 = vsel %vm735, 1, 0
    %vm737 = vcmp.eq.s32.totalorder %v736, 1
    %v738 = vsel %vm737, %v152, %v734
    %vm739 = vcmp.eq.s32.totalorder %v722, 4
    %v740 = vsel %vm739, 1, 0
    %vm741 = vcmp.eq.s32.totalorder %v740, 1
    %v742 = vsel %vm741, %v160, %v738
    %vm743 = vcmp.eq.s32.totalorder %v722, 5
    %v744 = vsel %vm743, 1, 0
    %vm745 = vcmp.eq.s32.totalorder %v744, 1
    %v746 = vsel %vm745, %v168, %v742
    %vm747 = vcmp.eq.s32.totalorder %v722, 6
    %v748 = vsel %vm747, 1, 0
    %vm749 = vcmp.eq.s32.totalorder %v748, 1
    %v750 = vsel %vm749, %v176, %v746
    %vm751 = vcmp.eq.s32.totalorder %v722, 7
    %v752 = vsel %vm751, 1, 0
    %vm753 = vcmp.eq.s32.totalorder %v752, 1
    %v754 = vsel %vm753, %v184, %v750
    %vm755 = vcmp.eq.s32.totalorder %v722, 8
    %v756 = vsel %vm755, 1, 0
    %vm757 = vcmp.eq.s32.totalorder %v756, 1
    %v758 = vsel %vm757, %v192, %v754
    %vm759 = vcmp.eq.s32.totalorder %v722, 9
    %v760 = vsel %vm759, 1, 0
    %vm761 = vcmp.eq.s32.totalorder %v760, 1
    %v762 = vsel %vm761, %v200, %v758
    %vm763 = vcmp.eq.s32.totalorder %v722, 10
    %v764 = vsel %vm763, 1, 0
    %vm765 = vcmp.eq.s32.totalorder %v764, 1
    %v766 = vsel %vm765, %v208, %v762
    %vm767 = vcmp.eq.s32.totalorder %v722, 11
    %v768 = vsel %vm767, 1, 0
    %vm769 = vcmp.eq.s32.totalorder %v768, 1
    %v770 = vsel %vm769, %v216, %v766
    %s771 = scalar_lea.vmem [#allocation5], 64
    %v772 = vld [vmem:[%s771] sm:$0xff]
    %v773 = vadd.f32 %v770, %v772
    %v774 = vsel %vm98, %v773, -inf
    %775 = vmax.xlane.f32.xlu0 %v774
    %v776 = vpop.xlane.xlu0 %775
    %vm777 = vcmp.eq.f32.partialorder %v773, %v776
    %v778 = vsel %vm777, %v97, 12
    %v779 = vsel %vm98, %v778, 2147483647
    %v780 = vand.u32 %v779, 65535
    %v781 = vshra.s32 %v779, 16
    %v782 = vcvt.s32.f32 %v780
    %v783 = vcvt.s32.f32 %v781
    %784 = vmin.xlane.f32.xlu0 %v783
    %v785 = vpop.xlane.xlu0 %784
    %vm786 = vcmp.eq.f32.partialorder %v783, %v785
    %v787 = vsel %vm786, %v782, inf
    %788 = vmin.xlane.f32.xlu0 %v787
    %v789 = vpop.xlane.xlu0 %788
    %v790 = vcvt.f32.s32 %v789
    %v791 = vcvt.f32.s32 %v785
    %v792 = vshll.u32 %v791, 16
    %v793 = vadd.s32 %v792, %v790
    %vm794 = vcmp.eq.s32.totalorder %v97, %v793
    %v795 = vsel %vm794, 1, 0
    %v796 = vcvt.s32.f32 %v795
    %vm797 = vcmp.ne.s32.totalorder %v722, 11
    %v798 = vsel %vm797, 1, 0
    %vm799 = vcmp.eq.s32.totalorder %v798, 1
    %v800 = vsel %vm799, %v796, %v721
    %v801 = vsel %vm797, %v793, %v722
    %vm802 = vcmp.eq.s32.totalorder %v801, 0
    %v803 = vsel %vm802, 1, 0
    %vm804 = vcmp.eq.s32.totalorder %v803, 1
    %v805 = vsel %vm804, %v128, 0.0
    %vm806 = vcmp.eq.s32.totalorder %v801, 1
    %v807 = vsel %vm806, 1, 0
    %vm808 = vcmp.eq.s32.totalorder %v807, 1
    %v809 = vsel %vm808, %v136, %v805
    %vm810 = vcmp.eq.s32.totalorder %v801, 2
    %v811 = vsel %vm810, 1, 0
    %vm812 = vcmp.eq.s32.totalorder %v811, 1
    %v813 = vsel %vm812, %v144, %v809
    %vm814 = vcmp.eq.s32.totalorder %v801, 3
    %v815 = vsel %vm814, 1, 0
    %vm816 = vcmp.eq.s32.totalorder %v815, 1
    %v817 = vsel %vm816, %v152, %v813
    %vm818 = vcmp.eq.s32.totalorder %v801, 4
    %v819 = vsel %vm818, 1, 0
    %vm820 = vcmp.eq.s32.totalorder %v819, 1
    %v821 = vsel %vm820, %v160, %v817
    %vm822 = vcmp.eq.s32.totalorder %v801, 5
    %v823 = vsel %vm822, 1, 0
    %vm824 = vcmp.eq.s32.totalorder %v823, 1
    %v825 = vsel %vm824, %v168, %v821
    %vm826 = vcmp.eq.s32.totalorder %v801, 6
    %v827 = vsel %vm826, 1, 0
    %vm828 = vcmp.eq.s32.totalorder %v827, 1
    %v829 = vsel %vm828, %v176, %v825
    %vm830 = vcmp.eq.s32.totalorder %v801, 7
    %v831 = vsel %vm830, 1, 0
    %vm832 = vcmp.eq.s32.totalorder %v831, 1
    %v833 = vsel %vm832, %v184, %v829
    %vm834 = vcmp.eq.s32.totalorder %v801, 8
    %v835 = vsel %vm834, 1, 0
    %vm836 = vcmp.eq.s32.totalorder %v835, 1
    %v837 = vsel %vm836, %v192, %v833
    %vm838 = vcmp.eq.s32.totalorder %v801, 9
    %v839 = vsel %vm838, 1, 0
    %vm840 = vcmp.eq.s32.totalorder %v839, 1
    %v841 = vsel %vm840, %v200, %v837
    %vm842 = vcmp.eq.s32.totalorder %v801, 10
    %v843 = vsel %vm842, 1, 0
    %vm844 = vcmp.eq.s32.totalorder %v843, 1
    %v845 = vsel %vm844, %v208, %v841
    %vm846 = vcmp.eq.s32.totalorder %v801, 11
    %v847 = vsel %vm846, 1, 0
    %vm848 = vcmp.eq.s32.totalorder %v847, 1
    %v849 = vsel %vm848, %v216, %v845
    %s850 = scalar_lea.vmem [#allocation5], 72
    %v851 = vld [vmem:[%s850] sm:$0xff]
    %v852 = vadd.f32 %v849, %v851
    %v853 = vsel %vm98, %v852, -inf
    %854 = vmax.xlane.f32.xlu0 %v853
    %v855 = vpop.xlane.xlu0 %854
    %vm856 = vcmp.eq.f32.partialorder %v852, %v855
    %v857 = vsel %vm856, %v97, 12
    %v858 = vsel %vm98, %v857, 2147483647
    %v859 = vand.u32 %v858, 65535
    %v860 = vshra.s32 %v858, 16
    %v861 = vcvt.s32.f32 %v859
    %v862 = vcvt.s32.f32 %v860
    %863 = vmin.xlane.f32.xlu0 %v862
    %v864 = vpop.xlane.xlu0 %863
    %vm865 = vcmp.eq.f32.partialorder %v862, %v864
    %v866 = vsel %vm865, %v861, inf
    %867 = vmin.xlane.f32.xlu0 %v866
    %v868 = vpop.xlane.xlu0 %867
    %v869 = vcvt.f32.s32 %v868
    %v870 = vcvt.f32.s32 %v864
    %v871 = vshll.u32 %v870, 16
    %v872 = vadd.s32 %v871, %v869
    %vm873 = vcmp.eq.s32.totalorder %v97, %v872
    %v874 = vsel %vm873, 1, 0
    %v875 = vcvt.s32.f32 %v874
    %vm876 = vcmp.ne.s32.totalorder %v801, 11
    %v877 = vsel %vm876, 1, 0
    %vm878 = vcmp.eq.s32.totalorder %v877, 1
    %v879 = vsel %vm878, %v875, %v800
    %v880 = vsel %vm876, %v872, %v801
    %vm881 = vcmp.eq.s32.totalorder %v880, 0
    %v882 = vsel %vm881, 1, 0
    %vm883 = vcmp.eq.s32.totalorder %v882, 1
    %v884 = vsel %vm883, %v128, 0.0
    %vm885 = vcmp.eq.s32.totalorder %v880, 1
    %v886 = vsel %vm885, 1, 0
    %vm887 = vcmp.eq.s32.totalorder %v886, 1
    %v888 = vsel %vm887, %v136, %v884
    %vm889 = vcmp.eq.s32.totalorder %v880, 2
    %v890 = vsel %vm889, 1, 0
    %vm891 = vcmp.eq.s32.totalorder %v890, 1
    %v892 = vsel %vm891, %v144, %v888
    %vm893 = vcmp.eq.s32.totalorder %v880, 3
    %v894 = vsel %vm893, 1, 0
    %vm895 = vcmp.eq.s32.totalorder %v894, 1
    %v896 = vsel %vm895, %v152, %v892
    %vm897 = vcmp.eq.s32.totalorder %v880, 4
    %v898 = vsel %vm897, 1, 0
    %vm899 = vcmp.eq.s32.totalorder %v898, 1
    %v900 = vsel %vm899, %v160, %v896
    %vm901 = vcmp.eq.s32.totalorder %v880, 5
    %v902 = vsel %vm901, 1, 0
    %vm903 = vcmp.eq.s32.totalorder %v902, 1
    %v904 = vsel %vm903, %v168, %v900
    %vm905 = vcmp.eq.s32.totalorder %v880, 6
    %v906 = vsel %vm905, 1, 0
    %vm907 = vcmp.eq.s32.totalorder %v906, 1
    %v908 = vsel %vm907, %v176, %v904
    %vm909 = vcmp.eq.s32.totalorder %v880, 7
    %v910 = vsel %vm909, 1, 0
    %vm911 = vcmp.eq.s32.totalorder %v910, 1
    %v912 = vsel %vm911, %v184, %v908
    %vm913 = vcmp.eq.s32.totalorder %v880, 8
    %v914 = vsel %vm913, 1, 0
    %vm915 = vcmp.eq.s32.totalorder %v914, 1
    %v916 = vsel %vm915, %v192, %v912
    %vm917 = vcmp.eq.s32.totalorder %v880, 9
    %v918 = vsel %vm917, 1, 0
    %vm919 = vcmp.eq.s32.totalorder %v918, 1
    %v920 = vsel %vm919, %v200, %v916
    %vm921 = vcmp.eq.s32.totalorder %v880, 10
    %v922 = vsel %vm921, 1, 0
    %vm923 = vcmp.eq.s32.totalorder %v922, 1
    %v924 = vsel %vm923, %v208, %v920
    %vm925 = vcmp.eq.s32.totalorder %v880, 11
    %v926 = vsel %vm925, 1, 0
    %vm927 = vcmp.eq.s32.totalorder %v926, 1
    %v928 = vsel %vm927, %v216, %v924
    %s929 = scalar_lea.vmem [#allocation5], 80
    %v930 = vld [vmem:[%s929] sm:$0xff]
    %v931 = vadd.f32 %v928, %v930
    %v932 = vsel %vm98, %v931, -inf
    %933 = vmax.xlane.f32.xlu0 %v932
    %v934 = vpop.xlane.xlu0 %933
    %vm935 = vcmp.eq.f32.partialorder %v931, %v934
    %v936 = vsel %vm935, %v97, 12
    %v937 = vsel %vm98, %v936, 2147483647
    %v938 = vand.u32 %v937, 65535
    %v939 = vshra.s32 %v937, 16
    %v940 = vcvt.s32.f32 %v938
    %v941 = vcvt.s32.f32 %v939
    %942 = vmin.xlane.f32.xlu0 %v941
    %v943 = vpop.xlane.xlu0 %942
    %vm944 = vcmp.eq.f32.partialorder %v941, %v943
    %v945 = vsel %vm944, %v940, inf
    %946 = vmin.xlane.f32.xlu0 %v945
    %v947 = vpop.xlane.xlu0 %946
    %v948 = vcvt.f32.s32 %v947
    %v949 = vcvt.f32.s32 %v943
    %v950 = vshll.u32 %v949, 16
    %v951 = vadd.s32 %v950, %v948
    %vm952 = vcmp.eq.s32.totalorder %v97, %v951
    %v953 = vsel %vm952, 1, 0
    %v954 = vcvt.s32.f32 %v953
    %vm955 = vcmp.ne.s32.totalorder %v880, 11
    %v956 = vsel %vm955, 1, 0
    %vm957 = vcmp.eq.s32.totalorder %v956, 1
    %v958 = vsel %vm957, %v954, %v879
    %v959 = vsel %vm955, %v951, %v880
    %vm960 = vcmp.eq.s32.totalorder %v959, 0
    %v961 = vsel %vm960, 1, 0
    %vm962 = vcmp.eq.s32.totalorder %v961, 1
    %v963 = vsel %vm962, %v128, 0.0
    %vm964 = vcmp.eq.s32.totalorder %v959, 1
    %v965 = vsel %vm964, 1, 0
    %vm966 = vcmp.eq.s32.totalorder %v965, 1
    %v967 = vsel %vm966, %v136, %v963
    %vm968 = vcmp.eq.s32.totalorder %v959, 2
    %v969 = vsel %vm968, 1, 0
    %vm970 = vcmp.eq.s32.totalorder %v969, 1
    %v971 = vsel %vm970, %v144, %v967
    %vm972 = vcmp.eq.s32.totalorder %v959, 3
    %v973 = vsel %vm972, 1, 0
    %vm974 = vcmp.eq.s32.totalorder %v973, 1
    %v975 = vsel %vm974, %v152, %v971
    %vm976 = vcmp.eq.s32.totalorder %v959, 4
    %v977 = vsel %vm976, 1, 0
    %vm978 = vcmp.eq.s32.totalorder %v977, 1
    %v979 = vsel %vm978, %v160, %v975
    %vm980 = vcmp.eq.s32.totalorder %v959, 5
    %v981 = vsel %vm980, 1, 0
    %vm982 = vcmp.eq.s32.totalorder %v981, 1
    %v983 = vsel %vm982, %v168, %v979
    %vm984 = vcmp.eq.s32.totalorder %v959, 6
    %v985 = vsel %vm984, 1, 0
    %vm986 = vcmp.eq.s32.totalorder %v985, 1
    %v987 = vsel %vm986, %v176, %v983
    %vm988 = vcmp.eq.s32.totalorder %v959, 7
    %v989 = vsel %vm988, 1, 0
    %vm990 = vcmp.eq.s32.totalorder %v989, 1
    %v991 = vsel %vm990, %v184, %v987
    %vm992 = vcmp.eq.s32.totalorder %v959, 8
    %v993 = vsel %vm992, 1, 0
    %vm994 = vcmp.eq.s32.totalorder %v993, 1
    %v995 = vsel %vm994, %v192, %v991
    %vm996 = vcmp.eq.s32.totalorder %v959, 9
    %v997 = vsel %vm996, 1, 0
    %vm998 = vcmp.eq.s32.totalorder %v997, 1
    %v999 = vsel %vm998, %v200, %v995
    %vm1000 = vcmp.eq.s32.totalorder %v959, 10
    %v1001 = vsel %vm1000, 1, 0
    %vm1002 = vcmp.eq.s32.totalorder %v1001, 1
    %v1003 = vsel %vm1002, %v208, %v999
    %vm1004 = vcmp.eq.s32.totalorder %v959, 11
    %v1005 = vsel %vm1004, 1, 0
    %vm1006 = vcmp.eq.s32.totalorder %v1005, 1
    %v1007 = vsel %vm1006, %v216, %v1003
    %s1008 = scalar_lea.vmem [#allocation5], 88
    %v1009 = vld [vmem:[%s1008] sm:$0xff]
    %v1010 = vadd.f32 %v1007, %v1009
    %v1011 = vsel %vm98, %v1010, -inf
    %1012 = vmax.xlane.f32.xlu0 %v1011
    %v1013 = vpop.xlane.xlu0 %1012
    %vm1014 = vcmp.eq.f32.partialorder %v1010, %v1013
    %v1015 = vsel %vm1014, %v97, 12
    %v1016 = vsel %vm98, %v1015, 2147483647
    %v1017 = vand.u32 %v1016, 65535
    %v1018 = vshra.s32 %v1016, 16
    %v1019 = vcvt.s32.f32 %v1017
    %v1020 = vcvt.s32.f32 %v1018
    %1021 = vmin.xlane.f32.xlu0 %v1020
    %v1022 = vpop.xlane.xlu0 %1021
    %vm1023 = vcmp.eq.f32.partialorder %v1020, %v1022
    %v1024 = vsel %vm1023, %v1019, inf
    %1025 = vmin.xlane.f32.xlu0 %v1024
    %v1026 = vpop.xlane.xlu0 %1025
    %v1027 = vcvt.f32.s32 %v1026
    %v1028 = vcvt.f32.s32 %v1022
    %v1029 = vshll.u32 %v1028, 16
    %v1030 = vadd.s32 %v1029, %v1027
    %vm1031 = vcmp.eq.s32.totalorder %v97, %v1030
    %v1032 = vsel %vm1031, 1, 0
    %v1033 = vcvt.s32.f32 %v1032
    %vm1034 = vcmp.ne.s32.totalorder %v959, 11
    %v1035 = vsel %vm1034, 1, 0
    %vm1036 = vcmp.eq.s32.totalorder %v1035, 1
    %v1037 = vsel %vm1036, %v1033, %v958
    %v1038 = vld [vmem:[#allocation8] sm:$0xff]
    %v1039 = vld [vmem:[#allocation8 + $0x8] sm:$0xff]
    %v1040 = vld [vmem:[#allocation8 + $0x10] sm:$0x33]
    %v1041 = vld [vmem:[#allocation8 + $0x18] sm:$0x33]
    %v1042 = vld [vmem:[#allocation10] sm:$0xff]
    %v1043 = vld [vmem:[#allocation10 + $0x8] sm:$0xff]
    %v1044 = vld [vmem:[#allocation10 + $0x10] sm:$0xff]
    %v1045 = vld [vmem:[#allocation10 + $0x18] sm:$0xff]
    %v1046 = vld [vmem:[#allocation10 + $0x20] sm:$0xff]
    %v1047 = vld [vmem:[#allocation10 + $0x28] sm:$0xff]
    %v1048 = vld [vmem:[#allocation10 + $0x30] sm:$0xff]
    %v1049 = vld [vmem:[#allocation10 + $0x38] sm:$0xff]
    %v1050 = vld [vmem:[#allocation10 + $0x40] sm:$0xff]
    %v1051 = vld [vmem:[#allocation10 + $0x48] sm:$0xff]
    %v1052 = vld [vmem:[#allocation10 + $0x50] sm:$0xff]
    %v1053 = vld [vmem:[#allocation10 + $0x58] sm:$0xff]
    %v1054 = vld [vmem:[#allocation10 + $0x60] sm:$0xff]
    %v1055 = vld [vmem:[#allocation10 + $0x68] sm:$0xff]
    %v1056 = vld [vmem:[#allocation10 + $0x70] sm:$0xff]
    %v1057 = vld [vmem:[#allocation10 + $0x78] sm:$0xff]
    %v1058 = vld [vmem:[#allocation10 + $0x80] sm:$0xff]
    %v1059 = vld [vmem:[#allocation10 + $0x88] sm:$0xff]
    %v1060 = vld [vmem:[#allocation10 + $0x90] sm:$0xff]
    %v1061 = vld [vmem:[#allocation10 + $0x98] sm:$0xff]
    %v1062 = vld [vmem:[#allocation10 + $0xa0] sm:$0xff]
    %v1063 = vld [vmem:[#allocation10 + $0xa8] sm:$0xff]
    %v1064 = vld [vmem:[#allocation10 + $0xb0] sm:$0xff]
    %v1065 = vld [vmem:[#allocation10 + $0xb8] sm:$0xff]
    %v1066 = vld [vmem:[#allocation10 + $0xc0] sm:$0xff]
    %v1067 = vld [vmem:[#allocation10 + $0xc8] sm:$0xff]
    %v1068 = vld [vmem:[#allocation10 + $0xd0] sm:$0xff]
    %v1069 = vld [vmem:[#allocation10 + $0xd8] sm:$0xff]
    %v1070 = vld [vmem:[#allocation10 + $0xe0] sm:$0xff]
    %v1071 = vld [vmem:[#allocation10 + $0xe8] sm:$0xff]
    %v1072 = vld [vmem:[#allocation10 + $0xf0] sm:$0xff]
    %v1073 = vld [vmem:[#allocation10 + $0xf8] sm:$0xff]
    %v1074 = vpack.c.bf16 %v1037, %v1037
    %v1075 = vld [vmem:[%s5] sm:$0xf]
    %v1077 = vlaneseq
    %v1078 = vshrl.u32 %v1077, 7
    %v1079 = vsub.s32 0, %v1078
    %v1080 = vrot.slane %v1075, %v1079
    %v1081 = vlaneseq
    %v1082 = vshrl.u32 %v1081, 7
    %v1083 = vsub.s32 1, %v1082
    %v1084 = vrot.slane %v1075, %v1083
    %v1085 = vlaneseq
    %v1086 = vshrl.u32 %v1085, 7
    %v1087 = vsub.s32 2, %v1086
    %v1088 = vrot.slane %v1075, %v1087
    %v1089 = vlaneseq
    %v1090 = vshrl.u32 %v1089, 7
    %v1091 = vsub.s32 3, %v1090
    %v1092 = vrot.slane %v1075, %v1091
    %v1101 = vunpack.c.l.b16 %v1038
    %v1102 = vunpack.c.h.b16 %v1038
    %v1103 = vunpack.c.l.b16 %v1039
    %v1104 = vunpack.c.h.b16 %v1039
    %v1105 = vunpack.c.l.b16 %v1040
    %v1106 = vunpack.c.h.b16 %v1040
    %v1107 = vunpack.c.l.b16 %v1041
    %v1108 = vunpack.c.h.b16 %v1041
    %v1109 = vpack.c.b16 %v1105, %v1101
    %v1110 = vpack.c.b16 %v1106, %v1102
    %v1111 = vpack.c.b16 %v1107, %v1103
    %v1112 = vpack.c.b16 %v1108, %v1104
    %v1114 = vsel %vm98, %v1074, 0
    %vm1116 = vcmask 1045504
    %v1118 = vsel %vm1116, %v1109, 0
    %v1121 = vsel %vm1116, %v1110, 0
    %v1124 = vsel %vm1116, %v1111, 0
    %v1127 = vsel %vm1116, %v1112, 0
    %1129 = vmatprep.subr.bf16.mxu0 %v1121
    %1130 = vmatpush1.bf16.msra.mxu0 %v1118
    %1131 = vmatprep.subr.bf16.mxu0 0
    %1132 = vmatpush1.bf16.msra.mxu0 0
    %1133 = vmatprep.subr.bf16.mxu0 0
    %1134 = vmatpush1.bf16.msra.mxu0 0
    %1135 = vmatprep.subr.bf16.mxu0 0
    %1136 = vmatpush1.bf16.msra.mxu0 0
    %1137 = vmatprep.subr.bf16.mxu0 0
    %1138 = vmatpush1.bf16.msra.mxu0 0
    %1139 = vmatprep.subr.bf16.mxu0 0
    %1140 = vmatpush1.bf16.msra.mxu0 0
    %1141 = vmatprep.subr.bf16.mxu0 0
    %1142 = vmatpush1.bf16.msra.mxu0 0
    %1143 = vmatprep.subr.bf16.mxu0 0
    %1144 = vmatpush1.bf16.msra.mxu0 0
    %1145 = vmatprep.subr.bf16.mxu0 0
    %1146 = vmatpush1.bf16.msra.mxu0 0
    %1147 = vmatprep.subr.bf16.mxu0 0
    %1148 = vmatpush1.bf16.msra.mxu0 0
    %1149 = vmatprep.subr.bf16.mxu0 0
    %1150 = vmatpush1.bf16.msra.mxu0 0
    %1151 = vmatprep.subr.bf16.mxu0 0
    %1152 = vmatpush1.bf16.msra.mxu0 0
    %1153 = vmatprep.subr.bf16.mxu0 0
    %1154 = vmatpush1.bf16.msra.mxu0 0
    %1155 = vmatprep.subr.bf16.mxu0 0
    %1156 = vmatpush1.bf16.msra.mxu0 0
    %1157 = vmatprep.subr.bf16.mxu0 0
    %1158 = vmatpush1.bf16.msra.mxu0 0
    %1159 = vmatprep.subr.bf16.mxu0 0
    %1160 = vmatpush1.bf16.msra.mxu0 0
    %1161 = vmatprep.mubr.bf16.mxu0 0
    %1162 = vmatmul.mubr.bf16.gmra.mrb[0].mxu0 %v1114
    %v1163 = vpop.f32.mrb[0].mxu0
    %v1164 = vadd.f32 %v1080, %v1163
    %v1165 = vpop.f32.mrb[0].mxu0
    %v1166 = vadd.f32 %v1084, %v1165
    %v1167 = vpop.f32.mrb[0].mxu0
    %v1168 = vpop.f32.mrb[0].mxu0
    %1169 = vdwg.mxu0
    %1170 = vmatprep.subr.bf16.mxu0 %v1127
    %1171 = vmatpush1.bf16.msra.mxu0 %v1124
    %1172 = vmatprep.subr.bf16.mxu0 0
    %1173 = vmatpush1.bf16.msra.mxu0 0
    %1174 = vmatprep.subr.bf16.mxu0 0
    %1175 = vmatpush1.bf16.msra.mxu0 0
    %1176 = vmatprep.subr.bf16.mxu0 0
    %1177 = vmatpush1.bf16.msra.mxu0 0
    %1178 = vmatprep.subr.bf16.mxu0 0
    %1179 = vmatpush1.bf16.msra.mxu0 0
    %1180 = vmatprep.subr.bf16.mxu0 0
    %1181 = vmatpush1.bf16.msra.mxu0 0
    %1182 = vmatprep.subr.bf16.mxu0 0
    %1183 = vmatpush1.bf16.msra.mxu0 0
    %1184 = vmatprep.subr.bf16.mxu0 0
    %1185 = vmatpush1.bf16.msra.mxu0 0
    %1186 = vmatprep.subr.bf16.mxu0 0
    %1187 = vmatpush1.bf16.msra.mxu0 0
    %1188 = vmatprep.subr.bf16.mxu0 0
    %1189 = vmatpush1.bf16.msra.mxu0 0
    %1190 = vmatprep.subr.bf16.mxu0 0
    %1191 = vmatpush1.bf16.msra.mxu0 0
    %1192 = vmatprep.subr.bf16.mxu0 0
    %1193 = vmatpush1.bf16.msra.mxu0 0
    %1194 = vmatprep.subr.bf16.mxu0 0
    %1195 = vmatpush1.bf16.msra.mxu0 0
    %1196 = vmatprep.subr.bf16.mxu0 0
    %1197 = vmatpush1.bf16.msra.mxu0 0
    %1198 = vmatprep.subr.bf16.mxu0 0
    %1199 = vmatpush1.bf16.msra.mxu0 0
    %1200 = vmatprep.subr.bf16.mxu0 0
    %1201 = vmatpush1.bf16.msra.mxu0 0
    %1202 = vmatprep.mubr.bf16.mxu0 0
    %1203 = vmatmul.mubr.bf16.gmra.mrb[0].mxu0 %v1114
    %v1204 = vpop.f32.mrb[0].mxu0
    %v1205 = vadd.f32 %v1088, %v1204
    %v1206 = vpop.f32.mrb[0].mxu0
    %v1207 = vadd.f32 %v1092, %v1206
    %v1208 = vpop.f32.mrb[0].mxu0
    %v1209 = vpop.f32.mrb[0].mxu0
    %1210 = vdwg.mxu0
    %v1243 = vunpack.c.l.b16 %v1042
    %v1244 = vunpack.c.h.b16 %v1042
    %v1245 = vunpack.c.l.b16 %v1043
    %v1246 = vunpack.c.h.b16 %v1043
    %v1247 = vunpack.c.l.b16 %v1044
    %v1248 = vunpack.c.h.b16 %v1044
    %v1249 = vunpack.c.l.b16 %v1045
    %v1250 = vunpack.c.h.b16 %v1045
    %v1251 = vunpack.c.l.b16 %v1046
    %v1252 = vunpack.c.h.b16 %v1046
    %v1253 = vunpack.c.l.b16 %v1047
    %v1254 = vunpack.c.h.b16 %v1047
    %v1255 = vunpack.c.l.b16 %v1048
    %v1256 = vunpack.c.h.b16 %v1048
    %v1257 = vunpack.c.l.b16 %v1049
    %v1258 = vunpack.c.h.b16 %v1049
    %v1259 = vunpack.c.l.b16 %v1050
    %v1260 = vunpack.c.h.b16 %v1050
    %v1261 = vunpack.c.l.b16 %v1051
    %v1262 = vunpack.c.h.b16 %v1051
    %v1263 = vunpack.c.l.b16 %v1052
    %v1264 = vunpack.c.h.b16 %v1052
    %v1265 = vunpack.c.l.b16 %v1053
    %v1266 = vunpack.c.h.b16 %v1053
    %v1267 = vunpack.c.l.b16 %v1054
    %v1268 = vunpack.c.h.b16 %v1054
    %v1269 = vunpack.c.l.b16 %v1055
    %v1270 = vunpack.c.h.b16 %v1055
    %v1271 = vunpack.c.l.b16 %v1056
    %v1272 = vunpack.c.h.b16 %v1056
    %v1273 = vunpack.c.l.b16 %v1057
    %v1274 = vunpack.c.h.b16 %v1057
    %v1275 = vunpack.c.l.b16 %v1058
    %v1276 = vunpack.c.h.b16 %v1058
    %v1277 = vunpack.c.l.b16 %v1059
    %v1278 = vunpack.c.h.b16 %v1059
    %v1279 = vunpack.c.l.b16 %v1060
    %v1280 = vunpack.c.h.b16 %v1060
    %v1281 = vunpack.c.l.b16 %v1061
    %v1282 = vunpack.c.h.b16 %v1061
    %v1283 = vunpack.c.l.b16 %v1062
    %v1284 = vunpack.c.h.b16 %v1062
    %v1285 = vunpack.c.l.b16 %v1063
    %v1286 = vunpack.c.h.b16 %v1063
    %v1287 = vunpack.c.l.b16 %v1064
    %v1288 = vunpack.c.h.b16 %v1064
    %v1289 = vunpack.c.l.b16 %v1065
    %v1290 = vunpack.c.h.b16 %v1065
    %v1291 = vunpack.c.l.b16 %v1066
    %v1292 = vunpack.c.h.b16 %v1066
    %v1293 = vunpack.c.l.b16 %v1067
    %v1294 = vunpack.c.h.b16 %v1067
    %v1295 = vunpack.c.l.b16 %v1068
    %v1296 = vunpack.c.h.b16 %v1068
    %v1297 = vunpack.c.l.b16 %v1069
    %v1298 = vunpack.c.h.b16 %v1069
    %v1299 = vunpack.c.l.b16 %v1070
    %v1300 = vunpack.c.h.b16 %v1070
    %v1301 = vunpack.c.l.b16 %v1071
    %v1302 = vunpack.c.h.b16 %v1071
    %v1303 = vunpack.c.l.b16 %v1072
    %v1304 = vunpack.c.h.b16 %v1072
    %v1305 = vunpack.c.l.b16 %v1073
    %v1306 = vunpack.c.h.b16 %v1073
    %v1307 = vpack.c.b16 %v1247, %v1243
    %v1308 = vpack.c.b16 %v1248, %v1244
    %v1309 = vpack.c.b16 %v1249, %v1245
    %v1310 = vpack.c.b16 %v1250, %v1246
    %v1311 = vpack.c.b16 %v1255, %v1251
    %v1312 = vpack.c.b16 %v1256, %v1252
    %v1313 = vpack.c.b16 %v1257, %v1253
    %v1314 = vpack.c.b16 %v1258, %v1254
    %v1315 = vpack.c.b16 %v1263, %v1259
    %v1316 = vpack.c.b16 %v1264, %v1260
    %v1317 = vpack.c.b16 %v1265, %v1261
    %v1318 = vpack.c.b16 %v1266, %v1262
    %v1319 = vpack.c.b16 %v1271, %v1267
    %v1320 = vpack.c.b16 %v1272, %v1268
    %v1321 = vpack.c.b16 %v1273, %v1269
    %v1322 = vpack.c.b16 %v1274, %v1270
    %v1323 = vpack.c.b16 %v1279, %v1275
    %v1324 = vpack.c.b16 %v1280, %v1276
    %v1325 = vpack.c.b16 %v1281, %v1277
    %v1326 = vpack.c.b16 %v1282, %v1278
    %v1327 = vpack.c.b16 %v1287, %v1283
    %v1328 = vpack.c.b16 %v1288, %v1284
    %v1329 = vpack.c.b16 %v1289, %v1285
    %v1330 = vpack.c.b16 %v1290, %v1286
    %v1331 = vpack.c.b16 %v1295, %v1291
    %v1332 = vpack.c.b16 %v1296, %v1292
    %v1333 = vpack.c.b16 %v1297, %v1293
    %v1334 = vpack.c.b16 %v1298, %v1294
    %v1335 = vpack.c.b16 %v1303, %v1299
    %v1336 = vpack.c.b16 %v1304, %v1300
    %v1337 = vpack.c.b16 %v1305, %v1301
    %v1338 = vpack.c.b16 %v1306, %v1302
    %1371 = vmatprep.subr.bf16.mxu0 %v1308
    %1372 = vmatpush1.bf16.msra.mxu0 %v1307
    %1373 = vmatprep.subr.bf16.mxu0 %v1312
    %1374 = vmatpush1.bf16.msra.mxu0 %v1311
    %1375 = vmatprep.subr.bf16.mxu0 %v1316
    %1376 = vmatpush1.bf16.msra.mxu0 %v1315
    %1377 = vmatprep.subr.bf16.mxu0 %v1320
    %1378 = vmatpush1.bf16.msra.mxu0 %v1319
    %1379 = vmatprep.subr.bf16.mxu0 %v1324
    %1380 = vmatpush1.bf16.msra.mxu0 %v1323
    %1381 = vmatprep.subr.bf16.mxu0 %v1328
    %1382 = vmatpush1.bf16.msra.mxu0 %v1327
    %1383 = vmatprep.subr.bf16.mxu0 %v1332
    %1384 = vmatpush1.bf16.msra.mxu0 %v1331
    %1385 = vmatprep.subr.bf16.mxu0 %v1336
    %1386 = vmatpush1.bf16.msra.mxu0 %v1335
    %1387 = vmatprep.subr.bf16.mxu0 0
    %1388 = vmatpush1.bf16.msra.mxu0 0
    %1389 = vmatprep.subr.bf16.mxu0 0
    %1390 = vmatpush1.bf16.msra.mxu0 0
    %1391 = vmatprep.subr.bf16.mxu0 0
    %1392 = vmatpush1.bf16.msra.mxu0 0
    %1393 = vmatprep.subr.bf16.mxu0 0
    %1394 = vmatpush1.bf16.msra.mxu0 0
    %1395 = vmatprep.subr.bf16.mxu0 0
    %1396 = vmatpush1.bf16.msra.mxu0 0
    %1397 = vmatprep.subr.bf16.mxu0 0
    %1398 = vmatpush1.bf16.msra.mxu0 0
    %1399 = vmatprep.subr.bf16.mxu0 0
    %1400 = vmatpush1.bf16.msra.mxu0 0
    %1401 = vmatprep.subr.bf16.mxu0 0
    %1402 = vmatpush1.bf16.msra.mxu0 0
    %1403 = vmatprep.mubr.bf16.mxu0 0
    %1404 = vmatmul.mubr.bf16.gmra.mrb[0].mxu0 0
    %v1405 = vpop.f32.mrb[0].mxu0
    %v1406 = vadd.f32 0.0, %v1405
    %v1407 = vpop.f32.mrb[0].mxu0
    %v1408 = vadd.f32 0.0, %v1407
    %v1409 = vpop.f32.mrb[0].mxu0
    %v1410 = vpop.f32.mrb[0].mxu0
    %1411 = vdwg.mxu0
    %1412 = vmatprep.subr.bf16.mxu0 %v1310
    %1413 = vmatpush1.bf16.msra.mxu0 %v1309
    %1414 = vmatprep.subr.bf16.mxu0 %v1314
    %1415 = vmatpush1.bf16.msra.mxu0 %v1313
    %1416 = vmatprep.subr.bf16.mxu0 %v1318
    %1417 = vmatpush1.bf16.msra.mxu0 %v1317
    %1418 = vmatprep.subr.bf16.mxu0 %v1322
    %1419 = vmatpush1.bf16.msra.mxu0 %v1321
    %1420 = vmatprep.subr.bf16.mxu0 %v1326
    %1421 = vmatpush1.bf16.msra.mxu0 %v1325
    %1422 = vmatprep.subr.bf16.mxu0 %v1330
    %1423 = vmatpush1.bf16.msra.mxu0 %v1329
    %1424 = vmatprep.subr.bf16.mxu0 %v1334
    %1425 = vmatpush1.bf16.msra.mxu0 %v1333
    %1426 = vmatprep.subr.bf16.mxu0 %v1338
    %1427 = vmatpush1.bf16.msra.mxu0 %v1337
    %1428 = vmatprep.subr.bf16.mxu0 0
    %1429 = vmatpush1.bf16.msra.mxu0 0
    %1430 = vmatprep.subr.bf16.mxu0 0
    %1431 = vmatpush1.bf16.msra.mxu0 0
    %1432 = vmatprep.subr.bf16.mxu0 0
    %1433 = vmatpush1.bf16.msra.mxu0 0
    %1434 = vmatprep.subr.bf16.mxu0 0
    %1435 = vmatpush1.bf16.msra.mxu0 0
    %1436 = vmatprep.subr.bf16.mxu0 0
    %1437 = vmatpush1.bf16.msra.mxu0 0
    %1438 = vmatprep.subr.bf16.mxu0 0
    %1439 = vmatpush1.bf16.msra.mxu0 0
    %1440 = vmatprep.subr.bf16.mxu0 0
    %1441 = vmatpush1.bf16.msra.mxu0 0
    %1442 = vmatprep.subr.bf16.mxu0 0
    %1443 = vmatpush1.bf16.msra.mxu0 0
    %1444 = vmatprep.mubr.bf16.mxu0 0
    %1445 = vmatmul.mubr.bf16.gmra.mrb[0].mxu0 0
    %v1446 = vpop.f32.mrb[0].mxu0
    %v1447 = vadd.f32 0.0, %v1446
    %v1448 = vpop.f32.mrb[0].mxu0
    %v1449 = vadd.f32 0.0, %v1448
    %v1450 = vpop.f32.mrb[0].mxu0
    %v1451 = vpop.f32.mrb[0].mxu0
    %1452 = vdwg.mxu0
    %v1453 = vadd.f32 %v1164, %v1406
    %v1454 = vadd.f32 %v1166, %v1408
    %v1455 = vadd.f32 %v1205, %v1447
    %v1456 = vadd.f32 %v1207, %v1449
    %v1457 = vxor.u32 %v1453, 2147483648
    %v1458 = vmul.f32 %v1457, 1.442695
    %v1459 = vpow.pop %v1458
    %v1460 = vadd.f32 %v1459, 1.0
    %v1461 = vrcp.pop %v1460
    %v1462 = vmul.f32 1.0, %v1461
    %v1463 = vxor.u32 %v1454, 2147483648
    %v1464 = vmul.f32 %v1463, 1.442695
    %v1465 = vpow.pop %v1464
    %v1466 = vadd.f32 %v1465, 1.0
    %v1467 = vrcp.pop %v1466
    %v1468 = vmul.f32 1.0, %v1467
    %v1469 = vtanh.pop %v1455
    %v1470 = vxor.u32 %v1456, 2147483648
    %v1471 = vmul.f32 %v1470, 1.442695
    %v1472 = vpow.pop %v1471
    %v1473 = vadd.f32 %v1472, 1.0
    %v1474 = vrcp.pop %v1473
    %v1475 = vmul.f32 1.0, %v1474
    %v1476 = vmul.f32 %v1468, 0.0
    %v1477 = vmul.f32 %v1462, %v1469
    %v1478 = vadd.f32 %v1476, %v1477
    %v1479 = vtanh.pop %v1478
    %v1480 = vmul.f32 %v1475, %v1479
    %1481 = vst [vmem:[#allocation11] sm:$0x1] %v1480
    %v1482 = vpack.c.bf16 %v1480, %v1480
    %1483 = vmatprep.subr.bf16.mxu0 %v1308
    %1484 = vmatpush1.bf16.msra.mxu0 %v1307
    %1485 = vmatprep.subr.bf16.mxu0 %v1312
    %1486 = vmatpush1.bf16.msra.mxu0 %v1311
    %1487 = vmatprep.subr.bf16.mxu0 %v1316
    %1488 = vmatpush1.bf16.msra.mxu0 %v1315
    %1489 = vmatprep.subr.bf16.mxu0 %v1320
    %1490 = vmatpush1.bf16.msra.mxu0 %v1319
    %1491 = vmatprep.subr.bf16.mxu0 %v1324
    %1492 = vmatpush1.bf16.msra.mxu0 %v1323
    %1493 = vmatprep.subr.bf16.mxu0 %v1328
    %1494 = vmatpush1.bf16.msra.mxu0 %v1327
    %1495 = vmatprep.subr.bf16.mxu0 %v1332
    %1496 = vmatpush1.bf16.msra.mxu0 %v1331
    %1497 = vmatprep.subr.bf16.mxu0 %v1336
    %1498 = vmatpush1.bf16.msra.mxu0 %v1335
    %1499 = vmatprep.subr.bf16.mxu0 0
    %1500 = vmatpush1.bf16.msra.mxu0 0
    %1501 = vmatprep.subr.bf16.mxu0 0
    %1502 = vmatpush1.bf16.msra.mxu0 0
    %1503 = vmatprep.subr.bf16.mxu0 0
    %1504 = vmatpush1.bf16.msra.mxu0 0
    %1505 = vmatprep.subr.bf16.mxu0 0
    %1506 = vmatpush1.bf16.msra.mxu0 0
    %1507 = vmatprep.subr.bf16.mxu0 0
    %1508 = vmatpush1.bf16.msra.mxu0 0
    %1509 = vmatprep.subr.bf16.mxu0 0
    %1510 = vmatpush1.bf16.msra.mxu0 0
    %1511 = vmatprep.subr.bf16.mxu0 0
    %1512 = vmatpush1.bf16.msra.mxu0 0
    %1513 = vmatprep.subr.bf16.mxu0 0
    %1514 = vmatpush1.bf16.msra.mxu0 0
    %1515 = vmatprep.mubr.bf16.mxu0 0
    %1516 = vmatmul.mubr.bf16.gmra.mrb[0].mxu0 %v1482
    %v1517 = vpop.f32.mrb[0].mxu0
    %v1518 = vadd.f32 0.0, %v1517
    %v1519 = vpop.f32.mrb[0].mxu0
    %v1520 = vadd.f32 0.0, %v1519
    %v1521 = vpop.f32.mrb[0].mxu0
    %v1522 = vpop.f32.mrb[0].mxu0
    %1523 = vdwg.mxu0
    %1524 = vmatprep.subr.bf16.mxu0 %v1310
    %1525 = vmatpush1.bf16.msra.mxu0 %v1309
    %1526 = vmatprep.subr.bf16.mxu0 %v1314
    %1527 = vmatpush1.bf16.msra.mxu0 %v1313
    %1528 = vmatprep.subr.bf16.mxu0 %v1318
    %1529 = vmatpush1.bf16.msra.mxu0 %v1317
    %1530 = vmatprep.subr.bf16.mxu0 %v1322
    %1531 = vmatpush1.bf16.msra.mxu0 %v1321
    %1532 = vmatprep.subr.bf16.mxu0 %v1326
    %1533 = vmatpush1.bf16.msra.mxu0 %v1325
    %1534 = vmatprep.subr.bf16.mxu0 %v1330
    %1535 = vmatpush1.bf16.msra.mxu0 %v1329
    %1536 = vmatprep.subr.bf16.mxu0 %v1334
    %1537 = vmatpush1.bf16.msra.mxu0 %v1333
    %1538 = vmatprep.subr.bf16.mxu0 %v1338
    %1539 = vmatpush1.bf16.msra.mxu0 %v1337
    %1540 = vmatprep.subr.bf16.mxu0 0
    %1541 = vmatpush1.bf16.msra.mxu0 0
    %1542 = vmatprep.subr.bf16.mxu0 0
    %1543 = vmatpush1.bf16.msra.mxu0 0
    %1544 = vmatprep.subr.bf16.mxu0 0
    %1545 = vmatpush1.bf16.msra.mxu0 0
    %1546 = vmatprep.subr.bf16.mxu0 0
    %1547 = vmatpush1.bf16.msra.mxu0 0
    %1548 = vmatprep.subr.bf16.mxu0 0
    %1549 = vmatpush1.bf16.msra.mxu0 0
    %1550 = vmatprep.subr.bf16.mxu0 0
    %1551 = vmatpush1.bf16.msra.mxu0 0
    %1552 = vmatprep.subr.bf16.mxu0 0
    %1553 = vmatpush1.bf16.msra.mxu0 0
    %1554 = vmatprep.subr.bf16.mxu0 0
    %1555 = vmatpush1.bf16.msra.mxu0 0
    %1556 = vmatprep.mubr.bf16.mxu0 0
    %1557 = vmatmul.mubr.bf16.gmra.mrb[0].mxu0 %v1482
    %v1558 = vpop.f32.mrb[0].mxu0
    %v1559 = vadd.f32 0.0, %v1558
    %v1560 = vpop.f32.mrb[0].mxu0
    %v1561 = vadd.f32 0.0, %v1560
    %v1562 = vpop.f32.mrb[0].mxu0
    %v1563 = vpop.f32.mrb[0].mxu0
    %1564 = vdwg.mxu0
    %v1569 = vrot.slane %v1518, 7
    %v1570 = vrot.slane %v1520, 7
    %v1571 = vrot.slane %v1559, 7
    %v1572 = vrot.slane %v1561, 7
    %v1577 = vadd.f32 %v1164, %v1569
    %v1578 = vadd.f32 %v1166, %v1570
    %v1579 = vadd.f32 %v1205, %v1571
    %v1580 = vadd.f32 %v1207, %v1572
    %v1581 = vxor.u32 %v1577, 2147483648
    %v1582 = vmul.f32 %v1581, 1.442695
    %v1583 = vpow.pop %v1582
    %v1584 = vadd.f32 %v1583, 1.0
    %v1585 = vrcp.pop %v1584
    %v1586 = vmul.f32 1.0, %v1585
    %v1587 = vxor.u32 %v1578, 2147483648
    %v1588 = vmul.f32 %v1587, 1.442695
    %v1589 = vpow.pop %v1588
    %v1590 = vadd.f32 %v1589, 1.0
    %v1591 = vrcp.pop %v1590
    %v1592 = vmul.f32 1.0, %v1591
    %v1593 = vtanh.pop %v1579
    %v1594 = vxor.u32 %v1580, 2147483648
    %v1595 = vmul.f32 %v1594, 1.442695
    %v1596 = vpow.pop %v1595
    %v1597 = vadd.f32 %v1596, 1.0
    %v1598 = vrcp.pop %v1597
    %v1599 = vmul.f32 1.0, %v1598
    %v1601 = vrot.slane %v1478, 7
    %v1603 = vmul.f32 %v1592, %v1601
    %v1604 = vmul.f32 %v1586, %v1593
    %v1605 = vadd.f32 %v1603, %v1604
    %v1606 = vtanh.pop %v1605
    %v1607 = vmul.f32 %v1599, %v1606
    %1608 = vst [vmem:[#allocation11] sm:$0x2] %v1607
    %v1609 = vpack.c.bf16 %v1607, %v1607
    %v1611 = vshrl.u32 %v1609, 16
    %1614 = vmatprep.subr.bf16.mxu0 %v1308
    %1615 = vmatpush1.bf16.msra.mxu0 %v1307
    %1616 = vmatprep.subr.bf16.mxu0 %v1312
    %1617 = vmatpush1.bf16.msra.mxu0 %v1311
    %1618 = vmatprep.subr.bf16.mxu0 %v1316
    %1619 = vmatpush1.bf16.msra.mxu0 %v1315
    %1620 = vmatprep.subr.bf16.mxu0 %v1320
    %1621 = vmatpush1.bf16.msra.mxu0 %v1319
    %1622 = vmatprep.subr.bf16.mxu0 %v1324
    %1623 = vmatpush1.bf16.msra.mxu0 %v1323
    %1624 = vmatprep.subr.bf16.mxu0 %v1328
    %1625 = vmatpush1.bf16.msra.mxu0 %v1327
    %1626 = vmatprep.subr.bf16.mxu0 %v1332
    %1627 = vmatpush1.bf16.msra.mxu0 %v1331
    %1628 = vmatprep.subr.bf16.mxu0 %v1336
    %1629 = vmatpush1.bf16.msra.mxu0 %v1335
    %1630 = vmatprep.subr.bf16.mxu0 0
    %1631 = vmatpush1.bf16.msra.mxu0 0
    %1632 = vmatprep.subr.bf16.mxu0 0
    %1633 = vmatpush1.bf16.msra.mxu0 0
    %1634 = vmatprep.subr.bf16.mxu0 0
    %1635 = vmatpush1.bf16.msra.mxu0 0
    %1636 = vmatprep.subr.bf16.mxu0 0
    %1637 = vmatpush1.bf16.msra.mxu0 0
    %1638 = vmatprep.subr.bf16.mxu0 0
    %1639 = vmatpush1.bf16.msra.mxu0 0
    %1640 = vmatprep.subr.bf16.mxu0 0
    %1641 = vmatpush1.bf16.msra.mxu0 0
    %1642 = vmatprep.subr.bf16.mxu0 0
    %1643 = vmatpush1.bf16.msra.mxu0 0
    %1644 = vmatprep.subr.bf16.mxu0 0
    %1645 = vmatpush1.bf16.msra.mxu0 0
    %1646 = vmatprep.mubr.bf16.mxu0 0
    %1647 = vmatmul.mubr.bf16.gmra.mrb[0].mxu0 %v1611
    %v1648 = vpop.f32.mrb[0].mxu0
    %v1649 = vadd.f32 0.0, %v1648
    %v1650 = vpop.f32.mrb[0].mxu0
    %v1651 = vadd.f32 0.0, %v1650
    %v1652 = vpop.f32.mrb[0].mxu0
    %v1653 = vpop.f32.mrb[0].mxu0
    %1654 = vdwg.mxu0
    %1655 = vmatprep.subr.bf16.mxu0 %v1310
    %1656 = vmatpush1.bf16.msra.mxu0 %v1309
    %1657 = vmatprep.subr.bf16.mxu0 %v1314
    %1658 = vmatpush1.bf16.msra.mxu0 %v1313
    %1659 = vmatprep.subr.bf16.mxu0 %v1318
    %1660 = vmatpush1.bf16.msra.mxu0 %v1317
    %1661 = vmatprep.subr.bf16.mxu0 %v1322
    %1662 = vmatpush1.bf16.msra.mxu0 %v1321
    %1663 = vmatprep.subr.bf16.mxu0 %v1326
    %1664 = vmatpush1.bf16.msra.mxu0 %v1325
    %1665 = vmatprep.subr.bf16.mxu0 %v1330
    %1666 = vmatpush1.bf16.msra.mxu0 %v1329
    %1667 = vmatprep.subr.bf16.mxu0 %v1334
    %1668 = vmatpush1.bf16.msra.mxu0 %v1333
    %1669 = vmatprep.subr.bf16.mxu0 %v1338
    %1670 = vmatpush1.bf16.msra.mxu0 %v1337
    %1671 = vmatprep.subr.bf16.mxu0 0
    %1672 = vmatpush1.bf16.msra.mxu0 0
    %1673 = vmatprep.subr.bf16.mxu0 0
    %1674 = vmatpush1.bf16.msra.mxu0 0
    %1675 = vmatprep.subr.bf16.mxu0 0
    %1676 = vmatpush1.bf16.msra.mxu0 0
    %1677 = vmatprep.subr.bf16.mxu0 0
    %1678 = vmatpush1.bf16.msra.mxu0 0
    %1679 = vmatprep.subr.bf16.mxu0 0
    %1680 = vmatpush1.bf16.msra.mxu0 0
    %1681 = vmatprep.subr.bf16.mxu0 0
    %1682 = vmatpush1.bf16.msra.mxu0 0
    %1683 = vmatprep.subr.bf16.mxu0 0
    %1684 = vmatpush1.bf16.msra.mxu0 0
    %1685 = vmatprep.subr.bf16.mxu0 0
    %1686 = vmatpush1.bf16.msra.mxu0 0
    %1687 = vmatprep.mubr.bf16.mxu0 0
    %1688 = vmatmul.mubr.bf16.gmra.mrb[0].mxu0 %v1611
    %v1689 = vpop.f32.mrb[0].mxu0
    %v1690 = vadd.f32 0.0, %v1689
    %v1691 = vpop.f32.mrb[0].mxu0
    %v1692 = vadd.f32 0.0, %v1691
    %v1693 = vpop.f32.mrb[0].mxu0
    %v1694 = vpop.f32.mrb[0].mxu0
    %1695 = vdwg.mxu0
    %v1700 = vrot.slane %v1649, 6
    %v1701 = vrot.slane %v1651, 6
    %v1702 = vrot.slane %v1690, 6
    %v1703 = vrot.slane %v1692, 6
    %v1708 = vadd.f32 %v1164, %v1700
    %v1709 = vadd.f32 %v1166, %v1701
    %v1710 = vadd.f32 %v1205, %v1702
    %v1711 = vadd.f32 %v1207, %v1703
    %v1712 = vxor.u32 %v1708, 2147483648
    %v1713 = vmul.f32 %v1712, 1.442695
    %v1714 = vpow.pop %v1713
    %v1715 = vadd.f32 %v1714, 1.0
    %v1716 = vrcp.pop %v1715
    %v1717 = vmul.f32 1.0, %v1716
    %v1718 = vxor.u32 %v1709, 2147483648
    %v1719 = vmul.f32 %v1718, 1.442695
    %v1720 = vpow.pop %v1719
    %v1721 = vadd.f32 %v1720, 1.0
    %v1722 = vrcp.pop %v1721
    %v1723 = vmul.f32 1.0, %v1722
    %v1724 = vtanh.pop %v1710
    %v1725 = vxor.u32 %v1711, 2147483648
    %v1726 = vmul.f32 %v1725, 1.442695
    %v1727 = vpow.pop %v1726
    %v1728 = vadd.f32 %v1727, 1.0
    %v1729 = vrcp.pop %v1728
    %v1730 = vmul.f32 1.0, %v1729
    %v1732 = vrot.slane %v1605, 7
    %v1734 = vmul.f32 %v1723, %v1732
    %v1735 = vmul.f32 %v1717, %v1724
    %v1736 = vadd.f32 %v1734, %v1735
    %v1737 = vtanh.pop %v1736
    %v1738 = vmul.f32 %v1730, %v1737
    %1739 = vst [vmem:[#allocation11] sm:$0x4] %v1738
    %v1740 = vpack.c.bf16 %v1738, %v1738
    %v1742 = vrot.slane %v1740, 1
    %1744 = vmatprep.subr.bf16.mxu0 %v1308
    %1745 = vmatpush1.bf16.msra.mxu0 %v1307
    %1746 = vmatprep.subr.bf16.mxu0 %v1312
    %1747 = vmatpush1.bf16.msra.mxu0 %v1311
    %1748 = vmatprep.subr.bf16.mxu0 %v1316
    %1749 = vmatpush1.bf16.msra.mxu0 %v1315
    %1750 = vmatprep.subr.bf16.mxu0 %v1320
    %1751 = vmatpush1.bf16.msra.mxu0 %v1319
    %1752 = vmatprep.subr.bf16.mxu0 %v1324
    %1753 = vmatpush1.bf16.msra.mxu0 %v1323
    %1754 = vmatprep.subr.bf16.mxu0 %v1328
    %1755 = vmatpush1.bf16.msra.mxu0 %v1327
    %1756 = vmatprep.subr.bf16.mxu0 %v1332
    %1757 = vmatpush1.bf16.msra.mxu0 %v1331
    %1758 = vmatprep.subr.bf16.mxu0 %v1336
    %1759 = vmatpush1.bf16.msra.mxu0 %v1335
    %1760 = vmatprep.subr.bf16.mxu0 0
    %1761 = vmatpush1.bf16.msra.mxu0 0
    %1762 = vmatprep.subr.bf16.mxu0 0
    %1763 = vmatpush1.bf16.msra.mxu0 0
    %1764 = vmatprep.subr.bf16.mxu0 0
    %1765 = vmatpush1.bf16.msra.mxu0 0
    %1766 = vmatprep.subr.bf16.mxu0 0
    %1767 = vmatpush1.bf16.msra.mxu0 0
    %1768 = vmatprep.subr.bf16.mxu0 0
    %1769 = vmatpush1.bf16.msra.mxu0 0
    %1770 = vmatprep.subr.bf16.mxu0 0
    %1771 = vmatpush1.bf16.msra.mxu0 0
    %1772 = vmatprep.subr.bf16.mxu0 0
    %1773 = vmatpush1.bf16.msra.mxu0 0
    %1774 = vmatprep.subr.bf16.mxu0 0
    %1775 = vmatpush1.bf16.msra.mxu0 0
    %1776 = vmatprep.mubr.bf16.mxu0 0
    %1777 = vmatmul.mubr.bf16.gmra.mrb[0].mxu0 %v1742
    %v1778 = vpop.f32.mrb[0].mxu0
    %v1779 = vadd.f32 0.0, %v1778
    %v1780 = vpop.f32.mrb[0].mxu0
    %v1781 = vadd.f32 0.0, %v1780
    %v1782 = vpop.f32.mrb[0].mxu0
    %v1783 = vpop.f32.mrb[0].mxu0
    %1784 = vdwg.mxu0
    %1785 = vmatprep.subr.bf16.mxu0 %v1310
    %1786 = vmatpush1.bf16.msra.mxu0 %v1309
    %1787 = vmatprep.subr.bf16.mxu0 %v1314
    %1788 = vmatpush1.bf16.msra.mxu0 %v1313
    %1789 = vmatprep.subr.bf16.mxu0 %v1318
    %1790 = vmatpush1.bf16.msra.mxu0 %v1317
    %1791 = vmatprep.subr.bf16.mxu0 %v1322
    %1792 = vmatpush1.bf16.msra.mxu0 %v1321
    %1793 = vmatprep.subr.bf16.mxu0 %v1326
    %1794 = vmatpush1.bf16.msra.mxu0 %v1325
    %1795 = vmatprep.subr.bf16.mxu0 %v1330
    %1796 = vmatpush1.bf16.msra.mxu0 %v1329
    %1797 = vmatprep.subr.bf16.mxu0 %v1334
    %1798 = vmatpush1.bf16.msra.mxu0 %v1333
    %1799 = vmatprep.subr.bf16.mxu0 %v1338
    %1800 = vmatpush1.bf16.msra.mxu0 %v1337
    %1801 = vmatprep.subr.bf16.mxu0 0
    %1802 = vmatpush1.bf16.msra.mxu0 0
    %1803 = vmatprep.subr.bf16.mxu0 0
    %1804 = vmatpush1.bf16.msra.mxu0 0
    %1805 = vmatprep.subr.bf16.mxu0 0
    %1806 = vmatpush1.bf16.msra.mxu0 0
    %1807 = vmatprep.subr.bf16.mxu0 0
    %1808 = vmatpush1.bf16.msra.mxu0 0
    %1809 = vmatprep.subr.bf16.mxu0 0
    %1810 = vmatpush1.bf16.msra.mxu0 0
    %1811 = vmatprep.subr.bf16.mxu0 0
    %1812 = vmatpush1.bf16.msra.mxu0 0
    %1813 = vmatprep.subr.bf16.mxu0 0
    %1814 = vmatpush1.bf16.msra.mxu0 0
    %1815 = vmatprep.subr.bf16.mxu0 0
    %1816 = vmatpush1.bf16.msra.mxu0 0
    %1817 = vmatprep.mubr.bf16.mxu0 0
    %1818 = vmatmul.mubr.bf16.gmra.mrb[0].mxu0 %v1742
    %v1819 = vpop.f32.mrb[0].mxu0
    %v1820 = vadd.f32 0.0, %v1819
    %v1821 = vpop.f32.mrb[0].mxu0
    %v1822 = vadd.f32 0.0, %v1821
    %v1823 = vpop.f32.mrb[0].mxu0
    %v1824 = vpop.f32.mrb[0].mxu0
    %1825 = vdwg.mxu0
    %v1830 = vrot.slane %v1779, 5
    %v1831 = vrot.slane %v1781, 5
    %v1832 = vrot.slane %v1820, 5
    %v1833 = vrot.slane %v1822, 5
    %v1838 = vadd.f32 %v1164, %v1830
    %v1839 = vadd.f32 %v1166, %v1831
    %v1840 = vadd.f32 %v1205, %v1832
    %v1841 = vadd.f32 %v1207, %v1833
    %v1842 = vxor.u32 %v1838, 2147483648
    %v1843 = vmul.f32 %v1842, 1.442695
    %v1844 = vpow.pop %v1843
    %v1845 = vadd.f32 %v1844, 1.0
    %v1846 = vrcp.pop %v1845
    %v1847 = vmul.f32 1.0, %v1846
    %v1848 = vxor.u32 %v1839, 2147483648
    %v1849 = vmul.f32 %v1848, 1.442695
    %v1850 = vpow.pop %v1849
    %v1851 = vadd.f32 %v1850, 1.0
    %v1852 = vrcp.pop %v1851
    %v1853 = vmul.f32 1.0, %v1852
    %v1854 = vtanh.pop %v1840
    %v1855 = vxor.u32 %v1841, 2147483648
    %v1856 = vmul.f32 %v1855, 1.442695
    %v1857 = vpow.pop %v1856
    %v1858 = vadd.f32 %v1857, 1.0
    %v1859 = vrcp.pop %v1858
    %v1860 = vmul.f32 1.0, %v1859
    %v1862 = vrot.slane %v1736, 7
    %v1864 = vmul.f32 %v1853, %v1862
    %v1865 = vmul.f32 %v1847, %v1854
    %v1866 = vadd.f32 %v1864, %v1865
    %v1867 = vtanh.pop %v1866
    %v1868 = vmul.f32 %v1860, %v1867
    %1869 = vst [vmem:[#allocation11] sm:$0x8] %v1868
    %v1870 = vpack.c.bf16 %v1868, %v1868
    %v1872 = vshrl.u32 %v1870, 16
    %v1874 = vrot.slane %v1872, 1
    %1876 = vmatprep.subr.bf16.mxu0 %v1308
    %1877 = vmatpush1.bf16.msra.mxu0 %v1307
    %1878 = vmatprep.subr.bf16.mxu0 %v1312
    %1879 = vmatpush1.bf16.msra.mxu0 %v1311
    %1880 = vmatprep.subr.bf16.mxu0 %v1316
    %1881 = vmatpush1.bf16.msra.mxu0 %v1315
    %1882 = vmatprep.subr.bf16.mxu0 %v1320
    %1883 = vmatpush1.bf16.msra.mxu0 %v1319
    %1884 = vmatprep.subr.bf16.mxu0 %v1324
    %1885 = vmatpush1.bf16.msra.mxu0 %v1323
    %1886 = vmatprep.subr.bf16.mxu0 %v1328
    %1887 = vmatpush1.bf16.msra.mxu0 %v1327
    %1888 = vmatprep.subr.bf16.mxu0 %v1332
    %1889 = vmatpush1.bf16.msra.mxu0 %v1331
    %1890 = vmatprep.subr.bf16.mxu0 %v1336
    %1891 = vmatpush1.bf16.msra.mxu0 %v1335
    %1892 = vmatprep.subr.bf16.mxu0 0
    %1893 = vmatpush1.bf16.msra.mxu0 0
    %1894 = vmatprep.subr.bf16.mxu0 0
    %1895 = vmatpush1.bf16.msra.mxu0 0
    %1896 = vmatprep.subr.bf16.mxu0 0
    %1897 = vmatpush1.bf16.msra.mxu0 0
    %1898 = vmatprep.subr.bf16.mxu0 0
    %1899 = vmatpush1.bf16.msra.mxu0 0
    %1900 = vmatprep.subr.bf16.mxu0 0
    %1901 = vmatpush1.bf16.msra.mxu0 0
    %1902 = vmatprep.subr.bf16.mxu0 0
    %1903 = vmatpush1.bf16.msra.mxu0 0
    %1904 = vmatprep.subr.bf16.mxu0 0
    %1905 = vmatpush1.bf16.msra.mxu0 0
    %1906 = vmatprep.subr.bf16.mxu0 0
    %1907 = vmatpush1.bf16.msra.mxu0 0
    %1908 = vmatprep.mubr.bf16.mxu0 0
    %1909 = vmatmul.mubr.bf16.gmra.mrb[0].mxu0 %v1874
    %v1910 = vpop.f32.mrb[0].mxu0
    %v1911 = vadd.f32 0.0, %v1910
    %v1912 = vpop.f32.mrb[0].mxu0
    %v1913 = vadd.f32 0.0, %v1912
    %v1914 = vpop.f32.mrb[0].mxu0
    %v1915 = vpop.f32.mrb[0].mxu0
    %1916 = vdwg.mxu0
    %1917 = vmatprep.subr.bf16.mxu0 %v1310
    %1918 = vmatpush1.bf16.msra.mxu0 %v1309
    %1919 = vmatprep.subr.bf16.mxu0 %v1314
    %1920 = vmatpush1.bf16.msra.mxu0 %v1313
    %1921 = vmatprep.subr.bf16.mxu0 %v1318
    %1922 = vmatpush1.bf16.msra.mxu0 %v1317
    %1923 = vmatprep.subr.bf16.mxu0 %v1322
    %1924 = vmatpush1.bf16.msra.mxu0 %v1321
    %1925 = vmatprep.subr.bf16.mxu0 %v1326
    %1926 = vmatpush1.bf16.msra.mxu0 %v1325
    %1927 = vmatprep.subr.bf16.mxu0 %v1330
    %1928 = vmatpush1.bf16.msra.mxu0 %v1329
    %1929 = vmatprep.subr.bf16.mxu0 %v1334
    %1930 = vmatpush1.bf16.msra.mxu0 %v1333
    %1931 = vmatprep.subr.bf16.mxu0 %v1338
    %1932 = vmatpush1.bf16.msra.mxu0 %v1337
    %1933 = vmatprep.subr.bf16.mxu0 0
    %1934 = vmatpush1.bf16.msra.mxu0 0
    %1935 = vmatprep.subr.bf16.mxu0 0
    %1936 = vmatpush1.bf16.msra.mxu0 0
    %1937 = vmatprep.subr.bf16.mxu0 0
    %1938 = vmatpush1.bf16.msra.mxu0 0
    %1939 = vmatprep.subr.bf16.mxu0 0
    %1940 = vmatpush1.bf16.msra.mxu0 0
    %1941 = vmatprep.subr.bf16.mxu0 0
    %1942 = vmatpush1.bf16.msra.mxu0 0
    %1943 = vmatprep.subr.bf16.mxu0 0
    %1944 = vmatpush1.bf16.msra.mxu0 0
    %1945 = vmatprep.subr.bf16.mxu0 0
    %1946 = vmatpush1.bf16.msra.mxu0 0
    %1947 = vmatprep.subr.bf16.mxu0 0
    %1948 = vmatpush1.bf16.msra.mxu0 0
    %1949 = vmatprep.mubr.bf16.mxu0 0
    %1950 = vmatmul.mubr.bf16.gmra.mrb[0].mxu0 %v1874
    %v1951 = vpop.f32.mrb[0].mxu0
    %v1952 = vadd.f32 0.0, %v1951
    %v1953 = vpop.f32.mrb[0].mxu0
    %v1954 = vadd.f32 0.0, %v1953
    %v1955 = vpop.f32.mrb[0].mxu0
    %v1956 = vpop.f32.mrb[0].mxu0
    %1957 = vdwg.mxu0
    %v1962 = vrot.slane %v1911, 4
    %v1963 = vrot.slane %v1913, 4
    %v1964 = vrot.slane %v1952, 4
    %v1965 = vrot.slane %v1954, 4
    %v1970 = vadd.f32 %v1164, %v1962
    %v1971 = vadd.f32 %v1166, %v1963
    %v1972 = vadd.f32 %v1205, %v1964
    %v1973 = vadd.f32 %v1207, %v1965
    %v1974 = vxor.u32 %v1970, 2147483648
    %v1975 = vmul.f32 %v1974, 1.442695
    %v1976 = vpow.pop %v1975
    %v1977 = vadd.f32 %v1976, 1.0
    %v1978 = vrcp.pop %v1977
    %v1979 = vmul.f32 1.0, %v1978
    %v1980 = vxor.u32 %v1971, 2147483648
    %v1981 = vmul.f32 %v1980, 1.442695
    %v1982 = vpow.pop %v1981
    %v1983 = vadd.f32 %v1982, 1.0
    %v1984 = vrcp.pop %v1983
    %v1985 = vmul.f32 1.0, %v1984
    %v1986 = vtanh.pop %v1972
    %v1987 = vxor.u32 %v1973, 2147483648
    %v1988 = vmul.f32 %v1987, 1.442695
    %v1989 = vpow.pop %v1988
    %v1990 = vadd.f32 %v1989, 1.0
    %v1991 = vrcp.pop %v1990
    %v1992 = vmul.f32 1.0, %v1991
    %v1994 = vrot.slane %v1866, 7
    %v1996 = vmul.f32 %v1985, %v1994
    %v1997 = vmul.f32 %v1979, %v1986
    %v1998 = vadd.f32 %v1996, %v1997
    %v1999 = vtanh.pop %v1998
    %v2000 = vmul.f32 %v1992, %v1999
    %2001 = vst [vmem:[#allocation11] sm:$0x10] %v2000
    %v2002 = vpack.c.bf16 %v2000, %v2000
    %v2004 = vrot.slane %v2002, 2
    %2006 = vmatprep.subr.bf16.mxu0 %v1308
    %2007 = vmatpush1.bf16.msra.mxu0 %v1307
    %2008 = vmatprep.subr.bf16.mxu0 %v1312
    %2009 = vmatpush1.bf16.msra.mxu0 %v1311
    %2010 = vmatprep.subr.bf16.mxu0 %v1316
    %2011 = vmatpush1.bf16.msra.mxu0 %v1315
    %2012 = vmatprep.subr.bf16.mxu0 %v1320
    %2013 = vmatpush1.bf16.msra.mxu0 %v1319
    %2014 = vmatprep.subr.bf16.mxu0 %v1324
    %2015 = vmatpush1.bf16.msra.mxu0 %v1323
    %2016 = vmatprep.subr.bf16.mxu0 %v1328
    %2017 = vmatpush1.bf16.msra.mxu0 %v1327
    %2018 = vmatprep.subr.bf16.mxu0 %v1332
    %2019 = vmatpush1.bf16.msra.mxu0 %v1331
    %2020 = vmatprep.subr.bf16.mxu0 %v1336
    %2021 = vmatpush1.bf16.msra.mxu0 %v1335
    %2022 = vmatprep.subr.bf16.mxu0 0
    %2023 = vmatpush1.bf16.msra.mxu0 0
    %2024 = vmatprep.subr.bf16.mxu0 0
    %2025 = vmatpush1.bf16.msra.mxu0 0
    %2026 = vmatprep.subr.bf16.mxu0 0
    %2027 = vmatpush1.bf16.msra.mxu0 0
    %2028 = vmatprep.subr.bf16.mxu0 0
    %2029 = vmatpush1.bf16.msra.mxu0 0
    %2030 = vmatprep.subr.bf16.mxu0 0
    %2031 = vmatpush1.bf16.msra.mxu0 0
    %2032 = vmatprep.subr.bf16.mxu0 0
    %2033 = vmatpush1.bf16.msra.mxu0 0
    %2034 = vmatprep.subr.bf16.mxu0 0
    %2035 = vmatpush1.bf16.msra.mxu0 0
    %2036 = vmatprep.subr.bf16.mxu0 0
    %2037 = vmatpush1.bf16.msra.mxu0 0
    %2038 = vmatprep.mubr.bf16.mxu0 0
    %2039 = vmatmul.mubr.bf16.gmra.mrb[0].mxu0 %v2004
    %v2040 = vpop.f32.mrb[0].mxu0
    %v2041 = vadd.f32 0.0, %v2040
    %v2042 = vpop.f32.mrb[0].mxu0
    %v2043 = vadd.f32 0.0, %v2042
    %v2044 = vpop.f32.mrb[0].mxu0
    %v2045 = vpop.f32.mrb[0].mxu0
    %2046 = vdwg.mxu0
    %2047 = vmatprep.subr.bf16.mxu0 %v1310
    %2048 = vmatpush1.bf16.msra.mxu0 %v1309
    %2049 = vmatprep.subr.bf16.mxu0 %v1314
    %2050 = vmatpush1.bf16.msra.mxu0 %v1313
    %2051 = vmatprep.subr.bf16.mxu0 %v1318
    %2052 = vmatpush1.bf16.msra.mxu0 %v1317
    %2053 = vmatprep.subr.bf16.mxu0 %v1322
    %2054 = vmatpush1.bf16.msra.mxu0 %v1321
    %2055 = vmatprep.subr.bf16.mxu0 %v1326
    %2056 = vmatpush1.bf16.msra.mxu0 %v1325
    %2057 = vmatprep.subr.bf16.mxu0 %v1330
    %2058 = vmatpush1.bf16.msra.mxu0 %v1329
    %2059 = vmatprep.subr.bf16.mxu0 %v1334
    %2060 = vmatpush1.bf16.msra.mxu0 %v1333
    %2061 = vmatprep.subr.bf16.mxu0 %v1338
    %2062 = vmatpush1.bf16.msra.mxu0 %v1337
    %2063 = vmatprep.subr.bf16.mxu0 0
    %2064 = vmatpush1.bf16.msra.mxu0 0
    %2065 = vmatprep.subr.bf16.mxu0 0
    %2066 = vmatpush1.bf16.msra.mxu0 0
    %2067 = vmatprep.subr.bf16.mxu0 0
    %2068 = vmatpush1.bf16.msra.mxu0 0
    %2069 = vmatprep.subr.bf16.mxu0 0
    %2070 = vmatpush1.bf16.msra.mxu0 0
    %2071 = vmatprep.subr.bf16.mxu0 0
    %2072 = vmatpush1.bf16.msra.mxu0 0
    %2073 = vmatprep.subr.bf16.mxu0 0
    %2074 = vmatpush1.bf16.msra.mxu0 0
    %2075 = vmatprep.subr.bf16.mxu0 0
    %2076 = vmatpush1.bf16.msra.mxu0 0
    %2077 = vmatprep.subr.bf16.mxu0 0
    %2078 = vmatpush1.bf16.msra.mxu0 0
    %2079 = vmatprep.mubr.bf16.mxu0 0
    %2080 = vmatmul.mubr.bf16.gmra.mrb[0].mxu0 %v2004
    %v2081 = vpop.f32.mrb[0].mxu0
    %v2082 = vadd.f32 0.0, %v2081
    %v2083 = vpop.f32.mrb[0].mxu0
    %v2084 = vadd.f32 0.0, %v2083
    %v2085 = vpop.f32.mrb[0].mxu0
    %v2086 = vpop.f32.mrb[0].mxu0
    %2087 = vdwg.mxu0
    %v2092 = vrot.slane %v2041, 3
    %v2093 = vrot.slane %v2043, 3
    %v2094 = vrot.slane %v2082, 3
    %v2095 = vrot.slane %v2084, 3
    %v2100 = vadd.f32 %v1164, %v2092
    %v2101 = vadd.f32 %v1166, %v2093
    %v2102 = vadd.f32 %v1205, %v2094
    %v2103 = vadd.f32 %v1207, %v2095
    %v2104 = vxor.u32 %v2100, 2147483648
    %v2105 = vmul.f32 %v2104, 1.442695
    %v2106 = vpow.pop %v2105
    %v2107 = vadd.f32 %v2106, 1.0
    %v2108 = vrcp.pop %v2107
    %v2109 = vmul.f32 1.0, %v2108
    %v2110 = vxor.u32 %v2101, 2147483648
    %v2111 = vmul.f32 %v2110, 1.442695
    %v2112 = vpow.pop %v2111
    %v2113 = vadd.f32 %v2112, 1.0
    %v2114 = vrcp.pop %v2113
    %v2115 = vmul.f32 1.0, %v2114
    %v2116 = vtanh.pop %v2102
    %v2117 = vxor.u32 %v2103, 2147483648
    %v2118 = vmul.f32 %v2117, 1.442695
    %v2119 = vpow.pop %v2118
    %v2120 = vadd.f32 %v2119, 1.0
    %v2121 = vrcp.pop %v2120
    %v2122 = vmul.f32 1.0, %v2121
    %v2124 = vrot.slane %v1998, 7
    %v2126 = vmul.f32 %v2115, %v2124
    %v2127 = vmul.f32 %v2109, %v2116
    %v2128 = vadd.f32 %v2126, %v2127
    %v2129 = vtanh.pop %v2128
    %v2130 = vmul.f32 %v2122, %v2129
    %2131 = vst [vmem:[#allocation11] sm:$0x20] %v2130
    %v2132 = vpack.c.bf16 %v2130, %v2130
    %v2134 = vshrl.u32 %v2132, 16
    %v2136 = vrot.slane %v2134, 2
    %2138 = vmatprep.subr.bf16.mxu0 %v1308
    %2139 = vmatpush1.bf16.msra.mxu0 %v1307
    %2140 = vmatprep.subr.bf16.mxu0 %v1312
    %2141 = vmatpush1.bf16.msra.mxu0 %v1311
    %2142 = vmatprep.subr.bf16.mxu0 %v1316
    %2143 = vmatpush1.bf16.msra.mxu0 %v1315
    %2144 = vmatprep.subr.bf16.mxu0 %v1320
    %2145 = vmatpush1.bf16.msra.mxu0 %v1319
    %2146 = vmatprep.subr.bf16.mxu0 %v1324
    %2147 = vmatpush1.bf16.msra.mxu0 %v1323
    %2148 = vmatprep.subr.bf16.mxu0 %v1328
    %2149 = vmatpush1.bf16.msra.mxu0 %v1327
    %2150 = vmatprep.subr.bf16.mxu0 %v1332
    %2151 = vmatpush1.bf16.msra.mxu0 %v1331
    %2152 = vmatprep.subr.bf16.mxu0 %v1336
    %2153 = vmatpush1.bf16.msra.mxu0 %v1335
    %2154 = vmatprep.subr.bf16.mxu0 0
    %2155 = vmatpush1.bf16.msra.mxu0 0
    %2156 = vmatprep.subr.bf16.mxu0 0
    %2157 = vmatpush1.bf16.msra.mxu0 0
    %2158 = vmatprep.subr.bf16.mxu0 0
    %2159 = vmatpush1.bf16.msra.mxu0 0
    %2160 = vmatprep.subr.bf16.mxu0 0
    %2161 = vmatpush1.bf16.msra.mxu0 0
    %2162 = vmatprep.subr.bf16.mxu0 0
    %2163 = vmatpush1.bf16.msra.mxu0 0
    %2164 = vmatprep.subr.bf16.mxu0 0
    %2165 = vmatpush1.bf16.msra.mxu0 0
    %2166 = vmatprep.subr.bf16.mxu0 0
    %2167 = vmatpush1.bf16.msra.mxu0 0
    %2168 = vmatprep.subr.bf16.mxu0 0
    %2169 = vmatpush1.bf16.msra.mxu0 0
    %2170 = vmatprep.mubr.bf16.mxu0 0
    %2171 = vmatmul.mubr.bf16.gmra.mrb[0].mxu0 %v2136
    %v2172 = vpop.f32.mrb[0].mxu0
    %v2173 = vadd.f32 0.0, %v2172
    %v2174 = vpop.f32.mrb[0].mxu0
    %v2175 = vadd.f32 0.0, %v2174
    %v2176 = vpop.f32.mrb[0].mxu0
    %v2177 = vpop.f32.mrb[0].mxu0
    %2178 = vdwg.mxu0
    %2179 = vmatprep.subr.bf16.mxu0 %v1310
    %2180 = vmatpush1.bf16.msra.mxu0 %v1309
    %2181 = vmatprep.subr.bf16.mxu0 %v1314
    %2182 = vmatpush1.bf16.msra.mxu0 %v1313
    %2183 = vmatprep.subr.bf16.mxu0 %v1318
    %2184 = vmatpush1.bf16.msra.mxu0 %v1317
    %2185 = vmatprep.subr.bf16.mxu0 %v1322
    %2186 = vmatpush1.bf16.msra.mxu0 %v1321
    %2187 = vmatprep.subr.bf16.mxu0 %v1326
    %2188 = vmatpush1.bf16.msra.mxu0 %v1325
    %2189 = vmatprep.subr.bf16.mxu0 %v1330
    %2190 = vmatpush1.bf16.msra.mxu0 %v1329
    %2191 = vmatprep.subr.bf16.mxu0 %v1334
    %2192 = vmatpush1.bf16.msra.mxu0 %v1333
    %2193 = vmatprep.subr.bf16.mxu0 %v1338
    %2194 = vmatpush1.bf16.msra.mxu0 %v1337
    %2195 = vmatprep.subr.bf16.mxu0 0
    %2196 = vmatpush1.bf16.msra.mxu0 0
    %2197 = vmatprep.subr.bf16.mxu0 0
    %2198 = vmatpush1.bf16.msra.mxu0 0
    %2199 = vmatprep.subr.bf16.mxu0 0
    %2200 = vmatpush1.bf16.msra.mxu0 0
    %2201 = vmatprep.subr.bf16.mxu0 0
    %2202 = vmatpush1.bf16.msra.mxu0 0
    %2203 = vmatprep.subr.bf16.mxu0 0
    %2204 = vmatpush1.bf16.msra.mxu0 0
    %2205 = vmatprep.subr.bf16.mxu0 0
    %2206 = vmatpush1.bf16.msra.mxu0 0
    %2207 = vmatprep.subr.bf16.mxu0 0
    %2208 = vmatpush1.bf16.msra.mxu0 0
    %2209 = vmatprep.subr.bf16.mxu0 0
    %2210 = vmatpush1.bf16.msra.mxu0 0
    %2211 = vmatprep.mubr.bf16.mxu0 0
    %2212 = vmatmul.mubr.bf16.gmra.mrb[0].mxu0 %v2136
    %v2213 = vpop.f32.mrb[0].mxu0
    %v2214 = vadd.f32 0.0, %v2213
    %v2215 = vpop.f32.mrb[0].mxu0
    %v2216 = vadd.f32 0.0, %v2215
    %v2217 = vpop.f32.mrb[0].mxu0
    %v2218 = vpop.f32.mrb[0].mxu0
    %2219 = vdwg.mxu0
    %v2224 = vrot.slane %v2173, 2
    %v2225 = vrot.slane %v2175, 2
    %v2226 = vrot.slane %v2214, 2
    %v2227 = vrot.slane %v2216, 2
    %v2232 = vadd.f32 %v1164, %v2224
    %v2233 = vadd.f32 %v1166, %v2225
    %v2234 = vadd.f32 %v1205, %v2226
    %v2235 = vadd.f32 %v1207, %v2227
    %v2236 = vxor.u32 %v2232, 2147483648
    %v2237 = vmul.f32 %v2236, 1.442695
    %v2238 = vpow.pop %v2237
    %v2239 = vadd.f32 %v2238, 1.0
    %v2240 = vrcp.pop %v2239
    %v2241 = vmul.f32 1.0, %v2240
    %v2242 = vxor.u32 %v2233, 2147483648
    %v2243 = vmul.f32 %v2242, 1.442695
    %v2244 = vpow.pop %v2243
    %v2245 = vadd.f32 %v2244, 1.0
    %v2246 = vrcp.pop %v2245
    %v2247 = vmul.f32 1.0, %v2246
    %v2248 = vtanh.pop %v2234
    %v2249 = vxor.u32 %v2235, 2147483648
    %v2250 = vmul.f32 %v2249, 1.442695
    %v2251 = vpow.pop %v2250
    %v2252 = vadd.f32 %v2251, 1.0
    %v2253 = vrcp.pop %v2252
    %v2254 = vmul.f32 1.0, %v2253
    %v2256 = vrot.slane %v2128, 7
    %v2258 = vmul.f32 %v2247, %v2256
    %v2259 = vmul.f32 %v2241, %v2248
    %v2260 = vadd.f32 %v2258, %v2259
    %v2261 = vtanh.pop %v2260
    %v2262 = vmul.f32 %v2254, %v2261
    %2263 = vst [vmem:[#allocation11] sm:$0x40] %v2262
    %v2264 = vpack.c.bf16 %v2262, %v2262
    %v2266 = vrot.slane %v2264, 3
    %2268 = vmatprep.subr.bf16.mxu0 %v1308
    %2269 = vmatpush1.bf16.msra.mxu0 %v1307
    %2270 = vmatprep.subr.bf16.mxu0 %v1312
    %2271 = vmatpush1.bf16.msra.mxu0 %v1311
    %2272 = vmatprep.subr.bf16.mxu0 %v1316
    %2273 = vmatpush1.bf16.msra.mxu0 %v1315
    %2274 = vmatprep.subr.bf16.mxu0 %v1320
    %2275 = vmatpush1.bf16.msra.mxu0 %v1319
    %2276 = vmatprep.subr.bf16.mxu0 %v1324
    %2277 = vmatpush1.bf16.msra.mxu0 %v1323
    %2278 = vmatprep.subr.bf16.mxu0 %v1328
    %2279 = vmatpush1.bf16.msra.mxu0 %v1327
    %2280 = vmatprep.subr.bf16.mxu0 %v1332
    %2281 = vmatpush1.bf16.msra.mxu0 %v1331
    %2282 = vmatprep.subr.bf16.mxu0 %v1336
    %2283 = vmatpush1.bf16.msra.mxu0 %v1335
    %2284 = vmatprep.subr.bf16.mxu0 0
    %2285 = vmatpush1.bf16.msra.mxu0 0
    %2286 = vmatprep.subr.bf16.mxu0 0
    %2287 = vmatpush1.bf16.msra.mxu0 0
    %2288 = vmatprep.subr.bf16.mxu0 0
    %2289 = vmatpush1.bf16.msra.mxu0 0
    %2290 = vmatprep.subr.bf16.mxu0 0
    %2291 = vmatpush1.bf16.msra.mxu0 0
    %2292 = vmatprep.subr.bf16.mxu0 0
    %2293 = vmatpush1.bf16.msra.mxu0 0
    %2294 = vmatprep.subr.bf16.mxu0 0
    %2295 = vmatpush1.bf16.msra.mxu0 0
    %2296 = vmatprep.subr.bf16.mxu0 0
    %2297 = vmatpush1.bf16.msra.mxu0 0
    %2298 = vmatprep.subr.bf16.mxu0 0
    %2299 = vmatpush1.bf16.msra.mxu0 0
    %2300 = vmatprep.mubr.bf16.mxu0 0
    %2301 = vmatmul.mubr.bf16.gmra.mrb[0].mxu0 %v2266
    %v2302 = vpop.f32.mrb[0].mxu0
    %v2303 = vadd.f32 0.0, %v2302
    %v2304 = vpop.f32.mrb[0].mxu0
    %v2305 = vadd.f32 0.0, %v2304
    %v2306 = vpop.f32.mrb[0].mxu0
    %v2307 = vpop.f32.mrb[0].mxu0
    %2308 = vdwg.mxu0
    %2309 = vmatprep.subr.bf16.mxu0 %v1310
    %2310 = vmatpush1.bf16.msra.mxu0 %v1309
    %2311 = vmatprep.subr.bf16.mxu0 %v1314
    %2312 = vmatpush1.bf16.msra.mxu0 %v1313
    %2313 = vmatprep.subr.bf16.mxu0 %v1318
    %2314 = vmatpush1.bf16.msra.mxu0 %v1317
    %2315 = vmatprep.subr.bf16.mxu0 %v1322
    %2316 = vmatpush1.bf16.msra.mxu0 %v1321
    %2317 = vmatprep.subr.bf16.mxu0 %v1326
    %2318 = vmatpush1.bf16.msra.mxu0 %v1325
    %2319 = vmatprep.subr.bf16.mxu0 %v1330
    %2320 = vmatpush1.bf16.msra.mxu0 %v1329
    %2321 = vmatprep.subr.bf16.mxu0 %v1334
    %2322 = vmatpush1.bf16.msra.mxu0 %v1333
    %2323 = vmatprep.subr.bf16.mxu0 %v1338
    %2324 = vmatpush1.bf16.msra.mxu0 %v1337
    %2325 = vmatprep.subr.bf16.mxu0 0
    %2326 = vmatpush1.bf16.msra.mxu0 0
    %2327 = vmatprep.subr.bf16.mxu0 0
    %2328 = vmatpush1.bf16.msra.mxu0 0
    %2329 = vmatprep.subr.bf16.mxu0 0
    %2330 = vmatpush1.bf16.msra.mxu0 0
    %2331 = vmatprep.subr.bf16.mxu0 0
    %2332 = vmatpush1.bf16.msra.mxu0 0
    %2333 = vmatprep.subr.bf16.mxu0 0
    %2334 = vmatpush1.bf16.msra.mxu0 0
    %2335 = vmatprep.subr.bf16.mxu0 0
    %2336 = vmatpush1.bf16.msra.mxu0 0
    %2337 = vmatprep.subr.bf16.mxu0 0
    %2338 = vmatpush1.bf16.msra.mxu0 0
    %2339 = vmatprep.subr.bf16.mxu0 0
    %2340 = vmatpush1.bf16.msra.mxu0 0
    %2341 = vmatprep.mubr.bf16.mxu0 0
    %2342 = vmatmul.mubr.bf16.gmra.mrb[0].mxu0 %v2266
    %v2343 = vpop.f32.mrb[0].mxu0
    %v2344 = vadd.f32 0.0, %v2343
    %v2345 = vpop.f32.mrb[0].mxu0
    %v2346 = vadd.f32 0.0, %v2345
    %v2347 = vpop.f32.mrb[0].mxu0
    %v2348 = vpop.f32.mrb[0].mxu0
    %2349 = vdwg.mxu0
    %v2354 = vrot.slane %v2303, 1
    %v2355 = vrot.slane %v2305, 1
    %v2356 = vrot.slane %v2344, 1
    %v2357 = vrot.slane %v2346, 1
    %v2362 = vadd.f32 %v1164, %v2354
    %v2363 = vadd.f32 %v1166, %v2355
    %v2364 = vadd.f32 %v1205, %v2356
    %v2365 = vadd.f32 %v1207, %v2357
    %v2366 = vxor.u32 %v2362, 2147483648
    %v2367 = vmul.f32 %v2366, 1.442695
    %v2368 = vpow.pop %v2367
    %v2369 = vadd.f32 %v2368, 1.0
    %v2370 = vrcp.pop %v2369
    %v2371 = vmul.f32 1.0, %v2370
    %v2372 = vxor.u32 %v2363, 2147483648
    %v2373 = vmul.f32 %v2372, 1.442695
    %v2374 = vpow.pop %v2373
    %v2375 = vadd.f32 %v2374, 1.0
    %v2376 = vrcp.pop %v2375
    %v2377 = vmul.f32 1.0, %v2376
    %v2378 = vtanh.pop %v2364
    %v2379 = vxor.u32 %v2365, 2147483648
    %v2380 = vmul.f32 %v2379, 1.442695
    %v2381 = vpow.pop %v2380
    %v2382 = vadd.f32 %v2381, 1.0
    %v2383 = vrcp.pop %v2382
    %v2384 = vmul.f32 1.0, %v2383
    %v2386 = vrot.slane %v2260, 7
    %v2388 = vmul.f32 %v2377, %v2386
    %v2389 = vmul.f32 %v2371, %v2378
    %v2390 = vadd.f32 %v2388, %v2389
    %v2391 = vtanh.pop %v2390
    %v2392 = vmul.f32 %v2384, %v2391
    %2393 = vst [vmem:[#allocation11] sm:$0x80] %v2392
    // Predicated region
    $region46: #{differentiable_grammar_forward.1} parent=1 // pred_check
      _
    $region47: #{differentiable_grammar_forward.1} parent=1 // pred_check_branch
      %2395 = sbr.rel (0) target = $region49
    $region48: #{differentiable_grammar_forward.1} parent=1 // pred_region
      %s2397 = ssub.s32 128, 128
      %2398 = vsyncadd [#allocation4], %s2397
      %s2400 = sshll.u32 [#allocation11], 4
      %s2401 = int_to_ptr.vmem [resolvable:$true] %s2400
      %2403 = dma.vmem_to_hbm [thread:$0]  %s2401, 128, %s6, [#allocation4]
    $region49: #{differentiable_grammar_forward.1} parent=1 // pred_fallthru
      _
    // Predicated region
    $region50: #{differentiable_grammar_forward.1} parent=1 // pred_check
      _
    $region51: #{differentiable_grammar_forward.1} parent=1 // pred_check_branch
      %2405 = sbr.rel (0) target = $region53
    $region52: #{differentiable_grammar_forward.1} parent=1 // pred_region
      %2406 = dma.done [#allocation4], 128
    $region53: #{differentiable_grammar_forward.1} parent=1 // pred_fallthru
      _
    %2407 = vsyncpa [#allocation3], 1
    %2408 = vsyncpa [#allocation6], 1
    %2409 = vsyncpa [#allocation9], 1
    %2410 = vsyncpa [#allocation4], 1

</llo_original>
